<compile_context>
chip_gen: v6e
topology: v6e:2x2x1
jax: 0.10.0
libtpu: 0.0.40
codegen_flags: <defaults>
</compile_context>

<pallas_src>
import functools
import math

import jax
import jax.numpy as jnp
from jax import lax
from jax.experimental import pallas as pl
from jax.experimental.pallas import tpu as pltpu


def _elementwise_dtype():
    """bf16 elementwise on chips with a bf16 VPU/EUP (v6e/v7x); f32 otherwise."""
    try:
        kind = jax.devices()[0].device_kind.lower()
    except Exception:
        return jnp.float32
    if any(tag in kind for tag in ("v6", "v7", "tpu7")):
        return jnp.bfloat16
    return jnp.float32


def _sparse_attn_kernel(q_ref, k_ref, v_ref, r_ref, m_ref, o_ref, *,
                        n_heads, head_dim, n_experts, gate_dtype):
    N = q_ref.shape[1]
    D = head_dim
    E = n_experts

    r = r_ref[0]                                   # (N, E) f32 routing weights
    m = m_ref[0]                                   # (1, N) f32 key-padding mask

    # Key-padding bias, once per batch: 0 where keep, -1e6 where pad.
    bias = (m - 1.0) * 1000000.0                   # (1, N), broadcasts over rows

    inv_scale = 1.0 / math.sqrt(D)

    # Once-per-batch lane-replicated routing slabs (N, E*D):
    #   r_rep32[:, e*D:(e+1)*D] = route[:, e]
    # rq_rep additionally folds the 1/sqrt(D) logits scale (applied once, Q side).
    cols = [jnp.broadcast_to(r[:, e:e + 1], (N, D)) for e in range(E)]
    r_rep32 = jnp.concatenate(cols, axis=-1)                 # f32, output combine
    r_rep = r_rep32.astype(gate_dtype)                       # K/V gating
    rq_rep = (r_rep32 * inv_scale).astype(gate_dtype)        # Q gating

    # Heads unrolled with static lane windows; each head stores its (N, D) result
    # straight into the output tile, so nothing outlives its own iteration.
    for h in range(n_heads):
        lo = h * D
        qh = q_ref[0, :, lo:lo + D].astype(gate_dtype)       # (N, D)
        kh = k_ref[0, :, lo:lo + D].astype(gate_dtype)
        vh = v_ref[0, :, lo:lo + D].astype(gate_dtype)

        # Lane-tile each head to (N, E*D) and gate with ONE lane-dense VMUL each.
        qg = (jnp.concatenate([qh] * E, axis=-1) * rq_rep).astype(jnp.bfloat16)
        kg = (jnp.concatenate([kh] * E, axis=-1) * r_rep).astype(jnp.bfloat16)
        vg = (jnp.concatenate([vh] * E, axis=-1) * r_rep).astype(jnp.bfloat16)

        # Gated, scaled logits from one E*D(=128)-deep MXU pass (A @ B^T via
        # contracting dims; no explicit transpose copy).
        logits = lax.dot_general(qg, kg, (((1,), (1,)), ((), ())),
                                 preferred_element_type=jnp.float32)   # (N, N)
        logits = logits + bias

        # Softmax over keys with f32 stats; normalization deferred to the output.
        row_max = jnp.max(logits, axis=-1, keepdims=True)
        p = jnp.exp(logits - row_max)
        denom = jnp.sum(p, axis=-1, keepdims=True)
        inv_denom = pl.reciprocal(denom, approx=True)                  # EUP

        # TODO(synk): training-mode attention dropout (pltpu.prng_*) — the
        # benchmarked eval forward is the identity.

        # Gated P @ V in one MXU pass, then combine experts back to (N, D).
        y = jnp.dot(p.astype(jnp.bfloat16), vg,
                    preferred_element_type=jnp.float32)                # (N, E*D)
        yg = y * r_rep32
        x = yg[:, 0:D]
        for e in range(1, E):
            x = x + yg[:, e * D:(e + 1) * D]

        # Per-head store into the lane window of the lane-dense output tile.
        o_ref[0, :, lo:lo + D] = (x * inv_denom).astype(o_ref.dtype)


def sparse_attention(Q, K, V, route_mat, mask, *, n_experts):
    B, H, N, D = Q.shape
    E = route_mat.shape[-1]
    assert E == n_experts

    # Lane-dense [B, N, H*D] slabs (last dim = 128 here).  In a full model the
    # QKV projections already produce this layout, so these transposes are
    # harness-only plumbing.
    q2 = Q.transpose(0, 2, 1, 3).reshape(B, N, H * D)
    k2 = K.transpose(0, 2, 1, 3).reshape(B, N, H * D)
    v2 = V.transpose(0, 2, 1, 3).reshape(B, N, H * D)

    gate_dtype = _elementwise_dtype()
    kernel = functools.partial(_sparse_attn_kernel, n_heads=H, head_dim=D,
                               n_experts=E, gate_dtype=gate_dtype)

    out = pl.pallas_call(
        kernel,
        out_shape=jax.ShapeDtypeStruct((B, N, H * D), Q.dtype),
        grid_spec=pltpu.PrefetchScalarGridSpec(
            num_scalar_prefetch=0,
            grid=(B,),  # NOTE: for B == 1 on v7x, split heads onto a second
                        # "parallel" axis so both TensorCores stay busy.
            in_specs=[
                pl.BlockSpec((1, N, H * D), lambda b: (b, 0, 0)),  # Q slab
                pl.BlockSpec((1, N, H * D), lambda b: (b, 0, 0)),  # K slab
                pl.BlockSpec((1, N, H * D), lambda b: (b, 0, 0)),  # V slab
                pl.BlockSpec((1, N, E), lambda b: (b, 0, 0)),      # route_mat
                pl.BlockSpec((1, 1, N), lambda b: (b, 0, 0)),      # mask
            ],
            out_specs=pl.BlockSpec((1, N, H * D), lambda b: (b, 0, 0)),
        ),
        compiler_params=pltpu.CompilerParams(
            dimension_semantics=("parallel",)),    # batch axis shards across TCs
    )(q2, k2, v2, route_mat, mask)

    # Module layout [B, H, N, D] (combine_head=False).  Downstream code that can
    # consume the lane-dense [B, N, H*D] slab should use `out` directly and skip
    # this extra HBM round trip.
    return out.reshape(B, N, H, D).transpose(0, 2, 1, 3)


def _reference(Q, K, V, route_mat, mask, head_dim):
    gate = jnp.einsum("bie,bje->bij", route_mat, route_mat)
    scores = gate[:, None] * jnp.einsum("bhid,bhjd->bhij", Q, K)
    dot = scores / math.sqrt(head_dim)
    dot = dot - 1000000.0 * (1.0 - mask[:, :, None, :])
    dot = jax.nn.softmax(dot, axis=-1)
    return jnp.einsum("bhij,bhjd->bhid", gate[:, None] * dot, V)


if __name__ == "__main__":
    # config: transformer_dim=128, num_heads=4 -> head_dim=32, attn_n_experts=4
    B, H, N, D, E = 2, 4, 128, 32, 4

    key = jax.random.PRNGKey(0)
    kq, kk, kv, kr = jax.random.split(key, 4)
    Q = jax.random.normal(kq, (B, H, N, D), dtype=jnp.float32)
    K = jax.random.normal(kk, (B, H, N, D), dtype=jnp.float32)
    V = jax.random.normal(kv, (B, H, N, D), dtype=jnp.float32)
    route_mat = jax.nn.softmax(
        jax.random.normal(kr, (B, N, E), dtype=jnp.float32), axis=-1)

    # key-padding mask: batch 1 has its last 16 positions masked out
    mask = jnp.ones((B, 1, N), dtype=jnp.float32)
    mask = mask.at[1, :, N - 16:].set(0.0)

    out = sparse_attention(Q, K, V, route_mat, mask, n_experts=E)
    out = jax.block_until_ready(out)

    ref = _reference(Q, K, V, route_mat, mask, D)
    assert out.shape == (B, H, N, D)
    # bf16 gating (v6e/v7x) keeps ~8 mantissa bits in the r*q / r*k products,
    # so allow a slightly looser tolerance there; f32-gating path uses 1e-2.
    tol = 2e-2 if _elementwise_dtype() == jnp.bfloat16 else 1e-2
    err = float(jnp.max(jnp.abs(out - ref)))
    assert jnp.allclose(out, ref, atol=tol, rtol=tol), err

    print("KERNEL_OK")
</pallas_src>

<mosaic_0001>
module attributes {stable_mosaic.version = 11 : i64} {
  func.func @_sparse_attn_kernel(%arg0: i32, %arg1: memref<1x128x128xf32, #tpu.memory_space<vmem>>, %arg2: memref<1x128x128xf32, #tpu.memory_space<vmem>>, %arg3: memref<1x128x128xf32, #tpu.memory_space<vmem>>, %arg4: memref<1x128x4xf32, #tpu.memory_space<vmem>>, %arg5: memref<1x1x128xf32, #tpu.memory_space<vmem>>, %arg6: memref<1x128x128xf32, #tpu.memory_space<vmem>>) attributes {dimension_semantics = [#tpu.dimension_semantics<parallel>], iteration_bounds = array<i64: 2>, scalar_prefetch = 0 : i64, scratch_operands = 0 : i64, tpu.core_type = #tpu.core_type<tc>, window_params = [{transform_indices = @transform_0, window_bounds = array<i64: 1, 128, 128>}, {transform_indices = @transform_1, window_bounds = array<i64: 1, 128, 128>}, {transform_indices = @transform_2, window_bounds = array<i64: 1, 128, 128>}, {transform_indices = @transform_3, window_bounds = array<i64: 1, 128, 4>}, {transform_indices = @transform_4, window_bounds = array<i64: 1, 1, 128>}, {transform_indices = @transform_5, window_bounds = array<i64: 1, 128, 128>}]} {
    %c0 = arith.constant 0 : index
    %c0_0 = arith.constant 0 : index
    %c0_1 = arith.constant 0 : index
    %0 = vector.load %arg4[%c0, %c0_0, %c0_1] : memref<1x128x4xf32, #tpu.memory_space<vmem>>, vector<1x128x4xf32>
    %1 = vector.shape_cast %0 : vector<1x128x4xf32> to vector<128x4xf32>
    %c0_2 = arith.constant 0 : index
    %c0_3 = arith.constant 0 : index
    %c0_4 = arith.constant 0 : index
    %2 = vector.load %arg5[%c0_2, %c0_3, %c0_4] : memref<1x1x128xf32, #tpu.memory_space<vmem>>, vector<1x1x128xf32>
    %3 = vector.shape_cast %2 : vector<1x1x128xf32> to vector<1x128xf32>
    %cst = arith.constant 1.000000e+00 : f32
    %4 = vector.broadcast %cst : f32 to vector<1x128xf32>
    %5 = arith.subf %3, %4 : vector<1x128xf32>
    %cst_5 = arith.constant 1.000000e+06 : f32
    %6 = vector.broadcast %cst_5 : f32 to vector<1x128xf32>
    %7 = arith.mulf %5, %6 : vector<1x128xf32>
    %8 = vector.extract_strided_slice %1 {offsets = [0, 0], sizes = [128, 1], strides = [1, 1]} : vector<128x4xf32> to vector<128x1xf32>
    %9 = vector.shape_cast %8 : vector<128x1xf32> to vector<128x1xf32>
    %10 = vector.broadcast %9 : vector<128x1xf32> to vector<128x32xf32>
    %11 = vector.extract_strided_slice %1 {offsets = [0, 1], sizes = [128, 1], strides = [1, 1]} : vector<128x4xf32> to vector<128x1xf32>
    %12 = vector.shape_cast %11 : vector<128x1xf32> to vector<128x1xf32>
    %13 = vector.broadcast %12 : vector<128x1xf32> to vector<128x32xf32>
    %14 = vector.extract_strided_slice %1 {offsets = [0, 2], sizes = [128, 1], strides = [1, 1]} : vector<128x4xf32> to vector<128x1xf32>
    %15 = vector.shape_cast %14 : vector<128x1xf32> to vector<128x1xf32>
    %16 = vector.broadcast %15 : vector<128x1xf32> to vector<128x32xf32>
    %17 = vector.extract_strided_slice %1 {offsets = [0, 3], sizes = [128, 1], strides = [1, 1]} : vector<128x4xf32> to vector<128x1xf32>
    %18 = vector.shape_cast %17 : vector<128x1xf32> to vector<128x1xf32>
    %19 = vector.broadcast %18 : vector<128x1xf32> to vector<128x32xf32>
    %20 = tpu.concatenate %10, %13, %16, %19 in 1 : vector<128x32xf32>, vector<128x32xf32>, vector<128x32xf32>, vector<128x32xf32> -> vector<128x128xf32>
    %cst_6 = arith.constant 0.176776692 : f32
    %21 = vector.broadcast %cst_6 : f32 to vector<128x128xf32>
    %22 = arith.mulf %20, %21 : vector<128x128xf32>
    %c0_7 = arith.constant 0 : index
    %c0_8 = arith.constant 0 : index
    %c0_9 = arith.constant 0 : index
    %23 = vector.load %arg1[%c0_7, %c0_8, %c0_9] : memref<1x128x128xf32, #tpu.memory_space<vmem>>, vector<1x128x32xf32>
    %24 = vector.shape_cast %23 : vector<1x128x32xf32> to vector<128x32xf32>
    %c0_10 = arith.constant 0 : index
    %c0_11 = arith.constant 0 : index
    %c0_12 = arith.constant 0 : index
    %25 = vector.load %arg2[%c0_10, %c0_11, %c0_12] : memref<1x128x128xf32, #tpu.memory_space<vmem>>, vector<1x128x32xf32>
    %26 = vector.shape_cast %25 : vector<1x128x32xf32> to vector<128x32xf32>
    %c0_13 = arith.constant 0 : index
    %c0_14 = arith.constant 0 : index
    %c0_15 = arith.constant 0 : index
    %27 = vector.load %arg3[%c0_13, %c0_14, %c0_15] : memref<1x128x128xf32, #tpu.memory_space<vmem>>, vector<1x128x32xf32>
    %28 = vector.shape_cast %27 : vector<1x128x32xf32> to vector<128x32xf32>
    %29 = tpu.concatenate %24, %24, %24, %24 in 1 : vector<128x32xf32>, vector<128x32xf32>, vector<128x32xf32>, vector<128x32xf32> -> vector<128x128xf32>
    %30 = arith.mulf %29, %22 : vector<128x128xf32>
    %31 = arith.truncf %30 : vector<128x128xf32> to vector<128x128xbf16>
    %32 = tpu.concatenate %26, %26, %26, %26 in 1 : vector<128x32xf32>, vector<128x32xf32>, vector<128x32xf32>, vector<128x32xf32> -> vector<128x128xf32>
    %33 = arith.mulf %32, %20 : vector<128x128xf32>
    %34 = arith.truncf %33 : vector<128x128xf32> to vector<128x128xbf16>
    %35 = tpu.concatenate %28, %28, %28, %28 in 1 : vector<128x32xf32>, vector<128x32xf32>, vector<128x32xf32>, vector<128x32xf32> -> vector<128x128xf32>
    %36 = arith.mulf %35, %20 : vector<128x128xf32>
    %37 = arith.truncf %36 : vector<128x128xf32> to vector<128x128xbf16>
    %cst_16 = arith.constant dense<0.000000e+00> : vector<128x128xf32>
    %38 = tpu.matmul %31, %34, %cst_16 {dimension_numbers = #tpu.dot_dimension_numbers<[1], [1], [0], [0], [0, 0, 1, 0], [], []>} : vector<128x128xbf16>, vector<128x128xbf16>, vector<128x128xf32> -> vector<128x128xf32>
    %39 = vector.broadcast %7 : vector<1x128xf32> to vector<128x128xf32>
    %40 = arith.addf %38, %39 : vector<128x128xf32>
    %cst_17 = arith.constant dense<0xFF800000> : vector<128xf32>
    %41 = vector.multi_reduction <maximumf>, %40, %cst_17 [1] : vector<128x128xf32> to vector<128xf32>
    %42 = vector.shape_cast %41 : vector<128xf32> to vector<128x1xf32>
    %43 = vector.broadcast %42 : vector<128x1xf32> to vector<128x128xf32>
    %44 = arith.subf %40, %43 : vector<128x128xf32>
    %45 = math.exp %44 : vector<128x128xf32>
    %cst_18 = arith.constant dense<0.000000e+00> : vector<128xf32>
    %46 = vector.multi_reduction <add>, %45, %cst_18 [1] : vector<128x128xf32> to vector<128xf32>
    %47 = vector.shape_cast %46 : vector<128xf32> to vector<128x1xf32>
    %48 = tpu.reciprocal %47 {approx = true} : vector<128x1xf32> -> vector<128x1xf32>
    %49 = arith.truncf %45 : vector<128x128xf32> to vector<128x128xbf16>
    %cst_19 = arith.constant dense<0.000000e+00> : vector<128x128xf32>
    %50 = tpu.matmul %49, %37, %cst_19 {dimension_numbers = #tpu.dot_dimension_numbers<[1], [0], [0], [1], [0, 0, 1, 1], [], []>} : vector<128x128xbf16>, vector<128x128xbf16>, vector<128x128xf32> -> vector<128x128xf32>
    %51 = arith.mulf %50, %20 : vector<128x128xf32>
    %52 = vector.extract_strided_slice %51 {offsets = [0, 0], sizes = [128, 32], strides = [1, 1]} : vector<128x128xf32> to vector<128x32xf32>
    %53 = vector.extract_strided_slice %51 {offsets = [0, 32], sizes = [128, 32], strides = [1, 1]} : vector<128x128xf32> to vector<128x32xf32>
    %54 = arith.addf %52, %53 : vector<128x32xf32>
    %55 = vector.extract_strided_slice %51 {offsets = [0, 64], sizes = [128, 32], strides = [1, 1]} : vector<128x128xf32> to vector<128x32xf32>
    %56 = arith.addf %54, %55 : vector<128x32xf32>
    %57 = vector.extract_strided_slice %51 {offsets = [0, 96], sizes = [128, 32], strides = [1, 1]} : vector<128x128xf32> to vector<128x32xf32>
    %58 = arith.addf %56, %57 : vector<128x32xf32>
    %59 = vector.broadcast %48 : vector<128x1xf32> to vector<128x32xf32>
    %60 = arith.mulf %58, %59 : vector<128x32xf32>
    %c0_20 = arith.constant 0 : index
    %c0_21 = arith.constant 0 : index
    %c0_22 = arith.constant 0 : index
    %61 = vector.load %arg6[%c0_20, %c0_21, %c0_22] : memref<1x128x128xf32, #tpu.memory_space<vmem>>, vector<1x128x32xf32>
    %62 = vector.shape_cast %61 : vector<1x128x32xf32> to vector<128x32xf32>
    %63 = vector.shape_cast %60 : vector<128x32xf32> to vector<1x128x32xf32>
    tpu.vector_store %arg6[%c0_20, %c0_21, %c0_22], %63 {strides = array<i32>} : memref<1x128x128xf32, #tpu.memory_space<vmem>>, vector<1x128x32xf32>,
    %c0_23 = arith.constant 0 : index
    %c0_24 = arith.constant 0 : index
    %c32 = arith.constant 32 : index
    %64 = vector.load %arg1[%c0_23, %c0_24, %c32] : memref<1x128x128xf32, #tpu.memory_space<vmem>>, vector<1x128x32xf32>
    %65 = vector.shape_cast %64 : vector<1x128x32xf32> to vector<128x32xf32>
    %c0_25 = arith.constant 0 : index
    %c0_26 = arith.constant 0 : index
    %c32_27 = arith.constant 32 : index
    %66 = vector.load %arg2[%c0_25, %c0_26, %c32_27] : memref<1x128x128xf32, #tpu.memory_space<vmem>>, vector<1x128x32xf32>
    %67 = vector.shape_cast %66 : vector<1x128x32xf32> to vector<128x32xf32>
    %c0_28 = arith.constant 0 : index
    %c0_29 = arith.constant 0 : index
    %c32_30 = arith.constant 32 : index
    %68 = vector.load %arg3[%c0_28, %c0_29, %c32_30] : memref<1x128x128xf32, #tpu.memory_space<vmem>>, vector<1x128x32xf32>
    %69 = vector.shape_cast %68 : vector<1x128x32xf32> to vector<128x32xf32>
    %70 = tpu.concatenate %65, %65, %65, %65 in 1 : vector<128x32xf32>, vector<128x32xf32>, vector<128x32xf32>, vector<128x32xf32> -> vector<128x128xf32>
    %71 = arith.mulf %70, %22 : vector<128x128xf32>
    %72 = arith.truncf %71 : vector<128x128xf32> to vector<128x128xbf16>
    %73 = tpu.concatenate %67, %67, %67, %67 in 1 : vector<128x32xf32>, vector<128x32xf32>, vector<128x32xf32>, vector<128x32xf32> -> vector<128x128xf32>
    %74 = arith.mulf %73, %20 : vector<128x128xf32>
    %75 = arith.truncf %74 : vector<128x128xf32> to vector<128x128xbf16>
    %76 = tpu.concatenate %69, %69, %69, %69 in 1 : vector<128x32xf32>, vector<128x32xf32>, vector<128x32xf32>, vector<128x32xf32> -> vector<128x128xf32>
    %77 = arith.mulf %76, %20 : vector<128x128xf32>
    %78 = arith.truncf %77 : vector<128x128xf32> to vector<128x128xbf16>
    %cst_31 = arith.constant dense<0.000000e+00> : vector<128x128xf32>
    %79 = tpu.matmul %72, %75, %cst_31 {dimension_numbers = #tpu.dot_dimension_numbers<[1], [1], [0], [0], [0, 0, 1, 0], [], []>} : vector<128x128xbf16>, vector<128x128xbf16>, vector<128x128xf32> -> vector<128x128xf32>
    %80 = vector.broadcast %7 : vector<1x128xf32> to vector<128x128xf32>
    %81 = arith.addf %79, %80 : vector<128x128xf32>
    %cst_32 = arith.constant dense<0xFF800000> : vector<128xf32>
    %82 = vector.multi_reduction <maximumf>, %81, %cst_32 [1] : vector<128x128xf32> to vector<128xf32>
    %83 = vector.shape_cast %82 : vector<128xf32> to vector<128x1xf32>
    %84 = vector.broadcast %83 : vector<128x1xf32> to vector<128x128xf32>
    %85 = arith.subf %81, %84 : vector<128x128xf32>
    %86 = math.exp %85 : vector<128x128xf32>
    %cst_33 = arith.constant dense<0.000000e+00> : vector<128xf32>
    %87 = vector.multi_reduction <add>, %86, %cst_33 [1] : vector<128x128xf32> to vector<128xf32>
    %88 = vector.shape_cast %87 : vector<128xf32> to vector<128x1xf32>
    %89 = tpu.reciprocal %88 {approx = true} : vector<128x1xf32> -> vector<128x1xf32>
    %90 = arith.truncf %86 : vector<128x128xf32> to vector<128x128xbf16>
    %cst_34 = arith.constant dense<0.000000e+00> : vector<128x128xf32>
    %91 = tpu.matmul %90, %78, %cst_34 {dimension_numbers = #tpu.dot_dimension_numbers<[1], [0], [0], [1], [0, 0, 1, 1], [], []>} : vector<128x128xbf16>, vector<128x128xbf16>, vector<128x128xf32> -> vector<128x128xf32>
    %92 = arith.mulf %91, %20 : vector<128x128xf32>
    %93 = vector.extract_strided_slice %92 {offsets = [0, 0], sizes = [128, 32], strides = [1, 1]} : vector<128x128xf32> to vector<128x32xf32>
    %94 = vector.extract_strided_slice %92 {offsets = [0, 32], sizes = [128, 32], strides = [1, 1]} : vector<128x128xf32> to vector<128x32xf32>
    %95 = arith.addf %93, %94 : vector<128x32xf32>
    %96 = vector.extract_strided_slice %92 {offsets = [0, 64], sizes = [128, 32], strides = [1, 1]} : vector<128x128xf32> to vector<128x32xf32>
    %97 = arith.addf %95, %96 : vector<128x32xf32>
    %98 = vector.extract_strided_slice %92 {offsets = [0, 96], sizes = [128, 32], strides = [1, 1]} : vector<128x128xf32> to vector<128x32xf32>
    %99 = arith.addf %97, %98 : vector<128x32xf32>
    %100 = vector.broadcast %89 : vector<128x1xf32> to vector<128x32xf32>
    %101 = arith.mulf %99, %100 : vector<128x32xf32>
    %c0_35 = arith.constant 0 : index
    %c0_36 = arith.constant 0 : index
    %c32_37 = arith.constant 32 : index
    %102 = vector.load %arg6[%c0_35, %c0_36, %c32_37] : memref<1x128x128xf32, #tpu.memory_space<vmem>>, vector<1x128x32xf32>
    %103 = vector.shape_cast %102 : vector<1x128x32xf32> to vector<128x32xf32>
    %104 = vector.shape_cast %101 : vector<128x32xf32> to vector<1x128x32xf32>
    tpu.vector_store %arg6[%c0_35, %c0_36, %c32_37], %104 {strides = array<i32>} : memref<1x128x128xf32, #tpu.memory_space<vmem>>, vector<1x128x32xf32>,
    %c0_38 = arith.constant 0 : index
    %c0_39 = arith.constant 0 : index
    %c64 = arith.constant 64 : index
    %105 = vector.load %arg1[%c0_38, %c0_39, %c64] : memref<1x128x128xf32, #tpu.memory_space<vmem>>, vector<1x128x32xf32>
    %106 = vector.shape_cast %105 : vector<1x128x32xf32> to vector<128x32xf32>
    %c0_40 = arith.constant 0 : index
    %c0_41 = arith.constant 0 : index
    %c64_42 = arith.constant 64 : index
    %107 = vector.load %arg2[%c0_40, %c0_41, %c64_42] : memref<1x128x128xf32, #tpu.memory_space<vmem>>, vector<1x128x32xf32>
    %108 = vector.shape_cast %107 : vector<1x128x32xf32> to vector<128x32xf32>
    %c0_43 = arith.constant 0 : index
    %c0_44 = arith.constant 0 : index
    %c64_45 = arith.constant 64 : index
    %109 = vector.load %arg3[%c0_43, %c0_44, %c64_45] : memref<1x128x128xf32, #tpu.memory_space<vmem>>, vector<1x128x32xf32>
    %110 = vector.shape_cast %109 : vector<1x128x32xf32> to vector<128x32xf32>
    %111 = tpu.concatenate %106, %106, %106, %106 in 1 : vector<128x32xf32>, vector<128x32xf32>, vector<128x32xf32>, vector<128x32xf32> -> vector<128x128xf32>
    %112 = arith.mulf %111, %22 : vector<128x128xf32>
    %113 = arith.truncf %112 : vector<128x128xf32> to vector<128x128xbf16>
    %114 = tpu.concatenate %108, %108, %108, %108 in 1 : vector<128x32xf32>, vector<128x32xf32>, vector<128x32xf32>, vector<128x32xf32> -> vector<128x128xf32>
    %115 = arith.mulf %114, %20 : vector<128x128xf32>
    %116 = arith.truncf %115 : vector<128x128xf32> to vector<128x128xbf16>
    %117 = tpu.concatenate %110, %110, %110, %110 in 1 : vector<128x32xf32>, vector<128x32xf32>, vector<128x32xf32>, vector<128x32xf32> -> vector<128x128xf32>
    %118 = arith.mulf %117, %20 : vector<128x128xf32>
    %119 = arith.truncf %118 : vector<128x128xf32> to vector<128x128xbf16>
    %cst_46 = arith.constant dense<0.000000e+00> : vector<128x128xf32>
    %120 = tpu.matmul %113, %116, %cst_46 {dimension_numbers = #tpu.dot_dimension_numbers<[1], [1], [0], [0], [0, 0, 1, 0], [], []>} : vector<128x128xbf16>, vector<128x128xbf16>, vector<128x128xf32> -> vector<128x128xf32>
    %121 = vector.broadcast %7 : vector<1x128xf32> to vector<128x128xf32>
    %122 = arith.addf %120, %121 : vector<128x128xf32>
    %cst_47 = arith.constant dense<0xFF800000> : vector<128xf32>
    %123 = vector.multi_reduction <maximumf>, %122, %cst_47 [1] : vector<128x128xf32> to vector<128xf32>
    %124 = vector.shape_cast %123 : vector<128xf32> to vector<128x1xf32>
    %125 = vector.broadcast %124 : vector<128x1xf32> to vector<128x128xf32>
    %126 = arith.subf %122, %125 : vector<128x128xf32>
    %127 = math.exp %126 : vector<128x128xf32>
    %cst_48 = arith.constant dense<0.000000e+00> : vector<128xf32>
    %128 = vector.multi_reduction <add>, %127, %cst_48 [1] : vector<128x128xf32> to vector<128xf32>
    %129 = vector.shape_cast %128 : vector<128xf32> to vector<128x1xf32>
    %130 = tpu.reciprocal %129 {approx = true} : vector<128x1xf32> -> vector<128x1xf32>
    %131 = arith.truncf %127 : vector<128x128xf32> to vector<128x128xbf16>
    %cst_49 = arith.constant dense<0.000000e+00> : vector<128x128xf32>
    %132 = tpu.matmul %131, %119, %cst_49 {dimension_numbers = #tpu.dot_dimension_numbers<[1], [0], [0], [1], [0, 0, 1, 1], [], []>} : vector<128x128xbf16>, vector<128x128xbf16>, vector<128x128xf32> -> vector<128x128xf32>
    %133 = arith.mulf %132, %20 : vector<128x128xf32>
    %134 = vector.extract_strided_slice %133 {offsets = [0, 0], sizes = [128, 32], strides = [1, 1]} : vector<128x128xf32> to vector<128x32xf32>
    %135 = vector.extract_strided_slice %133 {offsets = [0, 32], sizes = [128, 32], strides = [1, 1]} : vector<128x128xf32> to vector<128x32xf32>
    %136 = arith.addf %134, %135 : vector<128x32xf32>
    %137 = vector.extract_strided_slice %133 {offsets = [0, 64], sizes = [128, 32], strides = [1, 1]} : vector<128x128xf32> to vector<128x32xf32>
    %138 = arith.addf %136, %137 : vector<128x32xf32>
    %139 = vector.extract_strided_slice %133 {offsets = [0, 96], sizes = [128, 32], strides = [1, 1]} : vector<128x128xf32> to vector<128x32xf32>
    %140 = arith.addf %138, %139 : vector<128x32xf32>
    %141 = vector.broadcast %130 : vector<128x1xf32> to vector<128x32xf32>
    %142 = arith.mulf %140, %141 : vector<128x32xf32>
    %c0_50 = arith.constant 0 : index
    %c0_51 = arith.constant 0 : index
    %c64_52 = arith.constant 64 : index
    %143 = vector.load %arg6[%c0_50, %c0_51, %c64_52] : memref<1x128x128xf32, #tpu.memory_space<vmem>>, vector<1x128x32xf32>
    %144 = vector.shape_cast %143 : vector<1x128x32xf32> to vector<128x32xf32>
    %145 = vector.shape_cast %142 : vector<128x32xf32> to vector<1x128x32xf32>
    tpu.vector_store %arg6[%c0_50, %c0_51, %c64_52], %145 {strides = array<i32>} : memref<1x128x128xf32, #tpu.memory_space<vmem>>, vector<1x128x32xf32>,
    %c0_53 = arith.constant 0 : index
    %c0_54 = arith.constant 0 : index
    %c96 = arith.constant 96 : index
    %146 = vector.load %arg1[%c0_53, %c0_54, %c96] : memref<1x128x128xf32, #tpu.memory_space<vmem>>, vector<1x128x32xf32>
    %147 = vector.shape_cast %146 : vector<1x128x32xf32> to vector<128x32xf32>
    %c0_55 = arith.constant 0 : index
    %c0_56 = arith.constant 0 : index
    %c96_57 = arith.constant 96 : index
    %148 = vector.load %arg2[%c0_55, %c0_56, %c96_57] : memref<1x128x128xf32, #tpu.memory_space<vmem>>, vector<1x128x32xf32>
    %149 = vector.shape_cast %148 : vector<1x128x32xf32> to vector<128x32xf32>
    %c0_58 = arith.constant 0 : index
    %c0_59 = arith.constant 0 : index
    %c96_60 = arith.constant 96 : index
    %150 = vector.load %arg3[%c0_58, %c0_59, %c96_60] : memref<1x128x128xf32, #tpu.memory_space<vmem>>, vector<1x128x32xf32>
    %151 = vector.shape_cast %150 : vector<1x128x32xf32> to vector<128x32xf32>
    %152 = tpu.concatenate %147, %147, %147, %147 in 1 : vector<128x32xf32>, vector<128x32xf32>, vector<128x32xf32>, vector<128x32xf32> -> vector<128x128xf32>
    %153 = arith.mulf %152, %22 : vector<128x128xf32>
    %154 = arith.truncf %153 : vector<128x128xf32> to vector<128x128xbf16>
    %155 = tpu.concatenate %149, %149, %149, %149 in 1 : vector<128x32xf32>, vector<128x32xf32>, vector<128x32xf32>, vector<128x32xf32> -> vector<128x128xf32>
    %156 = arith.mulf %155, %20 : vector<128x128xf32>
    %157 = arith.truncf %156 : vector<128x128xf32> to vector<128x128xbf16>
    %158 = tpu.concatenate %151, %151, %151, %151 in 1 : vector<128x32xf32>, vector<128x32xf32>, vector<128x32xf32>, vector<128x32xf32> -> vector<128x128xf32>
    %159 = arith.mulf %158, %20 : vector<128x128xf32>
    %160 = arith.truncf %159 : vector<128x128xf32> to vector<128x128xbf16>
    %cst_61 = arith.constant dense<0.000000e+00> : vector<128x128xf32>
    %161 = tpu.matmul %154, %157, %cst_61 {dimension_numbers = #tpu.dot_dimension_numbers<[1], [1], [0], [0], [0, 0, 1, 0], [], []>} : vector<128x128xbf16>, vector<128x128xbf16>, vector<128x128xf32> -> vector<128x128xf32>
    %162 = vector.broadcast %7 : vector<1x128xf32> to vector<128x128xf32>
    %163 = arith.addf %161, %162 : vector<128x128xf32>
    %cst_62 = arith.constant dense<0xFF800000> : vector<128xf32>
    %164 = vector.multi_reduction <maximumf>, %163, %cst_62 [1] : vector<128x128xf32> to vector<128xf32>
    %165 = vector.shape_cast %164 : vector<128xf32> to vector<128x1xf32>
    %166 = vector.broadcast %165 : vector<128x1xf32> to vector<128x128xf32>
    %167 = arith.subf %163, %166 : vector<128x128xf32>
    %168 = math.exp %167 : vector<128x128xf32>
    %cst_63 = arith.constant dense<0.000000e+00> : vector<128xf32>
    %169 = vector.multi_reduction <add>, %168, %cst_63 [1] : vector<128x128xf32> to vector<128xf32>
    %170 = vector.shape_cast %169 : vector<128xf32> to vector<128x1xf32>
    %171 = tpu.reciprocal %170 {approx = true} : vector<128x1xf32> -> vector<128x1xf32>
    %172 = arith.truncf %168 : vector<128x128xf32> to vector<128x128xbf16>
    %cst_64 = arith.constant dense<0.000000e+00> : vector<128x128xf32>
    %173 = tpu.matmul %172, %160, %cst_64 {dimension_numbers = #tpu.dot_dimension_numbers<[1], [0], [0], [1], [0, 0, 1, 1], [], []>} : vector<128x128xbf16>, vector<128x128xbf16>, vector<128x128xf32> -> vector<128x128xf32>
    %174 = arith.mulf %173, %20 : vector<128x128xf32>
    %175 = vector.extract_strided_slice %174 {offsets = [0, 0], sizes = [128, 32], strides = [1, 1]} : vector<128x128xf32> to vector<128x32xf32>
    %176 = vector.extract_strided_slice %174 {offsets = [0, 32], sizes = [128, 32], strides = [1, 1]} : vector<128x128xf32> to vector<128x32xf32>
    %177 = arith.addf %175, %176 : vector<128x32xf32>
    %178 = vector.extract_strided_slice %174 {offsets = [0, 64], sizes = [128, 32], strides = [1, 1]} : vector<128x128xf32> to vector<128x32xf32>
    %179 = arith.addf %177, %178 : vector<128x32xf32>
    %180 = vector.extract_strided_slice %174 {offsets = [0, 96], sizes = [128, 32], strides = [1, 1]} : vector<128x128xf32> to vector<128x32xf32>
    %181 = arith.addf %179, %180 : vector<128x32xf32>
    %182 = vector.broadcast %171 : vector<128x1xf32> to vector<128x32xf32>
    %183 = arith.mulf %181, %182 : vector<128x32xf32>
    %c0_65 = arith.constant 0 : index
    %c0_66 = arith.constant 0 : index
    %c96_67 = arith.constant 96 : index
    %184 = vector.load %arg6[%c0_65, %c0_66, %c96_67] : memref<1x128x128xf32, #tpu.memory_space<vmem>>, vector<1x128x32xf32>
    %185 = vector.shape_cast %184 : vector<1x128x32xf32> to vector<128x32xf32>
    %186 = vector.shape_cast %183 : vector<128x32xf32> to vector<1x128x32xf32>
    tpu.vector_store %arg6[%c0_65, %c0_66, %c96_67], %186 {strides = array<i32>} : memref<1x128x128xf32, #tpu.memory_space<vmem>>, vector<1x128x32xf32>,
    return
  }
  func.func @transform_0(%arg0: i32) -> (i32, i32, i32) {
    %c0_i32 = arith.constant 0 : i32
    %c0_i32_0 = arith.constant 0 : i32
    %c0_i32_1 = arith.constant 0 : i32
    return %arg0, %c0_i32, %c0_i32_0 : i32, i32, i32
  }
  func.func @transform_1(%arg0: i32) -> (i32, i32, i32) {
    %c0_i32 = arith.constant 0 : i32
    %c0_i32_0 = arith.constant 0 : i32
    %c0_i32_1 = arith.constant 0 : i32
    return %arg0, %c0_i32, %c0_i32_0 : i32, i32, i32
  }
  func.func @transform_2(%arg0: i32) -> (i32, i32, i32) {
    %c0_i32 = arith.constant 0 : i32
    %c0_i32_0 = arith.constant 0 : i32
    %c0_i32_1 = arith.constant 0 : i32
    return %arg0, %c0_i32, %c0_i32_0 : i32, i32, i32
  }
  func.func @transform_3(%arg0: i32) -> (i32, i32, i32) {
    %c0_i32 = arith.constant 0 : i32
    %c0_i32_0 = arith.constant 0 : i32
    %c0_i32_1 = arith.constant 0 : i32
    return %arg0, %c0_i32, %c0_i32_0 : i32, i32, i32
  }
  func.func @transform_4(%arg0: i32) -> (i32, i32, i32) {
    %c0_i32 = arith.constant 0 : i32
    %c0_i32_0 = arith.constant 0 : i32
    %c0_i32_1 = arith.constant 0 : i32
    return %arg0, %c0_i32, %c0_i32_0 : i32, i32, i32
  }
  func.func @transform_5(%arg0: i32) -> (i32, i32, i32) {
    %c0_i32 = arith.constant 0 : i32
    %c0_i32_0 = arith.constant 0 : i32
    %c0_i32_1 = arith.constant 0 : i32
    return %arg0, %c0_i32, %c0_i32_0 : i32, i32, i32
  }
}

</mosaic_0001>

<llo_original>
// kernel: tpu_custom_call.1
$region0: #{tpu_custom_call.1}
  #allocation0 [shape = 'u32[]', space=smem, size = 0x4, offset = 0x4, fixed_abs, tag = 'smem constant byte address 0x4 - core index']
  #allocation1 [shape = 'u32[144,128]{1,0:T(1,128)}', space=vmem, size = 0x12000, scoped, tag = 'internal scratch']
  %s0 = inlined_call_operand.vmem [shape: f32[2,128,128], index: 0, kind: input, shape index: {}]
  %s1 = inlined_call_operand.hbm [shape: f32[2,128,128], index: 1, kind: input, shape index: {}]
  %s2 = inlined_call_operand.hbm [shape: f32[2,128,128], index: 2, kind: input, shape index: {}]
  %s3 = inlined_call_operand.vmem [shape: f32[2,128,4], index: 3, kind: input, shape index: {}]
  %s4 = inlined_call_operand.vmem [shape: f32[2,1,128], index: 4, kind: input, shape index: {}]
  %s5 = inlined_call_operand.hbm [shape: f32[2,128,128], index: 5, kind: output, shape index: {}]
  %s6 = sld [smem:[#allocation0]]
  $region61: #{tpu_custom_call.1} parent=0
    _
  %s8 = ssub.s32 1, %s6
  %s9 = scalar_select 0, %s8, %s6
  $region1: #{tpu_custom_call.1} parent=0
    #allocation2 [shape = 'u8[131072]{0}', space=vmem, size = 0x20000, scoped, tag = 'input window, operand 1']
    #allocation3 [shape = 's32[2]{0}', space=sflag, size = 0x8, scoped, tag = 'scoped memory for tpu_custom_call.1']
    #allocation4 [shape = 's32[2]{0}', space=sflag, size = 0x8, scoped, tag = 'scoped memory for tpu_custom_call.1']
    #allocation5 [shape = 'u8[131072]{0}', space=vmem, size = 0x20000, scoped, tag = 'input window, operand 2']
    #allocation6 [shape = 's32[2]{0}', space=sflag, size = 0x8, scoped, tag = 'scoped memory for tpu_custom_call.1']
    #allocation7 [shape = 'u8[131072]{0}', space=vmem, size = 0x20000, scoped, tag = 'output window, operand 0']
    %10 = vsyncpa [#allocation3], 0
    %s11 = scalar_lea.sflag [#allocation3], 1
    %12 = vsyncpa %s11, 0
    %13 = vsyncpa [#allocation6], 0
    %s14 = scalar_lea.sflag [#allocation6], 1
    %15 = vsyncpa %s14, 0
    %16 = vsyncpa [#allocation4], 0
    %s17 = scalar_lea.sflag [#allocation4], 1
    %18 = vsyncpa %s17, 0
    loop: start=0, step=1, limit=4
    $region2: #{tpu_custom_call.1} parent=1 // loop_pre_header
      _
    $region3: #{tpu_custom_call.1} parent=1 // loop_header
      %s20 = sphi 0, %s24
      %p21 = scmp.ge.s32.totalorder %s20, 4
      %s30 = sphi 0, %s32
      %s33 = sphi 0, %s30
      %s34 = sphi 0, %s33
      %s50 = sphi 0, %s34
      %s56 = sphi 0, %s58
      %s59 = sphi 0, %s56
      %s60 = sphi 0, %s59
      %s76 = sphi 0, %s60
      %s82 = sphi 0, %s84
      %s85 = sphi 0, %s82
      %s86 = sphi 0, %s85
      %s102 = sphi 0, %s86
      %s108 = sphi 0, %s110
      %s111 = sphi 0, %s108
      %s112 = sphi 0, %s111
      %s128 = sphi 0, %s112
      %s134 = sphi 0, %s136
      %s137 = sphi 0, %s134
      %s138 = sphi 0, %s137
      %s154 = sphi 0, %s138
      %s160 = sphi 0, %s162
      %s163 = sphi 0, %s160
      %s164 = sphi 0, %s163
      %s180 = sphi 0, %s164
    $region4: #{tpu_custom_call.1} parent=1 // loop_header_branch
      %23 = sbr.rel (%p21) target = $region8
    $region5: #{tpu_custom_call.1} parent=1 // loop_body
      %s25 = ssub.s32 %s20, 1
      %s26 = ssub.s32 %s20, 2
      %s27 = sadd.s32 %s20, 1
      %s28 = ssub.s32 %s20, %s27
      %p29 = scmp.eq.s32.totalorder %s28, 0
      %s31 = sadd.s32 %s30, 1
      %s32 = scalar_select %p29, %s30, %s31
      %p35 = pneg %p29
      %p36 = scmp.eq.s32.totalorder %s20, 1
      %p37 = por %p35, %p36
      %p38 = scmp.ne.s32.totalorder %s30, %s33
      %p39 = scmp.eq.s32.totalorder %s20, 0
      %p40 = por %p38, %p39
      %p41 = scmp.ne.s32.totalorder %s30, %s33
      %p42 = scmp.eq.s32.totalorder %s25, 1
      %p43 = por %p41, %p42
      %p44 = scmp.ne.s32.totalorder %s33, %s34
      %p45 = scmp.eq.s32.totalorder %s25, 0
      %p46 = por %p44, %p45
      %p47 = scmp.ne.s32.totalorder %s33, %s34
      %p48 = scmp.eq.s32.totalorder %s26, 1
      %p49 = por %p47, %p48
      %p51 = scmp.ne.s32.totalorder %s34, %s50
      %p52 = scmp.eq.s32.totalorder %s26, 0
      %p53 = por %p51, %p52
      %s54 = ssub.s32 %s20, %s27
      %p55 = scmp.eq.s32.totalorder %s54, 0
      %s57 = sadd.s32 %s56, 1
      %s58 = scalar_select %p55, %s56, %s57
      %p61 = pneg %p55
      %p62 = scmp.eq.s32.totalorder %s20, 1
      %p63 = por %p61, %p62
      %p64 = scmp.ne.s32.totalorder %s56, %s59
      %p65 = scmp.eq.s32.totalorder %s20, 0
      %p66 = por %p64, %p65
      %p67 = scmp.ne.s32.totalorder %s56, %s59
      %p68 = scmp.eq.s32.totalorder %s25, 1
      %p69 = por %p67, %p68
      %p70 = scmp.ne.s32.totalorder %s59, %s60
      %p71 = scmp.eq.s32.totalorder %s25, 0
      %p72 = por %p70, %p71
      %p73 = scmp.ne.s32.totalorder %s59, %s60
      %p74 = scmp.eq.s32.totalorder %s26, 1
      %p75 = por %p73, %p74
      %p77 = scmp.ne.s32.totalorder %s60, %s76
      %p78 = scmp.eq.s32.totalorder %s26, 0
      %p79 = por %p77, %p78
      %s80 = ssub.s32 %s20, %s27
      %p81 = scmp.eq.s32.totalorder %s80, 0
      %s83 = sadd.s32 %s82, 1
      %s84 = scalar_select %p81, %s82, %s83
      %p87 = pneg %p81
      %p88 = scmp.eq.s32.totalorder %s20, 1
      %p89 = por %p87, %p88
      %p90 = scmp.ne.s32.totalorder %s82, %s85
      %p91 = scmp.eq.s32.totalorder %s20, 0
      %p92 = por %p90, %p91
      %p93 = scmp.ne.s32.totalorder %s82, %s85
      %p94 = scmp.eq.s32.totalorder %s25, 1
      %p95 = por %p93, %p94
      %p96 = scmp.ne.s32.totalorder %s85, %s86
      %p97 = scmp.eq.s32.totalorder %s25, 0
      %p98 = por %p96, %p97
      %p99 = scmp.ne.s32.totalorder %s85, %s86
      %p100 = scmp.eq.s32.totalorder %s26, 1
      %p101 = por %p99, %p100
      %p103 = scmp.ne.s32.totalorder %s86, %s102
      %p104 = scmp.eq.s32.totalorder %s26, 0
      %p105 = por %p103, %p104
      %s106 = ssub.s32 %s20, %s27
      %p107 = scmp.eq.s32.totalorder %s106, 0
      %s109 = sadd.s32 %s108, 1
      %s110 = scalar_select %p107, %s108, %s109
      %p113 = pneg %p107
      %p114 = scmp.eq.s32.totalorder %s20, 1
      %p115 = por %p113, %p114
      %p116 = scmp.ne.s32.totalorder %s108, %s111
      %p117 = scmp.eq.s32.totalorder %s20, 0
      %p118 = por %p116, %p117
      %p119 = scmp.ne.s32.totalorder %s108, %s111
      %p120 = scmp.eq.s32.totalorder %s25, 1
      %p121 = por %p119, %p120
      %p122 = scmp.ne.s32.totalorder %s111, %s112
      %p123 = scmp.eq.s32.totalorder %s25, 0
      %p124 = por %p122, %p123
      %p125 = scmp.ne.s32.totalorder %s111, %s112
      %p126 = scmp.eq.s32.totalorder %s26, 1
      %p127 = por %p125, %p126
      %p129 = scmp.ne.s32.totalorder %s112, %s128
      %p130 = scmp.eq.s32.totalorder %s26, 0
      %p131 = por %p129, %p130
      %s132 = ssub.s32 %s20, %s27
      %p133 = scmp.eq.s32.totalorder %s132, 0
      %s135 = sadd.s32 %s134, 1
      %s136 = scalar_select %p133, %s134, %s135
      %p139 = pneg %p133
      %p140 = scmp.eq.s32.totalorder %s20, 1
      %p141 = por %p139, %p140
      %p142 = scmp.ne.s32.totalorder %s134, %s137
      %p143 = scmp.eq.s32.totalorder %s20, 0
      %p144 = por %p142, %p143
      %p145 = scmp.ne.s32.totalorder %s134, %s137
      %p146 = scmp.eq.s32.totalorder %s25, 1
      %p147 = por %p145, %p146
      %p148 = scmp.ne.s32.totalorder %s137, %s138
      %p149 = scmp.eq.s32.totalorder %s25, 0
      %p150 = por %p148, %p149
      %p151 = scmp.ne.s32.totalorder %s137, %s138
      %p152 = scmp.eq.s32.totalorder %s26, 1
      %p153 = por %p151, %p152
      %p155 = scmp.ne.s32.totalorder %s138, %s154
      %p156 = scmp.eq.s32.totalorder %s26, 0
      %p157 = por %p155, %p156
      %s158 = ssub.s32 %s20, %s27
      %p159 = scmp.eq.s32.totalorder %s158, 0
      %s161 = sadd.s32 %s160, 1
      %s162 = scalar_select %p159, %s160, %s161
      %p165 = pneg %p159
      %p166 = scmp.eq.s32.totalorder %s20, 1
      %p167 = por %p165, %p166
      %p168 = scmp.ne.s32.totalorder %s160, %s163
      %p169 = scmp.eq.s32.totalorder %s20, 0
      %p170 = por %p168, %p169
      %p171 = scmp.ne.s32.totalorder %s160, %s163
      %p172 = scmp.eq.s32.totalorder %s25, 1
      %p173 = por %p171, %p172
      %p174 = scmp.ne.s32.totalorder %s163, %s164
      %p175 = scmp.eq.s32.totalorder %s25, 0
      %p176 = por %p174, %p175
      %p177 = scmp.ne.s32.totalorder %s163, %s164
      %p178 = scmp.eq.s32.totalorder %s26, 1
      %p179 = por %p177, %p178
      %p181 = scmp.ne.s32.totalorder %s164, %s180
      %p182 = scmp.eq.s32.totalorder %s26, 0
      %p183 = por %p181, %p182
      %p184 = scmp.le.s32.totalorder 1, %s20
      %p185 = scmp.lt.s32.totalorder %s20, 3
      %p186 = pnand %p184, %p185
      %p187 = pneg %p186
      // Predicated region
      $region9: #{tpu_custom_call.1} parent=5 // pred_check
        _
      $region10: #{tpu_custom_call.1} parent=5 // pred_check_branch
        %189 = sbr.rel (%p186) target = $region12
      $region11: #{tpu_custom_call.1} parent=5 // pred_region
        %s190 = ssub.s32 %s20, 1
      $region12: #{tpu_custom_call.1} parent=5 // pred_fallthru
        _
      %p191 = scmp.lt.s32.totalorder %s20, 2
      // Predicated region
      $region13: #{tpu_custom_call.1} parent=5 // pred_check
        %p192 = pneg %p191
      $region14: #{tpu_custom_call.1} parent=5 // pred_check_branch
        %194 = sbr.rel (%p192) target = $region16
      $region15: #{tpu_custom_call.1} parent=5 // pred_region
        // Predicated region
        $region17: #{tpu_custom_call.1} parent=15 // pred_check
          %p195 = pneg %p40
        $region18: #{tpu_custom_call.1} parent=15 // pred_check_branch
          %197 = sbr.rel (%p195) target = $region20
        $region19: #{tpu_custom_call.1} parent=15 // pred_region
          %p198 = scmp.lt.s32.totalorder %s20, 1
          %s199 = scalar_select %p198, %s20, 1
          %s200 = smul.addr %s199, 16
          %s201 = smul.addr %s200, 8
          %s202 = scalar_lea.vmem %s0, %s201
        $region20: #{tpu_custom_call.1} parent=15 // pred_fallthru
          _
        // Predicated region
        $region21: #{tpu_custom_call.1} parent=15 // pred_check
          %p203 = pneg %p66
        $region22: #{tpu_custom_call.1} parent=15 // pred_check_branch
          %205 = sbr.rel (%p203) target = $region24
        $region23: #{tpu_custom_call.1} parent=15 // pred_region
          %s206 = sand.u32 %s56, 1
          %s207 = scalar_lea.sflag [#allocation3], %s206
          %s208 = sand.u32 %s56, 1
          %s209 = smul.addr %s208, 128
          %s210 = scalar_lea.vmem [#allocation2], %s209
          %s212 = ssub.s32 2048, 2048
          %213 = vsyncadd %s207, %s212
          %s214 = smul.addr %s20, 16
          %s215 = smul.addr %s214, 128
          %s216 = scalar_lea.hbm %s1, %s215
          %s217 = sshll.u32 %s210, 4
          %s218 = int_to_ptr.vmem [resolvable:$true] %s217
          %223 = dma.hbm_to_vmem [thread:$0]  %s216, 2048, %s218, %s207, 128, 128, 8
        $region24: #{tpu_custom_call.1} parent=15 // pred_fallthru
          _
        // Predicated region
        $region25: #{tpu_custom_call.1} parent=15 // pred_check
          %p224 = pneg %p92
        $region26: #{tpu_custom_call.1} parent=15 // pred_check_branch
          %226 = sbr.rel (%p224) target = $region28
        $region27: #{tpu_custom_call.1} parent=15 // pred_region
          %s227 = sand.u32 %s82, 1
          %s228 = scalar_lea.sflag [#allocation6], %s227
          %s229 = sand.u32 %s82, 1
          %s230 = smul.addr %s229, 128
          %s231 = scalar_lea.vmem [#allocation5], %s230
          %s233 = ssub.s32 2048, 2048
          %234 = vsyncadd %s228, %s233
          %s235 = smul.addr %s20, 16
          %s236 = smul.addr %s235, 128
          %s237 = scalar_lea.hbm %s2, %s236
          %s238 = sshll.u32 %s231, 4
          %s239 = int_to_ptr.vmem [resolvable:$true] %s238
          %244 = dma.hbm_to_vmem [thread:$0]  %s237, 2048, %s239, %s228, 128, 128, 8
        $region28: #{tpu_custom_call.1} parent=15 // pred_fallthru
          _
        // Predicated region
        $region29: #{tpu_custom_call.1} parent=15 // pred_check
          %p245 = pneg %p118
        $region30: #{tpu_custom_call.1} parent=15 // pred_check_branch
          %247 = sbr.rel (%p245) target = $region32
        $region31: #{tpu_custom_call.1} parent=15 // pred_region
          %p248 = scmp.lt.s32.totalorder %s20, 1
          %s249 = scalar_select %p248, %s20, 1
          %s250 = smul.addr %s249, 16
          %s251 = smul.addr %s250, 8
          %s252 = scalar_lea.vmem %s3, %s251
        $region32: #{tpu_custom_call.1} parent=15 // pred_fallthru
          _
        // Predicated region
        $region33: #{tpu_custom_call.1} parent=15 // pred_check
          %p253 = pneg %p144
        $region34: #{tpu_custom_call.1} parent=15 // pred_check_branch
          %255 = sbr.rel (%p253) target = $region36
        $region35: #{tpu_custom_call.1} parent=15 // pred_region
          %p256 = scmp.lt.s32.totalorder %s20, 1
          %s257 = scalar_select %p256, %s20, 1
          %s258 = scalar_lea.vmem %s4, %s257
        $region36: #{tpu_custom_call.1} parent=15 // pred_fallthru
          _
      $region16: #{tpu_custom_call.1} parent=5 // pred_fallthru
        _
      %p259 = scmp.le.s32.totalorder 1, %s20
      %p260 = scmp.lt.s32.totalorder %s20, 3
      %p261 = pnand %p259, %p260
      %p262 = pneg %p261
      // Predicated region
      $region37: #{tpu_custom_call.1} parent=5 // pred_check
        _
      $region38: #{tpu_custom_call.1} parent=5 // pred_check_branch
        %264 = sbr.rel (%p261) target = $region40
      $region39: #{tpu_custom_call.1} parent=5 // pred_region
        %s265 = ssub.s32 %s20, 1
        %s266 = sand.u32 %s59, 1
        %s267 = scalar_lea.sflag [#allocation3], %s266
        %s268 = sand.u32 %s59, 1
        %s269 = smul.addr %s268, 128
        %s270 = scalar_lea.vmem [#allocation2], %s269
        // Predicated region
        $region41: #{tpu_custom_call.1} parent=39 // pred_check
          %p271 = pneg %p72
        $region42: #{tpu_custom_call.1} parent=39 // pred_check_branch
          %273 = sbr.rel (%p271) target = $region44
        $region43: #{tpu_custom_call.1} parent=39 // pred_region
          %274 = dma.done %s267, 2048
        $region44: #{tpu_custom_call.1} parent=39 // pred_fallthru
          _
        %s275 = sand.u32 %s85, 1
        %s276 = scalar_lea.sflag [#allocation6], %s275
        %s277 = sand.u32 %s85, 1
        %s278 = smul.addr %s277, 128
        %s279 = scalar_lea.vmem [#allocation5], %s278
        // Predicated region
        $region45: #{tpu_custom_call.1} parent=39 // pred_check
          %p280 = pneg %p98
        $region46: #{tpu_custom_call.1} parent=39 // pred_check_branch
          %282 = sbr.rel (%p280) target = $region48
        $region47: #{tpu_custom_call.1} parent=39 // pred_region
          %283 = dma.done %s276, 2048
        $region48: #{tpu_custom_call.1} parent=39 // pred_fallthru
          _
        %p284 = scmp.lt.s32.totalorder %s25, 1
        %s285 = scalar_select %p284, %s25, 1
        %s286 = smul.addr %s285, 16
        %s287 = smul.addr %s286, 8
        %s288 = scalar_lea.vmem %s0, %s287
        %p289 = pneg %p46
        %p290 = pneg %p43
        %s291 = sand.u32 %s59, 1
        %s292 = scalar_lea.sflag [#allocation3], %s291
        %s293 = sand.u32 %s59, 1
        %s294 = smul.addr %s293, 128
        %s295 = scalar_lea.vmem [#allocation2], %s294
        %p296 = pneg %p72
        %p297 = pneg %p69
        %s298 = sand.u32 %s85, 1
        %s299 = scalar_lea.sflag [#allocation6], %s298
        %s300 = sand.u32 %s85, 1
        %s301 = smul.addr %s300, 128
        %s302 = scalar_lea.vmem [#allocation5], %s301
        %p303 = pneg %p98
        %p304 = pneg %p95
        %p305 = scmp.lt.s32.totalorder %s25, 1
        %s306 = scalar_select %p305, %s25, 1
        %s307 = smul.addr %s306, 16
        %s308 = smul.addr %s307, 8
        %s309 = scalar_lea.vmem %s3, %s308
        %p310 = pneg %p124
        %p311 = pneg %p121
        %p312 = scmp.lt.s32.totalorder %s25, 1
        %s313 = scalar_select %p312, %s25, 1
        %s314 = scalar_lea.vmem %s4, %s313
        %p315 = pneg %p150
        %p316 = pneg %p147
        %p317 = pneg %p176
        %p318 = pneg %p173
        %s319 = sand.u32 %s163, 1
        %s320 = scalar_lea.sflag [#allocation4], %s319
        %s321 = sand.u32 %s163, 1
        %s322 = smul.addr %s321, 128
        %s323 = scalar_lea.vmem [#allocation7], %s322
        %p324 = scmp.lt.s32.totalorder %s25, 1
        %s325 = scalar_select %p324, %s25, 1
        %s326 = smul.addr %s325, 16
        %s327 = smul.addr %s326, 8
        %s328 = scalar_lea.vmem %s0, %s327
        %p329 = scmp.lt.s32.totalorder %s25, 1
        %s330 = scalar_select %p329, %s25, 1
        %s331 = smul.addr %s330, 16
        %s332 = smul.addr %s331, 8
        %s333 = scalar_lea.vmem %s3, %s332
        %p334 = scmp.lt.s32.totalorder %s25, 1
        %s335 = scalar_select %p334, %s25, 1
        %s336 = scalar_lea.vmem %s4, %s335
        %v338 = vld [vmem:[%s333] sm:$0xff]
        %v339 = vld [vmem:[%s333 + $0x8] sm:$0xff]
        %v340 = vld [vmem:[%s333 + $0x10] sm:$0xff]
        %v341 = vld [vmem:[%s333 + $0x18] sm:$0xff]
        %v342 = vld [vmem:[%s333 + $0x20] sm:$0xff]
        %v343 = vld [vmem:[%s333 + $0x28] sm:$0xff]
        %v344 = vld [vmem:[%s333 + $0x30] sm:$0xff]
        %v345 = vld [vmem:[%s333 + $0x38] sm:$0xff]
        %v346 = vld [vmem:[%s333 + $0x40] sm:$0xff]
        %v347 = vld [vmem:[%s333 + $0x48] sm:$0xff]
        %v348 = vld [vmem:[%s333 + $0x50] sm:$0xff]
        %v349 = vld [vmem:[%s333 + $0x58] sm:$0xff]
        %v350 = vld [vmem:[%s333 + $0x60] sm:$0xff]
        %v351 = vld [vmem:[%s333 + $0x68] sm:$0xff]
        %v352 = vld [vmem:[%s333 + $0x70] sm:$0xff]
        %v353 = vld [vmem:[%s333 + $0x78] sm:$0xff]
        %v354 = vld [vmem:[%s336] sm:$0x1]
        %v355 = vsub.f32 %v354, 1.0
        %v356 = vmul.f32 %v355, 1000000.0
        %358 = vset.pattern.permute.xlu0 0
        %359 = vperm.xlu0 %358, %v338
        %v360 = vpop.permute.xlu0 %359
        %363 = vset.pattern.permute.xlu0 0
        %364 = vperm.xlu0 %363, %v339
        %v365 = vpop.permute.xlu0 %364
        %368 = vset.pattern.permute.xlu0 0
        %369 = vperm.xlu0 %368, %v340
        %v370 = vpop.permute.xlu0 %369
        %373 = vset.pattern.permute.xlu0 0
        %374 = vperm.xlu0 %373, %v341
        %v375 = vpop.permute.xlu0 %374
        %378 = vset.pattern.permute.xlu0 0
        %379 = vperm.xlu0 %378, %v342
        %v380 = vpop.permute.xlu0 %379
        %383 = vset.pattern.permute.xlu0 0
        %384 = vperm.xlu0 %383, %v343
        %v385 = vpop.permute.xlu0 %384
        %388 = vset.pattern.permute.xlu0 0
        %389 = vperm.xlu0 %388, %v344
        %v390 = vpop.permute.xlu0 %389
        %393 = vset.pattern.permute.xlu0 0
        %394 = vperm.xlu0 %393, %v345
        %v395 = vpop.permute.xlu0 %394
        %398 = vset.pattern.permute.xlu0 0
        %399 = vperm.xlu0 %398, %v346
        %v400 = vpop.permute.xlu0 %399
        %403 = vset.pattern.permute.xlu0 0
        %404 = vperm.xlu0 %403, %v347
        %v405 = vpop.permute.xlu0 %404
        %408 = vset.pattern.permute.xlu0 0
        %409 = vperm.xlu0 %408, %v348
        %v410 = vpop.permute.xlu0 %409
        %413 = vset.pattern.permute.xlu0 0
        %414 = vperm.xlu0 %413, %v349
        %v415 = vpop.permute.xlu0 %414
        %418 = vset.pattern.permute.xlu0 0
        %419 = vperm.xlu0 %418, %v350
        %v420 = vpop.permute.xlu0 %419
        %423 = vset.pattern.permute.xlu0 0
        %424 = vperm.xlu0 %423, %v351
        %v425 = vpop.permute.xlu0 %424
        %428 = vset.pattern.permute.xlu0 0
        %429 = vperm.xlu0 %428, %v352
        %v430 = vpop.permute.xlu0 %429
        %433 = vset.pattern.permute.xlu0 0
        %434 = vperm.xlu0 %433, %v353
        %v435 = vpop.permute.xlu0 %434
        %437 = vset.pattern.permute.xlu0 1
        %438 = vperm.xlu0 %437, %v338
        %v439 = vpop.permute.xlu0 %438
        %441 = vset.pattern.permute.xlu0 1
        %442 = vperm.xlu0 %441, %v339
        %v443 = vpop.permute.xlu0 %442
        %445 = vset.pattern.permute.xlu0 1
        %446 = vperm.xlu0 %445, %v340
        %v447 = vpop.permute.xlu0 %446
        %449 = vset.pattern.permute.xlu0 1
        %450 = vperm.xlu0 %449, %v341
        %v451 = vpop.permute.xlu0 %450
        %453 = vset.pattern.permute.xlu0 1
        %454 = vperm.xlu0 %453, %v342
        %v455 = vpop.permute.xlu0 %454
        %457 = vset.pattern.permute.xlu0 1
        %458 = vperm.xlu0 %457, %v343
        %v459 = vpop.permute.xlu0 %458
        %461 = vset.pattern.permute.xlu0 1
        %462 = vperm.xlu0 %461, %v344
        %v463 = vpop.permute.xlu0 %462
        %465 = vset.pattern.permute.xlu0 1
        %466 = vperm.xlu0 %465, %v345
        %v467 = vpop.permute.xlu0 %466
        %469 = vset.pattern.permute.xlu0 1
        %470 = vperm.xlu0 %469, %v346
        %v471 = vpop.permute.xlu0 %470
        %473 = vset.pattern.permute.xlu0 1
        %474 = vperm.xlu0 %473, %v347
        %v475 = vpop.permute.xlu0 %474
        %477 = vset.pattern.permute.xlu0 1
        %478 = vperm.xlu0 %477, %v348
        %v479 = vpop.permute.xlu0 %478
        %481 = vset.pattern.permute.xlu0 1
        %482 = vperm.xlu0 %481, %v349
        %v483 = vpop.permute.xlu0 %482
        %485 = vset.pattern.permute.xlu0 1
        %486 = vperm.xlu0 %485, %v350
        %v487 = vpop.permute.xlu0 %486
        %489 = vset.pattern.permute.xlu0 1
        %490 = vperm.xlu0 %489, %v351
        %v491 = vpop.permute.xlu0 %490
        %493 = vset.pattern.permute.xlu0 1
        %494 = vperm.xlu0 %493, %v352
        %v495 = vpop.permute.xlu0 %494
        %497 = vset.pattern.permute.xlu0 1
        %498 = vperm.xlu0 %497, %v353
        %v499 = vpop.permute.xlu0 %498
        %501 = vset.pattern.permute.xlu0 2
        %502 = vperm.xlu0 %501, %v338
        %v503 = vpop.permute.xlu0 %502
        %505 = vset.pattern.permute.xlu0 2
        %506 = vperm.xlu0 %505, %v339
        %v507 = vpop.permute.xlu0 %506
        %509 = vset.pattern.permute.xlu0 2
        %510 = vperm.xlu0 %509, %v340
        %v511 = vpop.permute.xlu0 %510
        %513 = vset.pattern.permute.xlu0 2
        %514 = vperm.xlu0 %513, %v341
        %v515 = vpop.permute.xlu0 %514
        %517 = vset.pattern.permute.xlu0 2
        %518 = vperm.xlu0 %517, %v342
        %v519 = vpop.permute.xlu0 %518
        %521 = vset.pattern.permute.xlu0 2
        %522 = vperm.xlu0 %521, %v343
        %v523 = vpop.permute.xlu0 %522
        %525 = vset.pattern.permute.xlu0 2
        %526 = vperm.xlu0 %525, %v344
        %v527 = vpop.permute.xlu0 %526
        %529 = vset.pattern.permute.xlu0 2
        %530 = vperm.xlu0 %529, %v345
        %v531 = vpop.permute.xlu0 %530
        %533 = vset.pattern.permute.xlu0 2
        %534 = vperm.xlu0 %533, %v346
        %v535 = vpop.permute.xlu0 %534
        %537 = vset.pattern.permute.xlu0 2
        %538 = vperm.xlu0 %537, %v347
        %v539 = vpop.permute.xlu0 %538
        %541 = vset.pattern.permute.xlu0 2
        %542 = vperm.xlu0 %541, %v348
        %v543 = vpop.permute.xlu0 %542
        %545 = vset.pattern.permute.xlu0 2
        %546 = vperm.xlu0 %545, %v349
        %v547 = vpop.permute.xlu0 %546
        %549 = vset.pattern.permute.xlu0 2
        %550 = vperm.xlu0 %549, %v350
        %v551 = vpop.permute.xlu0 %550
        %553 = vset.pattern.permute.xlu0 2
        %554 = vperm.xlu0 %553, %v351
        %v555 = vpop.permute.xlu0 %554
        %557 = vset.pattern.permute.xlu0 2
        %558 = vperm.xlu0 %557, %v352
        %v559 = vpop.permute.xlu0 %558
        %561 = vset.pattern.permute.xlu0 2
        %562 = vperm.xlu0 %561, %v353
        %v563 = vpop.permute.xlu0 %562
        %565 = vset.pattern.permute.xlu0 3
        %566 = vperm.xlu0 %565, %v338
        %v567 = vpop.permute.xlu0 %566
        %569 = vset.pattern.permute.xlu0 3
        %570 = vperm.xlu0 %569, %v339
        %v571 = vpop.permute.xlu0 %570
        %573 = vset.pattern.permute.xlu0 3
        %574 = vperm.xlu0 %573, %v340
        %v575 = vpop.permute.xlu0 %574
        %577 = vset.pattern.permute.xlu0 3
        %578 = vperm.xlu0 %577, %v341
        %v579 = vpop.permute.xlu0 %578
        %581 = vset.pattern.permute.xlu0 3
        %582 = vperm.xlu0 %581, %v342
        %v583 = vpop.permute.xlu0 %582
        %585 = vset.pattern.permute.xlu0 3
        %586 = vperm.xlu0 %585, %v343
        %v587 = vpop.permute.xlu0 %586
        %589 = vset.pattern.permute.xlu0 3
        %590 = vperm.xlu0 %589, %v344
        %v591 = vpop.permute.xlu0 %590
        %593 = vset.pattern.permute.xlu0 3
        %594 = vperm.xlu0 %593, %v345
        %v595 = vpop.permute.xlu0 %594
        %597 = vset.pattern.permute.xlu0 3
        %598 = vperm.xlu0 %597, %v346
        %v599 = vpop.permute.xlu0 %598
        %601 = vset.pattern.permute.xlu0 3
        %602 = vperm.xlu0 %601, %v347
        %v603 = vpop.permute.xlu0 %602
        %605 = vset.pattern.permute.xlu0 3
        %606 = vperm.xlu0 %605, %v348
        %v607 = vpop.permute.xlu0 %606
        %609 = vset.pattern.permute.xlu0 3
        %610 = vperm.xlu0 %609, %v349
        %v611 = vpop.permute.xlu0 %610
        %613 = vset.pattern.permute.xlu0 3
        %614 = vperm.xlu0 %613, %v350
        %v615 = vpop.permute.xlu0 %614
        %617 = vset.pattern.permute.xlu0 3
        %618 = vperm.xlu0 %617, %v351
        %v619 = vpop.permute.xlu0 %618
        %621 = vset.pattern.permute.xlu0 3
        %622 = vperm.xlu0 %621, %v352
        %v623 = vpop.permute.xlu0 %622
        %625 = vset.pattern.permute.xlu0 3
        %626 = vperm.xlu0 %625, %v353
        %v627 = vpop.permute.xlu0 %626
        %vm629 = vcmask 261120
        %v630 = vsel %vm629, %v360, %v439
        %v631 = vsel %vm629, %v365, %v443
        %v632 = vsel %vm629, %v370, %v447
        %v633 = vsel %vm629, %v375, %v451
        %v634 = vsel %vm629, %v380, %v455
        %v635 = vsel %vm629, %v385, %v459
        %v636 = vsel %vm629, %v390, %v463
        %v637 = vsel %vm629, %v395, %v467
        %v638 = vsel %vm629, %v400, %v471
        %v639 = vsel %vm629, %v405, %v475
        %v640 = vsel %vm629, %v410, %v479
        %v641 = vsel %vm629, %v415, %v483
        %v642 = vsel %vm629, %v420, %v487
        %v643 = vsel %vm629, %v425, %v491
        %v644 = vsel %vm629, %v430, %v495
        %v645 = vsel %vm629, %v435, %v499
        %vm646 = vcmask 523264
        %v647 = vsel %vm646, %v630, %v503
        %v648 = vsel %vm646, %v631, %v507
        %v649 = vsel %vm646, %v632, %v511
        %v650 = vsel %vm646, %v633, %v515
        %v651 = vsel %vm646, %v634, %v519
        %v652 = vsel %vm646, %v635, %v523
        %v653 = vsel %vm646, %v636, %v527
        %v654 = vsel %vm646, %v637, %v531
        %v655 = vsel %vm646, %v638, %v535
        %v656 = vsel %vm646, %v639, %v539
        %v657 = vsel %vm646, %v640, %v543
        %v658 = vsel %vm646, %v641, %v547
        %v659 = vsel %vm646, %v642, %v551
        %v660 = vsel %vm646, %v643, %v555
        %v661 = vsel %vm646, %v644, %v559
        %v662 = vsel %vm646, %v645, %v563
        %vm663 = vcmask 785408
        %v664 = vsel %vm663, %v647, %v567
        %v665 = vsel %vm663, %v648, %v571
        %v666 = vsel %vm663, %v649, %v575
        %v667 = vsel %vm663, %v650, %v579
        %v668 = vsel %vm663, %v651, %v583
        %v669 = vsel %vm663, %v652, %v587
        %v670 = vsel %vm663, %v653, %v591
        %v671 = vsel %vm663, %v654, %v595
        %v672 = vsel %vm663, %v655, %v599
        %v673 = vsel %vm663, %v656, %v603
        %v674 = vsel %vm663, %v657, %v607
        %v675 = vsel %vm663, %v658, %v611
        %v676 = vsel %vm663, %v659, %v615
        %v677 = vsel %vm663, %v660, %v619
        %v678 = vsel %vm663, %v661, %v623
        %v679 = vsel %vm663, %v662, %v627
        %v680 = vmul.f32 %v664, 0.17677669
        %v681 = vmul.f32 %v665, 0.17677669
        %v682 = vmul.f32 %v666, 0.17677669
        %v683 = vmul.f32 %v667, 0.17677669
        %v684 = vmul.f32 %v668, 0.17677669
        %v685 = vmul.f32 %v669, 0.17677669
        %v686 = vmul.f32 %v670, 0.17677669
        %v687 = vmul.f32 %v671, 0.17677669
        %v688 = vmul.f32 %v672, 0.17677669
        %v689 = vmul.f32 %v673, 0.17677669
        %v690 = vmul.f32 %v674, 0.17677669
        %v691 = vmul.f32 %v675, 0.17677669
        %v692 = vmul.f32 %v676, 0.17677669
        %v693 = vmul.f32 %v677, 0.17677669
        %v694 = vmul.f32 %v678, 0.17677669
        %v695 = vmul.f32 %v679, 0.17677669
        %v696 = vld [vmem:[%s328] sm:$0xff]
        %v697 = vld [vmem:[%s328 + $0x8] sm:$0xff]
        %v698 = vld [vmem:[%s328 + $0x10] sm:$0xff]
        %v699 = vld [vmem:[%s328 + $0x18] sm:$0xff]
        %v700 = vld [vmem:[%s328 + $0x20] sm:$0xff]
        %v701 = vld [vmem:[%s328 + $0x28] sm:$0xff]
        %v702 = vld [vmem:[%s328 + $0x30] sm:$0xff]
        %v703 = vld [vmem:[%s328 + $0x38] sm:$0xff]
        %v704 = vld [vmem:[%s328 + $0x40] sm:$0xff]
        %v705 = vld [vmem:[%s328 + $0x48] sm:$0xff]
        %v706 = vld [vmem:[%s328 + $0x50] sm:$0xff]
        %v707 = vld [vmem:[%s328 + $0x58] sm:$0xff]
        %v708 = vld [vmem:[%s328 + $0x60] sm:$0xff]
        %v709 = vld [vmem:[%s328 + $0x68] sm:$0xff]
        %v710 = vld [vmem:[%s328 + $0x70] sm:$0xff]
        %v711 = vld [vmem:[%s328 + $0x78] sm:$0xff]
        %v712 = vld [vmem:[%s270] sm:$0xff]
        %v713 = vld [vmem:[%s270 + $0x8] sm:$0xff]
        %v714 = vld [vmem:[%s270 + $0x10] sm:$0xff]
        %v715 = vld [vmem:[%s270 + $0x18] sm:$0xff]
        %v716 = vld [vmem:[%s270 + $0x20] sm:$0xff]
        %v717 = vld [vmem:[%s270 + $0x28] sm:$0xff]
        %v718 = vld [vmem:[%s270 + $0x30] sm:$0xff]
        %v719 = vld [vmem:[%s270 + $0x38] sm:$0xff]
        %v720 = vld [vmem:[%s270 + $0x40] sm:$0xff]
        %v721 = vld [vmem:[%s270 + $0x48] sm:$0xff]
        %v722 = vld [vmem:[%s270 + $0x50] sm:$0xff]
        %v723 = vld [vmem:[%s270 + $0x58] sm:$0xff]
        %v724 = vld [vmem:[%s270 + $0x60] sm:$0xff]
        %v725 = vld [vmem:[%s270 + $0x68] sm:$0xff]
        %v726 = vld [vmem:[%s270 + $0x70] sm:$0xff]
        %v727 = vld [vmem:[%s270 + $0x78] sm:$0xff]
        %v728 = vld [vmem:[%s279] sm:$0xff]
        %v729 = vld [vmem:[%s279 + $0x8] sm:$0xff]
        %v730 = vld [vmem:[%s279 + $0x10] sm:$0xff]
        %v731 = vld [vmem:[%s279 + $0x18] sm:$0xff]
        %v732 = vld [vmem:[%s279 + $0x20] sm:$0xff]
        %v733 = vld [vmem:[%s279 + $0x28] sm:$0xff]
        %v734 = vld [vmem:[%s279 + $0x30] sm:$0xff]
        %v735 = vld [vmem:[%s279 + $0x38] sm:$0xff]
        %v736 = vld [vmem:[%s279 + $0x40] sm:$0xff]
        %v737 = vld [vmem:[%s279 + $0x48] sm:$0xff]
        %v738 = vld [vmem:[%s279 + $0x50] sm:$0xff]
        %v739 = vld [vmem:[%s279 + $0x58] sm:$0xff]
        %v740 = vld [vmem:[%s279 + $0x60] sm:$0xff]
        %v741 = vld [vmem:[%s279 + $0x68] sm:$0xff]
        %v742 = vld [vmem:[%s279 + $0x70] sm:$0xff]
        %v743 = vld [vmem:[%s279 + $0x78] sm:$0xff]
        %760 = vrot.lane.b32.xlu0 %v696, 32
        %v761 = vpop.permute.xlu0 %760
        %762 = vrot.lane.b32.xlu0 %v697, 32
        %v763 = vpop.permute.xlu0 %762
        %764 = vrot.lane.b32.xlu0 %v698, 32
        %v765 = vpop.permute.xlu0 %764
        %766 = vrot.lane.b32.xlu0 %v699, 32
        %v767 = vpop.permute.xlu0 %766
        %768 = vrot.lane.b32.xlu0 %v700, 32
        %v769 = vpop.permute.xlu0 %768
        %770 = vrot.lane.b32.xlu0 %v701, 32
        %v771 = vpop.permute.xlu0 %770
        %772 = vrot.lane.b32.xlu0 %v702, 32
        %v773 = vpop.permute.xlu0 %772
        %774 = vrot.lane.b32.xlu0 %v703, 32
        %v775 = vpop.permute.xlu0 %774
        %776 = vrot.lane.b32.xlu0 %v704, 32
        %v777 = vpop.permute.xlu0 %776
        %778 = vrot.lane.b32.xlu0 %v705, 32
        %v779 = vpop.permute.xlu0 %778
        %780 = vrot.lane.b32.xlu0 %v706, 32
        %v781 = vpop.permute.xlu0 %780
        %782 = vrot.lane.b32.xlu0 %v707, 32
        %v783 = vpop.permute.xlu0 %782
        %784 = vrot.lane.b32.xlu0 %v708, 32
        %v785 = vpop.permute.xlu0 %784
        %786 = vrot.lane.b32.xlu0 %v709, 32
        %v787 = vpop.permute.xlu0 %786
        %788 = vrot.lane.b32.xlu0 %v710, 32
        %v789 = vpop.permute.xlu0 %788
        %790 = vrot.lane.b32.xlu0 %v711, 32
        %v791 = vpop.permute.xlu0 %790
        %808 = vrot.lane.b32.xlu0 %v696, 64
        %v809 = vpop.permute.xlu0 %808
        %810 = vrot.lane.b32.xlu0 %v697, 64
        %v811 = vpop.permute.xlu0 %810
        %812 = vrot.lane.b32.xlu0 %v698, 64
        %v813 = vpop.permute.xlu0 %812
        %814 = vrot.lane.b32.xlu0 %v699, 64
        %v815 = vpop.permute.xlu0 %814
        %816 = vrot.lane.b32.xlu0 %v700, 64
        %v817 = vpop.permute.xlu0 %816
        %818 = vrot.lane.b32.xlu0 %v701, 64
        %v819 = vpop.permute.xlu0 %818
        %820 = vrot.lane.b32.xlu0 %v702, 64
        %v821 = vpop.permute.xlu0 %820
        %822 = vrot.lane.b32.xlu0 %v703, 64
        %v823 = vpop.permute.xlu0 %822
        %824 = vrot.lane.b32.xlu0 %v704, 64
        %v825 = vpop.permute.xlu0 %824
        %826 = vrot.lane.b32.xlu0 %v705, 64
        %v827 = vpop.permute.xlu0 %826
        %828 = vrot.lane.b32.xlu0 %v706, 64
        %v829 = vpop.permute.xlu0 %828
        %830 = vrot.lane.b32.xlu0 %v707, 64
        %v831 = vpop.permute.xlu0 %830
        %832 = vrot.lane.b32.xlu0 %v708, 64
        %v833 = vpop.permute.xlu0 %832
        %834 = vrot.lane.b32.xlu0 %v709, 64
        %v835 = vpop.permute.xlu0 %834
        %836 = vrot.lane.b32.xlu0 %v710, 64
        %v837 = vpop.permute.xlu0 %836
        %838 = vrot.lane.b32.xlu0 %v711, 64
        %v839 = vpop.permute.xlu0 %838
        %856 = vrot.lane.b32.xlu0 %v696, 96
        %v857 = vpop.permute.xlu0 %856
        %858 = vrot.lane.b32.xlu0 %v697, 96
        %v859 = vpop.permute.xlu0 %858
        %860 = vrot.lane.b32.xlu0 %v698, 96
        %v861 = vpop.permute.xlu0 %860
        %862 = vrot.lane.b32.xlu0 %v699, 96
        %v863 = vpop.permute.xlu0 %862
        %864 = vrot.lane.b32.xlu0 %v700, 96
        %v865 = vpop.permute.xlu0 %864
        %866 = vrot.lane.b32.xlu0 %v701, 96
        %v867 = vpop.permute.xlu0 %866
        %868 = vrot.lane.b32.xlu0 %v702, 96
        %v869 = vpop.permute.xlu0 %868
        %870 = vrot.lane.b32.xlu0 %v703, 96
        %v871 = vpop.permute.xlu0 %870
        %872 = vrot.lane.b32.xlu0 %v704, 96
        %v873 = vpop.permute.xlu0 %872
        %874 = vrot.lane.b32.xlu0 %v705, 96
        %v875 = vpop.permute.xlu0 %874
        %876 = vrot.lane.b32.xlu0 %v706, 96
        %v877 = vpop.permute.xlu0 %876
        %878 = vrot.lane.b32.xlu0 %v707, 96
        %v879 = vpop.permute.xlu0 %878
        %880 = vrot.lane.b32.xlu0 %v708, 96
        %v881 = vpop.permute.xlu0 %880
        %882 = vrot.lane.b32.xlu0 %v709, 96
        %v883 = vpop.permute.xlu0 %882
        %884 = vrot.lane.b32.xlu0 %v710, 96
        %v885 = vpop.permute.xlu0 %884
        %886 = vrot.lane.b32.xlu0 %v711, 96
        %v887 = vpop.permute.xlu0 %886
        %v904 = vsel %vm629, %v696, %v761
        %v905 = vsel %vm629, %v697, %v763
        %v906 = vsel %vm629, %v698, %v765
        %v907 = vsel %vm629, %v699, %v767
        %v908 = vsel %vm629, %v700, %v769
        %v909 = vsel %vm629, %v701, %v771
        %v910 = vsel %vm629, %v702, %v773
        %v911 = vsel %vm629, %v703, %v775
        %v912 = vsel %vm629, %v704, %v777
        %v913 = vsel %vm629, %v705, %v779
        %v914 = vsel %vm629, %v706, %v781
        %v915 = vsel %vm629, %v707, %v783
        %v916 = vsel %vm629, %v708, %v785
        %v917 = vsel %vm629, %v709, %v787
        %v918 = vsel %vm629, %v710, %v789
        %v919 = vsel %vm629, %v711, %v791
        %v920 = vsel %vm646, %v904, %v809
        %v921 = vsel %vm646, %v905, %v811
        %v922 = vsel %vm646, %v906, %v813
        %v923 = vsel %vm646, %v907, %v815
        %v924 = vsel %vm646, %v908, %v817
        %v925 = vsel %vm646, %v909, %v819
        %v926 = vsel %vm646, %v910, %v821
        %v927 = vsel %vm646, %v911, %v823
        %v928 = vsel %vm646, %v912, %v825
        %v929 = vsel %vm646, %v913, %v827
        %v930 = vsel %vm646, %v914, %v829
        %v931 = vsel %vm646, %v915, %v831
        %v932 = vsel %vm646, %v916, %v833
        %v933 = vsel %vm646, %v917, %v835
        %v934 = vsel %vm646, %v918, %v837
        %v935 = vsel %vm646, %v919, %v839
        %v936 = vsel %vm663, %v920, %v857
        %v937 = vsel %vm663, %v921, %v859
        %v938 = vsel %vm663, %v922, %v861
        %v939 = vsel %vm663, %v923, %v863
        %v940 = vsel %vm663, %v924, %v865
        %v941 = vsel %vm663, %v925, %v867
        %v942 = vsel %vm663, %v926, %v869
        %v943 = vsel %vm663, %v927, %v871
        %v944 = vsel %vm663, %v928, %v873
        %v945 = vsel %vm663, %v929, %v875
        %v946 = vsel %vm663, %v930, %v877
        %v947 = vsel %vm663, %v931, %v879
        %v948 = vsel %vm663, %v932, %v881
        %v949 = vsel %vm663, %v933, %v883
        %v950 = vsel %vm663, %v934, %v885
        %v951 = vsel %vm663, %v935, %v887
        %v952 = vmul.f32 %v936, %v680
        %v953 = vmul.f32 %v937, %v681
        %v954 = vmul.f32 %v938, %v682
        %v955 = vmul.f32 %v939, %v683
        %v956 = vmul.f32 %v940, %v684
        %v957 = vmul.f32 %v941, %v685
        %v958 = vmul.f32 %v942, %v686
        %v959 = vmul.f32 %v943, %v687
        %v960 = vmul.f32 %v944, %v688
        %v961 = vmul.f32 %v945, %v689
        %v962 = vmul.f32 %v946, %v690
        %v963 = vmul.f32 %v947, %v691
        %v964 = vmul.f32 %v948, %v692
        %v965 = vmul.f32 %v949, %v693
        %v966 = vmul.f32 %v950, %v694
        %v967 = vmul.f32 %v951, %v695
        %v968 = vpack.c.bf16 %v953, %v952
        %v969 = vpack.c.bf16 %v955, %v954
        %v970 = vpack.c.bf16 %v957, %v956
        %v971 = vpack.c.bf16 %v959, %v958
        %v972 = vpack.c.bf16 %v961, %v960
        %v973 = vpack.c.bf16 %v963, %v962
        %v974 = vpack.c.bf16 %v965, %v964
        %v975 = vpack.c.bf16 %v967, %v966
        %992 = vrot.lane.b32.xlu0 %v712, 32
        %v993 = vpop.permute.xlu0 %992
        %994 = vrot.lane.b32.xlu0 %v713, 32
        %v995 = vpop.permute.xlu0 %994
        %996 = vrot.lane.b32.xlu0 %v714, 32
        %v997 = vpop.permute.xlu0 %996
        %998 = vrot.lane.b32.xlu0 %v715, 32
        %v999 = vpop.permute.xlu0 %998
        %1000 = vrot.lane.b32.xlu0 %v716, 32
        %v1001 = vpop.permute.xlu0 %1000
        %1002 = vrot.lane.b32.xlu0 %v717, 32
        %v1003 = vpop.permute.xlu0 %1002
        %1004 = vrot.lane.b32.xlu0 %v718, 32
        %v1005 = vpop.permute.xlu0 %1004
        %1006 = vrot.lane.b32.xlu0 %v719, 32
        %v1007 = vpop.permute.xlu0 %1006
        %1008 = vrot.lane.b32.xlu0 %v720, 32
        %v1009 = vpop.permute.xlu0 %1008
        %1010 = vrot.lane.b32.xlu0 %v721, 32
        %v1011 = vpop.permute.xlu0 %1010
        %1012 = vrot.lane.b32.xlu0 %v722, 32
        %v1013 = vpop.permute.xlu0 %1012
        %1014 = vrot.lane.b32.xlu0 %v723, 32
        %v1015 = vpop.permute.xlu0 %1014
        %1016 = vrot.lane.b32.xlu0 %v724, 32
        %v1017 = vpop.permute.xlu0 %1016
        %1018 = vrot.lane.b32.xlu0 %v725, 32
        %v1019 = vpop.permute.xlu0 %1018
        %1020 = vrot.lane.b32.xlu0 %v726, 32
        %v1021 = vpop.permute.xlu0 %1020
        %1022 = vrot.lane.b32.xlu0 %v727, 32
        %v1023 = vpop.permute.xlu0 %1022
        %1040 = vrot.lane.b32.xlu0 %v712, 64
        %v1041 = vpop.permute.xlu0 %1040
        %1042 = vrot.lane.b32.xlu0 %v713, 64
        %v1043 = vpop.permute.xlu0 %1042
        %1044 = vrot.lane.b32.xlu0 %v714, 64
        %v1045 = vpop.permute.xlu0 %1044
        %1046 = vrot.lane.b32.xlu0 %v715, 64
        %v1047 = vpop.permute.xlu0 %1046
        %1048 = vrot.lane.b32.xlu0 %v716, 64
        %v1049 = vpop.permute.xlu0 %1048
        %1050 = vrot.lane.b32.xlu0 %v717, 64
        %v1051 = vpop.permute.xlu0 %1050
        %1052 = vrot.lane.b32.xlu0 %v718, 64
        %v1053 = vpop.permute.xlu0 %1052
        %1054 = vrot.lane.b32.xlu0 %v719, 64
        %v1055 = vpop.permute.xlu0 %1054
        %1056 = vrot.lane.b32.xlu0 %v720, 64
        %v1057 = vpop.permute.xlu0 %1056
        %1058 = vrot.lane.b32.xlu0 %v721, 64
        %v1059 = vpop.permute.xlu0 %1058
        %1060 = vrot.lane.b32.xlu0 %v722, 64
        %v1061 = vpop.permute.xlu0 %1060
        %1062 = vrot.lane.b32.xlu0 %v723, 64
        %v1063 = vpop.permute.xlu0 %1062
        %1064 = vrot.lane.b32.xlu0 %v724, 64
        %v1065 = vpop.permute.xlu0 %1064
        %1066 = vrot.lane.b32.xlu0 %v725, 64
        %v1067 = vpop.permute.xlu0 %1066
        %1068 = vrot.lane.b32.xlu0 %v726, 64
        %v1069 = vpop.permute.xlu0 %1068
        %1070 = vrot.lane.b32.xlu0 %v727, 64
        %v1071 = vpop.permute.xlu0 %1070
        %1088 = vrot.lane.b32.xlu0 %v712, 96
        %v1089 = vpop.permute.xlu0 %1088
        %1090 = vrot.lane.b32.xlu0 %v713, 96
        %v1091 = vpop.permute.xlu0 %1090
        %1092 = vrot.lane.b32.xlu0 %v714, 96
        %v1093 = vpop.permute.xlu0 %1092
        %1094 = vrot.lane.b32.xlu0 %v715, 96
        %v1095 = vpop.permute.xlu0 %1094
        %1096 = vrot.lane.b32.xlu0 %v716, 96
        %v1097 = vpop.permute.xlu0 %1096
        %1098 = vrot.lane.b32.xlu0 %v717, 96
        %v1099 = vpop.permute.xlu0 %1098
        %1100 = vrot.lane.b32.xlu0 %v718, 96
        %v1101 = vpop.permute.xlu0 %1100
        %1102 = vrot.lane.b32.xlu0 %v719, 96
        %v1103 = vpop.permute.xlu0 %1102
        %1104 = vrot.lane.b32.xlu0 %v720, 96
        %v1105 = vpop.permute.xlu0 %1104
        %1106 = vrot.lane.b32.xlu0 %v721, 96
        %v1107 = vpop.permute.xlu0 %1106
        %1108 = vrot.lane.b32.xlu0 %v722, 96
        %v1109 = vpop.permute.xlu0 %1108
        %1110 = vrot.lane.b32.xlu0 %v723, 96
        %v1111 = vpop.permute.xlu0 %1110
        %1112 = vrot.lane.b32.xlu0 %v724, 96
        %v1113 = vpop.permute.xlu0 %1112
        %1114 = vrot.lane.b32.xlu0 %v725, 96
        %v1115 = vpop.permute.xlu0 %1114
        %1116 = vrot.lane.b32.xlu0 %v726, 96
        %v1117 = vpop.permute.xlu0 %1116
        %1118 = vrot.lane.b32.xlu0 %v727, 96
        %v1119 = vpop.permute.xlu0 %1118
        %v1136 = vsel %vm629, %v712, %v993
        %v1137 = vsel %vm629, %v713, %v995
        %v1138 = vsel %vm629, %v714, %v997
        %v1139 = vsel %vm629, %v715, %v999
        %v1140 = vsel %vm629, %v716, %v1001
        %v1141 = vsel %vm629, %v717, %v1003
        %v1142 = vsel %vm629, %v718, %v1005
        %v1143 = vsel %vm629, %v719, %v1007
        %v1144 = vsel %vm629, %v720, %v1009
        %v1145 = vsel %vm629, %v721, %v1011
        %v1146 = vsel %vm629, %v722, %v1013
        %v1147 = vsel %vm629, %v723, %v1015
        %v1148 = vsel %vm629, %v724, %v1017
        %v1149 = vsel %vm629, %v725, %v1019
        %v1150 = vsel %vm629, %v726, %v1021
        %v1151 = vsel %vm629, %v727, %v1023
        %v1152 = vsel %vm646, %v1136, %v1041
        %v1153 = vsel %vm646, %v1137, %v1043
        %v1154 = vsel %vm646, %v1138, %v1045
        %v1155 = vsel %vm646, %v1139, %v1047
        %v1156 = vsel %vm646, %v1140, %v1049
        %v1157 = vsel %vm646, %v1141, %v1051
        %v1158 = vsel %vm646, %v1142, %v1053
        %v1159 = vsel %vm646, %v1143, %v1055
        %v1160 = vsel %vm646, %v1144, %v1057
        %v1161 = vsel %vm646, %v1145, %v1059
        %v1162 = vsel %vm646, %v1146, %v1061
        %v1163 = vsel %vm646, %v1147, %v1063
        %v1164 = vsel %vm646, %v1148, %v1065
        %v1165 = vsel %vm646, %v1149, %v1067
        %v1166 = vsel %vm646, %v1150, %v1069
        %v1167 = vsel %vm646, %v1151, %v1071
        %v1168 = vsel %vm663, %v1152, %v1089
        %v1169 = vsel %vm663, %v1153, %v1091
        %v1170 = vsel %vm663, %v1154, %v1093
        %v1171 = vsel %vm663, %v1155, %v1095
        %v1172 = vsel %vm663, %v1156, %v1097
        %v1173 = vsel %vm663, %v1157, %v1099
        %v1174 = vsel %vm663, %v1158, %v1101
        %v1175 = vsel %vm663, %v1159, %v1103
        %v1176 = vsel %vm663, %v1160, %v1105
        %v1177 = vsel %vm663, %v1161, %v1107
        %v1178 = vsel %vm663, %v1162, %v1109
        %v1179 = vsel %vm663, %v1163, %v1111
        %v1180 = vsel %vm663, %v1164, %v1113
        %v1181 = vsel %vm663, %v1165, %v1115
        %v1182 = vsel %vm663, %v1166, %v1117
        %v1183 = vsel %vm663, %v1167, %v1119
        %v1184 = vmul.f32 %v1168, %v664
        %v1185 = vmul.f32 %v1169, %v665
        %v1186 = vmul.f32 %v1170, %v666
        %v1187 = vmul.f32 %v1171, %v667
        %v1188 = vmul.f32 %v1172, %v668
        %v1189 = vmul.f32 %v1173, %v669
        %v1190 = vmul.f32 %v1174, %v670
        %v1191 = vmul.f32 %v1175, %v671
        %v1192 = vmul.f32 %v1176, %v672
        %v1193 = vmul.f32 %v1177, %v673
        %v1194 = vmul.f32 %v1178, %v674
        %v1195 = vmul.f32 %v1179, %v675
        %v1196 = vmul.f32 %v1180, %v676
        %v1197 = vmul.f32 %v1181, %v677
        %v1198 = vmul.f32 %v1182, %v678
        %v1199 = vmul.f32 %v1183, %v679
        %v1200 = vpack.c.bf16 %v1185, %v1184
        %v1201 = vpack.c.bf16 %v1187, %v1186
        %v1202 = vpack.c.bf16 %v1189, %v1188
        %v1203 = vpack.c.bf16 %v1191, %v1190
        %v1204 = vpack.c.bf16 %v1193, %v1192
        %v1205 = vpack.c.bf16 %v1195, %v1194
        %v1206 = vpack.c.bf16 %v1197, %v1196
        %v1207 = vpack.c.bf16 %v1199, %v1198
        %1224 = vrot.lane.b32.xlu0 %v728, 32
        %v1225 = vpop.permute.xlu0 %1224
        %1226 = vrot.lane.b32.xlu0 %v729, 32
        %v1227 = vpop.permute.xlu0 %1226
        %1228 = vrot.lane.b32.xlu0 %v730, 32
        %v1229 = vpop.permute.xlu0 %1228
        %1230 = vrot.lane.b32.xlu0 %v731, 32
        %v1231 = vpop.permute.xlu0 %1230
        %1232 = vrot.lane.b32.xlu0 %v732, 32
        %v1233 = vpop.permute.xlu0 %1232
        %1234 = vrot.lane.b32.xlu0 %v733, 32
        %v1235 = vpop.permute.xlu0 %1234
        %1236 = vrot.lane.b32.xlu0 %v734, 32
        %v1237 = vpop.permute.xlu0 %1236
        %1238 = vrot.lane.b32.xlu0 %v735, 32
        %v1239 = vpop.permute.xlu0 %1238
        %1240 = vrot.lane.b32.xlu0 %v736, 32
        %v1241 = vpop.permute.xlu0 %1240
        %1242 = vrot.lane.b32.xlu0 %v737, 32
        %v1243 = vpop.permute.xlu0 %1242
        %1244 = vrot.lane.b32.xlu0 %v738, 32
        %v1245 = vpop.permute.xlu0 %1244
        %1246 = vrot.lane.b32.xlu0 %v739, 32
        %v1247 = vpop.permute.xlu0 %1246
        %1248 = vrot.lane.b32.xlu0 %v740, 32
        %v1249 = vpop.permute.xlu0 %1248
        %1250 = vrot.lane.b32.xlu0 %v741, 32
        %v1251 = vpop.permute.xlu0 %1250
        %1252 = vrot.lane.b32.xlu0 %v742, 32
        %v1253 = vpop.permute.xlu0 %1252
        %1254 = vrot.lane.b32.xlu0 %v743, 32
        %v1255 = vpop.permute.xlu0 %1254
        %1272 = vrot.lane.b32.xlu0 %v728, 64
        %v1273 = vpop.permute.xlu0 %1272
        %1274 = vrot.lane.b32.xlu0 %v729, 64
        %v1275 = vpop.permute.xlu0 %1274
        %1276 = vrot.lane.b32.xlu0 %v730, 64
        %v1277 = vpop.permute.xlu0 %1276
        %1278 = vrot.lane.b32.xlu0 %v731, 64
        %v1279 = vpop.permute.xlu0 %1278
        %1280 = vrot.lane.b32.xlu0 %v732, 64
        %v1281 = vpop.permute.xlu0 %1280
        %1282 = vrot.lane.b32.xlu0 %v733, 64
        %v1283 = vpop.permute.xlu0 %1282
        %1284 = vrot.lane.b32.xlu0 %v734, 64
        %v1285 = vpop.permute.xlu0 %1284
        %1286 = vrot.lane.b32.xlu0 %v735, 64
        %v1287 = vpop.permute.xlu0 %1286
        %1288 = vrot.lane.b32.xlu0 %v736, 64
        %v1289 = vpop.permute.xlu0 %1288
        %1290 = vrot.lane.b32.xlu0 %v737, 64
        %v1291 = vpop.permute.xlu0 %1290
        %1292 = vrot.lane.b32.xlu0 %v738, 64
        %v1293 = vpop.permute.xlu0 %1292
        %1294 = vrot.lane.b32.xlu0 %v739, 64
        %v1295 = vpop.permute.xlu0 %1294
        %1296 = vrot.lane.b32.xlu0 %v740, 64
        %v1297 = vpop.permute.xlu0 %1296
        %1298 = vrot.lane.b32.xlu0 %v741, 64
        %v1299 = vpop.permute.xlu0 %1298
        %1300 = vrot.lane.b32.xlu0 %v742, 64
        %v1301 = vpop.permute.xlu0 %1300
        %1302 = vrot.lane.b32.xlu0 %v743, 64
        %v1303 = vpop.permute.xlu0 %1302
        %1320 = vrot.lane.b32.xlu0 %v728, 96
        %v1321 = vpop.permute.xlu0 %1320
        %1322 = vrot.lane.b32.xlu0 %v729, 96
        %v1323 = vpop.permute.xlu0 %1322
        %1324 = vrot.lane.b32.xlu0 %v730, 96
        %v1325 = vpop.permute.xlu0 %1324
        %1326 = vrot.lane.b32.xlu0 %v731, 96
        %v1327 = vpop.permute.xlu0 %1326
        %1328 = vrot.lane.b32.xlu0 %v732, 96
        %v1329 = vpop.permute.xlu0 %1328
        %1330 = vrot.lane.b32.xlu0 %v733, 96
        %v1331 = vpop.permute.xlu0 %1330
        %1332 = vrot.lane.b32.xlu0 %v734, 96
        %v1333 = vpop.permute.xlu0 %1332
        %1334 = vrot.lane.b32.xlu0 %v735, 96
        %v1335 = vpop.permute.xlu0 %1334
        %1336 = vrot.lane.b32.xlu0 %v736, 96
        %v1337 = vpop.permute.xlu0 %1336
        %1338 = vrot.lane.b32.xlu0 %v737, 96
        %v1339 = vpop.permute.xlu0 %1338
        %1340 = vrot.lane.b32.xlu0 %v738, 96
        %v1341 = vpop.permute.xlu0 %1340
        %1342 = vrot.lane.b32.xlu0 %v739, 96
        %v1343 = vpop.permute.xlu0 %1342
        %1344 = vrot.lane.b32.xlu0 %v740, 96
        %v1345 = vpop.permute.xlu0 %1344
        %1346 = vrot.lane.b32.xlu0 %v741, 96
        %v1347 = vpop.permute.xlu0 %1346
        %1348 = vrot.lane.b32.xlu0 %v742, 96
        %v1349 = vpop.permute.xlu0 %1348
        %1350 = vrot.lane.b32.xlu0 %v743, 96
        %v1351 = vpop.permute.xlu0 %1350
        %v1368 = vsel %vm629, %v728, %v1225
        %v1369 = vsel %vm629, %v729, %v1227
        %v1370 = vsel %vm629, %v730, %v1229
        %v1371 = vsel %vm629, %v731, %v1231
        %v1372 = vsel %vm629, %v732, %v1233
        %v1373 = vsel %vm629, %v733, %v1235
        %v1374 = vsel %vm629, %v734, %v1237
        %v1375 = vsel %vm629, %v735, %v1239
        %v1376 = vsel %vm629, %v736, %v1241
        %v1377 = vsel %vm629, %v737, %v1243
        %v1378 = vsel %vm629, %v738, %v1245
        %v1379 = vsel %vm629, %v739, %v1247
        %v1380 = vsel %vm629, %v740, %v1249
        %v1381 = vsel %vm629, %v741, %v1251
        %v1382 = vsel %vm629, %v742, %v1253
        %v1383 = vsel %vm629, %v743, %v1255
        %v1384 = vsel %vm646, %v1368, %v1273
        %v1385 = vsel %vm646, %v1369, %v1275
        %v1386 = vsel %vm646, %v1370, %v1277
        %v1387 = vsel %vm646, %v1371, %v1279
        %v1388 = vsel %vm646, %v1372, %v1281
        %v1389 = vsel %vm646, %v1373, %v1283
        %v1390 = vsel %vm646, %v1374, %v1285
        %v1391 = vsel %vm646, %v1375, %v1287
        %v1392 = vsel %vm646, %v1376, %v1289
        %v1393 = vsel %vm646, %v1377, %v1291
        %v1394 = vsel %vm646, %v1378, %v1293
        %v1395 = vsel %vm646, %v1379, %v1295
        %v1396 = vsel %vm646, %v1380, %v1297
        %v1397 = vsel %vm646, %v1381, %v1299
        %v1398 = vsel %vm646, %v1382, %v1301
        %v1399 = vsel %vm646, %v1383, %v1303
        %v1400 = vsel %vm663, %v1384, %v1321
        %v1401 = vsel %vm663, %v1385, %v1323
        %v1402 = vsel %vm663, %v1386, %v1325
        %v1403 = vsel %vm663, %v1387, %v1327
        %v1404 = vsel %vm663, %v1388, %v1329
        %v1405 = vsel %vm663, %v1389, %v1331
        %v1406 = vsel %vm663, %v1390, %v1333
        %v1407 = vsel %vm663, %v1391, %v1335
        %v1408 = vsel %vm663, %v1392, %v1337
        %v1409 = vsel %vm663, %v1393, %v1339
        %v1410 = vsel %vm663, %v1394, %v1341
        %v1411 = vsel %vm663, %v1395, %v1343
        %v1412 = vsel %vm663, %v1396, %v1345
        %v1413 = vsel %vm663, %v1397, %v1347
        %v1414 = vsel %vm663, %v1398, %v1349
        %v1415 = vsel %vm663, %v1399, %v1351
        %v1416 = vmul.f32 %v1400, %v664
        %v1417 = vmul.f32 %v1401, %v665
        %v1418 = vmul.f32 %v1402, %v666
        %v1419 = vmul.f32 %v1403, %v667
        %v1420 = vmul.f32 %v1404, %v668
        %v1421 = vmul.f32 %v1405, %v669
        %v1422 = vmul.f32 %v1406, %v670
        %v1423 = vmul.f32 %v1407, %v671
        %v1424 = vmul.f32 %v1408, %v672
        %v1425 = vmul.f32 %v1409, %v673
        %v1426 = vmul.f32 %v1410, %v674
        %v1427 = vmul.f32 %v1411, %v675
        %v1428 = vmul.f32 %v1412, %v676
        %v1429 = vmul.f32 %v1413, %v677
        %v1430 = vmul.f32 %v1414, %v678
        %v1431 = vmul.f32 %v1415, %v679
        %v1432 = vpack.c.bf16 %v1417, %v1416
        %v1433 = vpack.c.bf16 %v1419, %v1418
        %v1434 = vpack.c.bf16 %v1421, %v1420
        %v1435 = vpack.c.bf16 %v1423, %v1422
        %v1436 = vpack.c.bf16 %v1425, %v1424
        %v1437 = vpack.c.bf16 %v1427, %v1426
        %v1438 = vpack.c.bf16 %v1429, %v1428
        %v1439 = vpack.c.bf16 %v1431, %v1430
        %v1441 = vlaneseq
        %v1442 = vshrl.u32 %v1441, 7
        %v1443 = vsub.s32 0, %v1442
        %v1444 = vrot.slane %v356, %v1443
        %1446 = vmatprep.subr.bf16.mxu0 0
        %1447 = vmatpush1.bf16.xpose.msra.mxu0 %v1207
        %1448 = vmatprep.subr.bf16.mxu0 0
        %1449 = vmatpush1.bf16.xpose.msra.mxu0 %v1206
        %1450 = vmatprep.subr.bf16.mxu0 0
        %1451 = vmatpush1.bf16.xpose.msra.mxu0 %v1205
        %1452 = vmatprep.subr.bf16.mxu0 0
        %1453 = vmatpush1.bf16.xpose.msra.mxu0 %v1204
        %1454 = vmatprep.subr.bf16.mxu0 0
        %1455 = vmatpush1.bf16.xpose.msra.mxu0 %v1203
        %1456 = vmatprep.subr.bf16.mxu0 0
        %1457 = vmatpush1.bf16.xpose.msra.mxu0 %v1202
        %1458 = vmatprep.subr.bf16.mxu0 0
        %1459 = vmatpush1.bf16.xpose.msra.mxu0 %v1201
        %1460 = vmatprep.subr.bf16.mxu0 0
        %1461 = vmatpush1.bf16.xpose.msra.mxu0 %v1200
        %1462 = vmatprep.subr.bf16.mxu0 0
        %1463 = vmatpush2.bf16.xpose.msra.mxu0 0
        %1464 = vmatprep.subr.bf16.mxu0 0
        %1465 = vmatpush2.bf16.xpose.msra.mxu0 0
        %1466 = vmatprep.subr.bf16.mxu0 0
        %1467 = vmatpush2.bf16.xpose.msra.mxu0 0
        %1468 = vmatprep.subr.bf16.mxu0 0
        %1469 = vmatpush2.bf16.xpose.msra.mxu0 0
        %1470 = vmatprep.subr.bf16.mxu0 0
        %1471 = vmatpush2.bf16.xpose.msra.mxu0 0
        %1472 = vmatprep.subr.bf16.mxu0 0
        %1473 = vmatpush2.bf16.xpose.msra.mxu0 0
        %1474 = vmatprep.subr.bf16.mxu0 0
        %1475 = vmatpush2.bf16.xpose.msra.mxu0 0
        %1476 = vmatprep.subr.bf16.mxu0 0
        %1477 = vmatpush2.bf16.xpose.msra.mxu0 0
        %1478 = vmatprep.mubr.bf16.mxu0 0
        %1479 = vmatmul.mubr.bf16.gmra.mxu0 %v968
        %v1480 = vpop.f32.mrf.mxu0
        %v1481 = vadd.f32 %v1444, %v1480
        %v1482 = vpop.f32.mrf.mxu0
        %v1483 = vpop.f32.mrf.mxu0
        %v1484 = vadd.f32 %v1444, %v1483
        %v1485 = vpop.f32.mrf.mxu0
        %1486 = vmatprep.mubr.bf16.mxu0 0
        %1487 = vmatmul.mubr.bf16.gmra.mxu0 %v969
        %v1488 = vpop.f32.mrf.mxu0
        %v1489 = vadd.f32 %v1444, %v1488
        %v1490 = vpop.f32.mrf.mxu0
        %v1491 = vpop.f32.mrf.mxu0
        %v1492 = vadd.f32 %v1444, %v1491
        %v1493 = vpop.f32.mrf.mxu0
        %1494 = vmatprep.mubr.bf16.mxu0 0
        %1495 = vmatmul.mubr.bf16.gmra.mxu0 %v970
        %v1496 = vpop.f32.mrf.mxu0
        %v1497 = vadd.f32 %v1444, %v1496
        %v1498 = vpop.f32.mrf.mxu0
        %v1499 = vpop.f32.mrf.mxu0
        %v1500 = vadd.f32 %v1444, %v1499
        %v1501 = vpop.f32.mrf.mxu0
        %1502 = vmatprep.mubr.bf16.mxu0 0
        %1503 = vmatmul.mubr.bf16.gmra.mxu0 %v971
        %v1504 = vpop.f32.mrf.mxu0
        %v1505 = vadd.f32 %v1444, %v1504
        %v1506 = vpop.f32.mrf.mxu0
        %v1507 = vpop.f32.mrf.mxu0
        %v1508 = vadd.f32 %v1444, %v1507
        %v1509 = vpop.f32.mrf.mxu0
        %1510 = vmatprep.mubr.bf16.mxu0 0
        %1511 = vmatmul.mubr.bf16.gmra.mxu0 %v972
        %v1512 = vpop.f32.mrf.mxu0
        %v1513 = vadd.f32 %v1444, %v1512
        %v1514 = vpop.f32.mrf.mxu0
        %v1515 = vpop.f32.mrf.mxu0
        %v1516 = vadd.f32 %v1444, %v1515
        %v1517 = vpop.f32.mrf.mxu0
        %1518 = vmatprep.mubr.bf16.mxu0 0
        %1519 = vmatmul.mubr.bf16.gmra.mxu0 %v973
        %v1520 = vpop.f32.mrf.mxu0
        %v1521 = vadd.f32 %v1444, %v1520
        %v1522 = vpop.f32.mrf.mxu0
        %v1523 = vpop.f32.mrf.mxu0
        %v1524 = vadd.f32 %v1444, %v1523
        %v1525 = vpop.f32.mrf.mxu0
        %1526 = vmatprep.mubr.bf16.mxu0 0
        %1527 = vmatmul.mubr.bf16.gmra.mxu0 %v974
        %v1528 = vpop.f32.mrf.mxu0
        %v1529 = vadd.f32 %v1444, %v1528
        %v1530 = vpop.f32.mrf.mxu0
        %v1531 = vpop.f32.mrf.mxu0
        %v1532 = vadd.f32 %v1444, %v1531
        %v1533 = vpop.f32.mrf.mxu0
        %1534 = vmatprep.mubr.bf16.mxu0 0
        %1535 = vmatmul.mubr.bf16.gmra.mxu0 %v975
        %v1536 = vpop.f32.mrf.mxu0
        %v1537 = vadd.f32 %v1444, %v1536
        %v1538 = vpop.f32.mrf.mxu0
        %v1539 = vpop.f32.mrf.mxu0
        %v1540 = vadd.f32 %v1444, %v1539
        %v1541 = vpop.f32.mrf.mxu0
        %1542 = vdwg.mxu0
        %1543 = vmax.xlane.f32.xlu0 %v1481
        %v1544 = vpop.xlane.xlu0 %1543
        %1545 = vmax.xlane.f32.xlu0 %v1484
        %v1546 = vpop.xlane.xlu0 %1545
        %1547 = vmax.xlane.f32.xlu0 %v1489
        %v1548 = vpop.xlane.xlu0 %1547
        %1549 = vmax.xlane.f32.xlu0 %v1492
        %v1550 = vpop.xlane.xlu0 %1549
        %1551 = vmax.xlane.f32.xlu0 %v1497
        %v1552 = vpop.xlane.xlu0 %1551
        %1553 = vmax.xlane.f32.xlu0 %v1500
        %v1554 = vpop.xlane.xlu0 %1553
        %1555 = vmax.xlane.f32.xlu0 %v1505
        %v1556 = vpop.xlane.xlu0 %1555
        %1557 = vmax.xlane.f32.xlu0 %v1508
        %v1558 = vpop.xlane.xlu0 %1557
        %1559 = vmax.xlane.f32.xlu0 %v1513
        %v1560 = vpop.xlane.xlu0 %1559
        %1561 = vmax.xlane.f32.xlu0 %v1516
        %v1562 = vpop.xlane.xlu0 %1561
        %1563 = vmax.xlane.f32.xlu0 %v1521
        %v1564 = vpop.xlane.xlu0 %1563
        %1565 = vmax.xlane.f32.xlu0 %v1524
        %v1566 = vpop.xlane.xlu0 %1565
        %1567 = vmax.xlane.f32.xlu0 %v1529
        %v1568 = vpop.xlane.xlu0 %1567
        %1569 = vmax.xlane.f32.xlu0 %v1532
        %v1570 = vpop.xlane.xlu0 %1569
        %1571 = vmax.xlane.f32.xlu0 %v1537
        %v1572 = vpop.xlane.xlu0 %1571
        %1573 = vmax.xlane.f32.xlu0 %v1540
        %v1574 = vpop.xlane.xlu0 %1573
        %v1575 = vsub.f32 %v1481, %v1544
        %v1576 = vsub.f32 %v1484, %v1546
        %v1577 = vsub.f32 %v1489, %v1548
        %v1578 = vsub.f32 %v1492, %v1550
        %v1579 = vsub.f32 %v1497, %v1552
        %v1580 = vsub.f32 %v1500, %v1554
        %v1581 = vsub.f32 %v1505, %v1556
        %v1582 = vsub.f32 %v1508, %v1558
        %v1583 = vsub.f32 %v1513, %v1560
        %v1584 = vsub.f32 %v1516, %v1562
        %v1585 = vsub.f32 %v1521, %v1564
        %v1586 = vsub.f32 %v1524, %v1566
        %v1587 = vsub.f32 %v1529, %v1568
        %v1588 = vsub.f32 %v1532, %v1570
        %v1589 = vsub.f32 %v1537, %v1572
        %v1590 = vsub.f32 %v1540, %v1574
        %v1591 = vmul.f32 %v1575, 1.442695
        %v1592 = vpow.pop %v1591
        %v1593 = vmul.f32 %v1576, 1.442695
        %v1594 = vpow.pop %v1593
        %v1595 = vmul.f32 %v1577, 1.442695
        %v1596 = vpow.pop %v1595
        %v1597 = vmul.f32 %v1578, 1.442695
        %v1598 = vpow.pop %v1597
        %v1599 = vmul.f32 %v1579, 1.442695
        %v1600 = vpow.pop %v1599
        %v1601 = vmul.f32 %v1580, 1.442695
        %v1602 = vpow.pop %v1601
        %v1603 = vmul.f32 %v1581, 1.442695
        %v1604 = vpow.pop %v1603
        %v1605 = vmul.f32 %v1582, 1.442695
        %v1606 = vpow.pop %v1605
        %v1607 = vmul.f32 %v1583, 1.442695
        %v1608 = vpow.pop %v1607
        %v1609 = vmul.f32 %v1584, 1.442695
        %v1610 = vpow.pop %v1609
        %v1611 = vmul.f32 %v1585, 1.442695
        %v1612 = vpow.pop %v1611
        %v1613 = vmul.f32 %v1586, 1.442695
        %v1614 = vpow.pop %v1613
        %v1615 = vmul.f32 %v1587, 1.442695
        %v1616 = vpow.pop %v1615
        %v1617 = vmul.f32 %v1588, 1.442695
        %v1618 = vpow.pop %v1617
        %v1619 = vmul.f32 %v1589, 1.442695
        %v1620 = vpow.pop %v1619
        %v1621 = vmul.f32 %v1590, 1.442695
        %v1622 = vpow.pop %v1621
        %1623 = vadd.xlane.f32.xlu0 %v1592
        %v1624 = vpop.xlane.xlu0 %1623
        %1625 = vadd.xlane.f32.xlu0 %v1594
        %v1626 = vpop.xlane.xlu0 %1625
        %1627 = vadd.xlane.f32.xlu0 %v1596
        %v1628 = vpop.xlane.xlu0 %1627
        %1629 = vadd.xlane.f32.xlu0 %v1598
        %v1630 = vpop.xlane.xlu0 %1629
        %1631 = vadd.xlane.f32.xlu0 %v1600
        %v1632 = vpop.xlane.xlu0 %1631
        %1633 = vadd.xlane.f32.xlu0 %v1602
        %v1634 = vpop.xlane.xlu0 %1633
        %1635 = vadd.xlane.f32.xlu0 %v1604
        %v1636 = vpop.xlane.xlu0 %1635
        %1637 = vadd.xlane.f32.xlu0 %v1606
        %v1638 = vpop.xlane.xlu0 %1637
        %1639 = vadd.xlane.f32.xlu0 %v1608
        %v1640 = vpop.xlane.xlu0 %1639
        %1641 = vadd.xlane.f32.xlu0 %v1610
        %v1642 = vpop.xlane.xlu0 %1641
        %1643 = vadd.xlane.f32.xlu0 %v1612
        %v1644 = vpop.xlane.xlu0 %1643
        %1645 = vadd.xlane.f32.xlu0 %v1614
        %v1646 = vpop.xlane.xlu0 %1645
        %1647 = vadd.xlane.f32.xlu0 %v1616
        %v1648 = vpop.xlane.xlu0 %1647
        %1649 = vadd.xlane.f32.xlu0 %v1618
        %v1650 = vpop.xlane.xlu0 %1649
        %1651 = vadd.xlane.f32.xlu0 %v1620
        %v1652 = vpop.xlane.xlu0 %1651
        %1653 = vadd.xlane.f32.xlu0 %v1622
        %v1654 = vpop.xlane.xlu0 %1653
        %v1655 = vrcp.pop %v1624
        %v1656 = vrcp.pop %v1626
        %v1657 = vrcp.pop %v1628
        %v1658 = vrcp.pop %v1630
        %v1659 = vrcp.pop %v1632
        %v1660 = vrcp.pop %v1634
        %v1661 = vrcp.pop %v1636
        %v1662 = vrcp.pop %v1638
        %v1663 = vrcp.pop %v1640
        %v1664 = vrcp.pop %v1642
        %v1665 = vrcp.pop %v1644
        %v1666 = vrcp.pop %v1646
        %v1667 = vrcp.pop %v1648
        %v1668 = vrcp.pop %v1650
        %v1669 = vrcp.pop %v1652
        %v1670 = vrcp.pop %v1654
        %v1671 = vpack.c.bf16 %v1594, %v1592
        %v1672 = vpack.c.bf16 %v1598, %v1596
        %v1673 = vpack.c.bf16 %v1602, %v1600
        %v1674 = vpack.c.bf16 %v1606, %v1604
        %v1675 = vpack.c.bf16 %v1610, %v1608
        %v1676 = vpack.c.bf16 %v1614, %v1612
        %v1677 = vpack.c.bf16 %v1618, %v1616
        %v1678 = vpack.c.bf16 %v1622, %v1620
        %1679 = vmatprep.subr.bf16.mxu0 0
        %1680 = vmatpush1.bf16.msra.mxu0 %v1439
        %1681 = vmatprep.subr.bf16.mxu0 0
        %1682 = vmatpush1.bf16.msra.mxu0 %v1438
        %1683 = vmatprep.subr.bf16.mxu0 0
        %1684 = vmatpush1.bf16.msra.mxu0 %v1437
        %1685 = vmatprep.subr.bf16.mxu0 0
        %1686 = vmatpush1.bf16.msra.mxu0 %v1436
        %1687 = vmatprep.subr.bf16.mxu0 0
        %1688 = vmatpush1.bf16.msra.mxu0 %v1435
        %1689 = vmatprep.subr.bf16.mxu0 0
        %1690 = vmatpush1.bf16.msra.mxu0 %v1434
        %1691 = vmatprep.subr.bf16.mxu0 0
        %1692 = vmatpush1.bf16.msra.mxu0 %v1433
        %1693 = vmatprep.subr.bf16.mxu0 0
        %1694 = vmatpush1.bf16.msra.mxu0 %v1432
        %1695 = vmatprep.subr.bf16.mxu0 0
        %1696 = vmatpush2.bf16.msra.mxu0 0
        %1697 = vmatprep.subr.bf16.mxu0 0
        %1698 = vmatpush2.bf16.msra.mxu0 0
        %1699 = vmatprep.subr.bf16.mxu0 0
        %1700 = vmatpush2.bf16.msra.mxu0 0
        %1701 = vmatprep.subr.bf16.mxu0 0
        %1702 = vmatpush2.bf16.msra.mxu0 0
        %1703 = vmatprep.subr.bf16.mxu0 0
        %1704 = vmatpush2.bf16.msra.mxu0 0
        %1705 = vmatprep.subr.bf16.mxu0 0
        %1706 = vmatpush2.bf16.msra.mxu0 0
        %1707 = vmatprep.subr.bf16.mxu0 0
        %1708 = vmatpush2.bf16.msra.mxu0 0
        %1709 = vmatprep.subr.bf16.mxu0 0
        %1710 = vmatpush2.bf16.msra.mxu0 0
        %1711 = vmatprep.mubr.bf16.mxu0 0
        %1712 = vmatmul.mubr.bf16.gmra.mxu0 %v1671
        %v1713 = vpop.f32.mrf.mxu0
        %v1714 = vadd.f32 0.0, %v1713
        %v1715 = vpop.f32.mrf.mxu0
        %v1716 = vpop.f32.mrf.mxu0
        %v1717 = vadd.f32 0.0, %v1716
        %v1718 = vpop.f32.mrf.mxu0
        %1719 = vmatprep.mubr.bf16.mxu0 0
        %1720 = vmatmul.mubr.bf16.gmra.mxu0 %v1672
        %v1721 = vpop.f32.mrf.mxu0
        %v1722 = vadd.f32 0.0, %v1721
        %v1723 = vpop.f32.mrf.mxu0
        %v1724 = vpop.f32.mrf.mxu0
        %v1725 = vadd.f32 0.0, %v1724
        %v1726 = vpop.f32.mrf.mxu0
        %1727 = vmatprep.mubr.bf16.mxu0 0
        %1728 = vmatmul.mubr.bf16.gmra.mxu0 %v1673
        %v1729 = vpop.f32.mrf.mxu0
        %v1730 = vadd.f32 0.0, %v1729
        %v1731 = vpop.f32.mrf.mxu0
        %v1732 = vpop.f32.mrf.mxu0
        %v1733 = vadd.f32 0.0, %v1732
        %v1734 = vpop.f32.mrf.mxu0
        %1735 = vmatprep.mubr.bf16.mxu0 0
        %1736 = vmatmul.mubr.bf16.gmra.mxu0 %v1674
        %v1737 = vpop.f32.mrf.mxu0
        %v1738 = vadd.f32 0.0, %v1737
        %v1739 = vpop.f32.mrf.mxu0
        %v1740 = vpop.f32.mrf.mxu0
        %v1741 = vadd.f32 0.0, %v1740
        %v1742 = vpop.f32.mrf.mxu0
        %1743 = vmatprep.mubr.bf16.mxu0 0
        %1744 = vmatmul.mubr.bf16.gmra.mxu0 %v1675
        %v1745 = vpop.f32.mrf.mxu0
        %v1746 = vadd.f32 0.0, %v1745
        %v1747 = vpop.f32.mrf.mxu0
        %v1748 = vpop.f32.mrf.mxu0
        %v1749 = vadd.f32 0.0, %v1748
        %v1750 = vpop.f32.mrf.mxu0
        %1751 = vmatprep.mubr.bf16.mxu0 0
        %1752 = vmatmul.mubr.bf16.gmra.mxu0 %v1676
        %v1753 = vpop.f32.mrf.mxu0
        %v1754 = vadd.f32 0.0, %v1753
        %v1755 = vpop.f32.mrf.mxu0
        %v1756 = vpop.f32.mrf.mxu0
        %v1757 = vadd.f32 0.0, %v1756
        %v1758 = vpop.f32.mrf.mxu0
        %1759 = vmatprep.mubr.bf16.mxu0 0
        %1760 = vmatmul.mubr.bf16.gmra.mxu0 %v1677
        %v1761 = vpop.f32.mrf.mxu0
        %v1762 = vadd.f32 0.0, %v1761
        %v1763 = vpop.f32.mrf.mxu0
        %v1764 = vpop.f32.mrf.mxu0
        %v1765 = vadd.f32 0.0, %v1764
        %v1766 = vpop.f32.mrf.mxu0
        %1767 = vmatprep.mubr.bf16.mxu0 0
        %1768 = vmatmul.mubr.bf16.gmra.mxu0 %v1678
        %v1769 = vpop.f32.mrf.mxu0
        %v1770 = vadd.f32 0.0, %v1769
        %v1771 = vpop.f32.mrf.mxu0
        %v1772 = vpop.f32.mrf.mxu0
        %v1773 = vadd.f32 0.0, %v1772
        %v1774 = vpop.f32.mrf.mxu0
        %1775 = vdwg.mxu0
        %v1776 = vmul.f32 %v1714, %v664
        %v1777 = vmul.f32 %v1717, %v665
        %v1778 = vmul.f32 %v1722, %v666
        %v1779 = vmul.f32 %v1725, %v667
        %v1780 = vmul.f32 %v1730, %v668
        %v1781 = vmul.f32 %v1733, %v669
        %v1782 = vmul.f32 %v1738, %v670
        %v1783 = vmul.f32 %v1741, %v671
        %v1784 = vmul.f32 %v1746, %v672
        %v1785 = vmul.f32 %v1749, %v673
        %v1786 = vmul.f32 %v1754, %v674
        %v1787 = vmul.f32 %v1757, %v675
        %v1788 = vmul.f32 %v1762, %v676
        %v1789 = vmul.f32 %v1765, %v677
        %v1790 = vmul.f32 %v1770, %v678
        %v1791 = vmul.f32 %v1773, %v679
        %1808 = vrot.lane.b32.xlu0 %v1776, 96
        %v1809 = vpop.permute.xlu0 %1808
        %1810 = vrot.lane.b32.xlu0 %v1777, 96
        %v1811 = vpop.permute.xlu0 %1810
        %1812 = vrot.lane.b32.xlu0 %v1778, 96
        %v1813 = vpop.permute.xlu0 %1812
        %1814 = vrot.lane.b32.xlu0 %v1779, 96
        %v1815 = vpop.permute.xlu0 %1814
        %1816 = vrot.lane.b32.xlu0 %v1780, 96
        %v1817 = vpop.permute.xlu0 %1816
        %1818 = vrot.lane.b32.xlu0 %v1781, 96
        %v1819 = vpop.permute.xlu0 %1818
        %1820 = vrot.lane.b32.xlu0 %v1782, 96
        %v1821 = vpop.permute.xlu0 %1820
        %1822 = vrot.lane.b32.xlu0 %v1783, 96
        %v1823 = vpop.permute.xlu0 %1822
        %1824 = vrot.lane.b32.xlu0 %v1784, 96
        %v1825 = vpop.permute.xlu0 %1824
        %1826 = vrot.lane.b32.xlu0 %v1785, 96
        %v1827 = vpop.permute.xlu0 %1826
        %1828 = vrot.lane.b32.xlu0 %v1786, 96
        %v1829 = vpop.permute.xlu0 %1828
        %1830 = vrot.lane.b32.xlu0 %v1787, 96
        %v1831 = vpop.permute.xlu0 %1830
        %1832 = vrot.lane.b32.xlu0 %v1788, 96
        %v1833 = vpop.permute.xlu0 %1832
        %1834 = vrot.lane.b32.xlu0 %v1789, 96
        %v1835 = vpop.permute.xlu0 %1834
        %1836 = vrot.lane.b32.xlu0 %v1790, 96
        %v1837 = vpop.permute.xlu0 %1836
        %1838 = vrot.lane.b32.xlu0 %v1791, 96
        %v1839 = vpop.permute.xlu0 %1838
        %v1856 = vadd.f32 %v1776, %v1809
        %v1857 = vadd.f32 %v1777, %v1811
        %v1858 = vadd.f32 %v1778, %v1813
        %v1859 = vadd.f32 %v1779, %v1815
        %v1860 = vadd.f32 %v1780, %v1817
        %v1861 = vadd.f32 %v1781, %v1819
        %v1862 = vadd.f32 %v1782, %v1821
        %v1863 = vadd.f32 %v1783, %v1823
        %v1864 = vadd.f32 %v1784, %v1825
        %v1865 = vadd.f32 %v1785, %v1827
        %v1866 = vadd.f32 %v1786, %v1829
        %v1867 = vadd.f32 %v1787, %v1831
        %v1868 = vadd.f32 %v1788, %v1833
        %v1869 = vadd.f32 %v1789, %v1835
        %v1870 = vadd.f32 %v1790, %v1837
        %v1871 = vadd.f32 %v1791, %v1839
        %1872 = vrot.lane.b32.xlu0 %v1776, 64
        %v1873 = vpop.permute.xlu0 %1872
        %1874 = vrot.lane.b32.xlu0 %v1777, 64
        %v1875 = vpop.permute.xlu0 %1874
        %1876 = vrot.lane.b32.xlu0 %v1778, 64
        %v1877 = vpop.permute.xlu0 %1876
        %1878 = vrot.lane.b32.xlu0 %v1779, 64
        %v1879 = vpop.permute.xlu0 %1878
        %1880 = vrot.lane.b32.xlu0 %v1780, 64
        %v1881 = vpop.permute.xlu0 %1880
        %1882 = vrot.lane.b32.xlu0 %v1781, 64
        %v1883 = vpop.permute.xlu0 %1882
        %1884 = vrot.lane.b32.xlu0 %v1782, 64
        %v1885 = vpop.permute.xlu0 %1884
        %1886 = vrot.lane.b32.xlu0 %v1783, 64
        %v1887 = vpop.permute.xlu0 %1886
        %1888 = vrot.lane.b32.xlu0 %v1784, 64
        %v1889 = vpop.permute.xlu0 %1888
        %1890 = vrot.lane.b32.xlu0 %v1785, 64
        %v1891 = vpop.permute.xlu0 %1890
        %1892 = vrot.lane.b32.xlu0 %v1786, 64
        %v1893 = vpop.permute.xlu0 %1892
        %1894 = vrot.lane.b32.xlu0 %v1787, 64
        %v1895 = vpop.permute.xlu0 %1894
        %1896 = vrot.lane.b32.xlu0 %v1788, 64
        %v1897 = vpop.permute.xlu0 %1896
        %1898 = vrot.lane.b32.xlu0 %v1789, 64
        %v1899 = vpop.permute.xlu0 %1898
        %1900 = vrot.lane.b32.xlu0 %v1790, 64
        %v1901 = vpop.permute.xlu0 %1900
        %1902 = vrot.lane.b32.xlu0 %v1791, 64
        %v1903 = vpop.permute.xlu0 %1902
        %v1920 = vadd.f32 %v1856, %v1873
        %v1921 = vadd.f32 %v1857, %v1875
        %v1922 = vadd.f32 %v1858, %v1877
        %v1923 = vadd.f32 %v1859, %v1879
        %v1924 = vadd.f32 %v1860, %v1881
        %v1925 = vadd.f32 %v1861, %v1883
        %v1926 = vadd.f32 %v1862, %v1885
        %v1927 = vadd.f32 %v1863, %v1887
        %v1928 = vadd.f32 %v1864, %v1889
        %v1929 = vadd.f32 %v1865, %v1891
        %v1930 = vadd.f32 %v1866, %v1893
        %v1931 = vadd.f32 %v1867, %v1895
        %v1932 = vadd.f32 %v1868, %v1897
        %v1933 = vadd.f32 %v1869, %v1899
        %v1934 = vadd.f32 %v1870, %v1901
        %v1935 = vadd.f32 %v1871, %v1903
        %1936 = vrot.lane.b32.xlu0 %v1776, 32
        %v1937 = vpop.permute.xlu0 %1936
        %1938 = vrot.lane.b32.xlu0 %v1777, 32
        %v1939 = vpop.permute.xlu0 %1938
        %1940 = vrot.lane.b32.xlu0 %v1778, 32
        %v1941 = vpop.permute.xlu0 %1940
        %1942 = vrot.lane.b32.xlu0 %v1779, 32
        %v1943 = vpop.permute.xlu0 %1942
        %1944 = vrot.lane.b32.xlu0 %v1780, 32
        %v1945 = vpop.permute.xlu0 %1944
        %1946 = vrot.lane.b32.xlu0 %v1781, 32
        %v1947 = vpop.permute.xlu0 %1946
        %1948 = vrot.lane.b32.xlu0 %v1782, 32
        %v1949 = vpop.permute.xlu0 %1948
        %1950 = vrot.lane.b32.xlu0 %v1783, 32
        %v1951 = vpop.permute.xlu0 %1950
        %1952 = vrot.lane.b32.xlu0 %v1784, 32
        %v1953 = vpop.permute.xlu0 %1952
        %1954 = vrot.lane.b32.xlu0 %v1785, 32
        %v1955 = vpop.permute.xlu0 %1954
        %1956 = vrot.lane.b32.xlu0 %v1786, 32
        %v1957 = vpop.permute.xlu0 %1956
        %1958 = vrot.lane.b32.xlu0 %v1787, 32
        %v1959 = vpop.permute.xlu0 %1958
        %1960 = vrot.lane.b32.xlu0 %v1788, 32
        %v1961 = vpop.permute.xlu0 %1960
        %1962 = vrot.lane.b32.xlu0 %v1789, 32
        %v1963 = vpop.permute.xlu0 %1962
        %1964 = vrot.lane.b32.xlu0 %v1790, 32
        %v1965 = vpop.permute.xlu0 %1964
        %1966 = vrot.lane.b32.xlu0 %v1791, 32
        %v1967 = vpop.permute.xlu0 %1966
        %v1984 = vadd.f32 %v1920, %v1937
        %v1985 = vadd.f32 %v1921, %v1939
        %v1986 = vadd.f32 %v1922, %v1941
        %v1987 = vadd.f32 %v1923, %v1943
        %v1988 = vadd.f32 %v1924, %v1945
        %v1989 = vadd.f32 %v1925, %v1947
        %v1990 = vadd.f32 %v1926, %v1949
        %v1991 = vadd.f32 %v1927, %v1951
        %v1992 = vadd.f32 %v1928, %v1953
        %v1993 = vadd.f32 %v1929, %v1955
        %v1994 = vadd.f32 %v1930, %v1957
        %v1995 = vadd.f32 %v1931, %v1959
        %v1996 = vadd.f32 %v1932, %v1961
        %v1997 = vadd.f32 %v1933, %v1963
        %v1998 = vadd.f32 %v1934, %v1965
        %v1999 = vadd.f32 %v1935, %v1967
        %v2000 = vmul.f32 %v1984, %v1655
        %v2001 = vmul.f32 %v1985, %v1656
        %v2002 = vmul.f32 %v1986, %v1657
        %v2003 = vmul.f32 %v1987, %v1658
        %v2004 = vmul.f32 %v1988, %v1659
        %v2005 = vmul.f32 %v1989, %v1660
        %v2006 = vmul.f32 %v1990, %v1661
        %v2007 = vmul.f32 %v1991, %v1662
        %v2008 = vmul.f32 %v1992, %v1663
        %v2009 = vmul.f32 %v1993, %v1664
        %v2010 = vmul.f32 %v1994, %v1665
        %v2011 = vmul.f32 %v1995, %v1666
        %v2012 = vmul.f32 %v1996, %v1667
        %v2013 = vmul.f32 %v1997, %v1668
        %v2014 = vmul.f32 %v1998, %v1669
        %v2015 = vmul.f32 %v1999, %v1670
        %2016 = vst.msk [vmem:[%s323] sm:$0xff] %vm629, %v2000
        %2017 = vst.msk [vmem:[%s323 + $0x8] sm:$0xff] %vm629, %v2001
        %2018 = vst.msk [vmem:[%s323 + $0x10] sm:$0xff] %vm629, %v2002
        %2019 = vst.msk [vmem:[%s323 + $0x18] sm:$0xff] %vm629, %v2003
        %2020 = vst.msk [vmem:[%s323 + $0x20] sm:$0xff] %vm629, %v2004
        %2021 = vst.msk [vmem:[%s323 + $0x28] sm:$0xff] %vm629, %v2005
        %2022 = vst.msk [vmem:[%s323 + $0x30] sm:$0xff] %vm629, %v2006
        %2023 = vst.msk [vmem:[%s323 + $0x38] sm:$0xff] %vm629, %v2007
        %2024 = vst.msk [vmem:[%s323 + $0x40] sm:$0xff] %vm629, %v2008
        %2025 = vst.msk [vmem:[%s323 + $0x48] sm:$0xff] %vm629, %v2009
        %2026 = vst.msk [vmem:[%s323 + $0x50] sm:$0xff] %vm629, %v2010
        %2027 = vst.msk [vmem:[%s323 + $0x58] sm:$0xff] %vm629, %v2011
        %2028 = vst.msk [vmem:[%s323 + $0x60] sm:$0xff] %vm629, %v2012
        %2029 = vst.msk [vmem:[%s323 + $0x68] sm:$0xff] %vm629, %v2013
        %2030 = vst.msk [vmem:[%s323 + $0x70] sm:$0xff] %vm629, %v2014
        %2031 = vst.msk [vmem:[%s323 + $0x78] sm:$0xff] %vm629, %v2015
        %v2032 = vld [vmem:[%s328] sm:$0xff]
        %v2033 = vld [vmem:[%s328 + $0x8] sm:$0xff]
        %v2034 = vld [vmem:[%s328 + $0x10] sm:$0xff]
        %v2035 = vld [vmem:[%s328 + $0x18] sm:$0xff]
        %v2036 = vld [vmem:[%s328 + $0x20] sm:$0xff]
        %v2037 = vld [vmem:[%s328 + $0x28] sm:$0xff]
        %v2038 = vld [vmem:[%s328 + $0x30] sm:$0xff]
        %v2039 = vld [vmem:[%s328 + $0x38] sm:$0xff]
        %v2040 = vld [vmem:[%s328 + $0x40] sm:$0xff]
        %v2041 = vld [vmem:[%s328 + $0x48] sm:$0xff]
        %v2042 = vld [vmem:[%s328 + $0x50] sm:$0xff]
        %v2043 = vld [vmem:[%s328 + $0x58] sm:$0xff]
        %v2044 = vld [vmem:[%s328 + $0x60] sm:$0xff]
        %v2045 = vld [vmem:[%s328 + $0x68] sm:$0xff]
        %v2046 = vld [vmem:[%s328 + $0x70] sm:$0xff]
        %v2047 = vld [vmem:[%s328 + $0x78] sm:$0xff]
        %v2048 = vld [vmem:[%s270] sm:$0xff]
        %v2049 = vld [vmem:[%s270 + $0x8] sm:$0xff]
        %v2050 = vld [vmem:[%s270 + $0x10] sm:$0xff]
        %v2051 = vld [vmem:[%s270 + $0x18] sm:$0xff]
        %v2052 = vld [vmem:[%s270 + $0x20] sm:$0xff]
        %v2053 = vld [vmem:[%s270 + $0x28] sm:$0xff]
        %v2054 = vld [vmem:[%s270 + $0x30] sm:$0xff]
        %v2055 = vld [vmem:[%s270 + $0x38] sm:$0xff]
        %v2056 = vld [vmem:[%s270 + $0x40] sm:$0xff]
        %v2057 = vld [vmem:[%s270 + $0x48] sm:$0xff]
        %v2058 = vld [vmem:[%s270 + $0x50] sm:$0xff]
        %v2059 = vld [vmem:[%s270 + $0x58] sm:$0xff]
        %v2060 = vld [vmem:[%s270 + $0x60] sm:$0xff]
        %v2061 = vld [vmem:[%s270 + $0x68] sm:$0xff]
        %v2062 = vld [vmem:[%s270 + $0x70] sm:$0xff]
        %v2063 = vld [vmem:[%s270 + $0x78] sm:$0xff]
        %v2064 = vld [vmem:[%s279] sm:$0xff]
        %v2065 = vld [vmem:[%s279 + $0x8] sm:$0xff]
        %v2066 = vld [vmem:[%s279 + $0x10] sm:$0xff]
        %v2067 = vld [vmem:[%s279 + $0x18] sm:$0xff]
        %v2068 = vld [vmem:[%s279 + $0x20] sm:$0xff]
        %v2069 = vld [vmem:[%s279 + $0x28] sm:$0xff]
        %v2070 = vld [vmem:[%s279 + $0x30] sm:$0xff]
        %v2071 = vld [vmem:[%s279 + $0x38] sm:$0xff]
        %v2072 = vld [vmem:[%s279 + $0x40] sm:$0xff]
        %v2073 = vld [vmem:[%s279 + $0x48] sm:$0xff]
        %v2074 = vld [vmem:[%s279 + $0x50] sm:$0xff]
        %v2075 = vld [vmem:[%s279 + $0x58] sm:$0xff]
        %v2076 = vld [vmem:[%s279 + $0x60] sm:$0xff]
        %v2077 = vld [vmem:[%s279 + $0x68] sm:$0xff]
        %v2078 = vld [vmem:[%s279 + $0x70] sm:$0xff]
        %v2079 = vld [vmem:[%s279 + $0x78] sm:$0xff]
        %2096 = vrot.lane.b32.xlu0 %v2032, 96
        %v2097 = vpop.permute.xlu0 %2096
        %2098 = vrot.lane.b32.xlu0 %v2033, 96
        %v2099 = vpop.permute.xlu0 %2098
        %2100 = vrot.lane.b32.xlu0 %v2034, 96
        %v2101 = vpop.permute.xlu0 %2100
        %2102 = vrot.lane.b32.xlu0 %v2035, 96
        %v2103 = vpop.permute.xlu0 %2102
        %2104 = vrot.lane.b32.xlu0 %v2036, 96
        %v2105 = vpop.permute.xlu0 %2104
        %2106 = vrot.lane.b32.xlu0 %v2037, 96
        %v2107 = vpop.permute.xlu0 %2106
        %2108 = vrot.lane.b32.xlu0 %v2038, 96
        %v2109 = vpop.permute.xlu0 %2108
        %2110 = vrot.lane.b32.xlu0 %v2039, 96
        %v2111 = vpop.permute.xlu0 %2110
        %2112 = vrot.lane.b32.xlu0 %v2040, 96
        %v2113 = vpop.permute.xlu0 %2112
        %2114 = vrot.lane.b32.xlu0 %v2041, 96
        %v2115 = vpop.permute.xlu0 %2114
        %2116 = vrot.lane.b32.xlu0 %v2042, 96
        %v2117 = vpop.permute.xlu0 %2116
        %2118 = vrot.lane.b32.xlu0 %v2043, 96
        %v2119 = vpop.permute.xlu0 %2118
        %2120 = vrot.lane.b32.xlu0 %v2044, 96
        %v2121 = vpop.permute.xlu0 %2120
        %2122 = vrot.lane.b32.xlu0 %v2045, 96
        %v2123 = vpop.permute.xlu0 %2122
        %2124 = vrot.lane.b32.xlu0 %v2046, 96
        %v2125 = vpop.permute.xlu0 %2124
        %2126 = vrot.lane.b32.xlu0 %v2047, 96
        %v2127 = vpop.permute.xlu0 %2126
        %2144 = vrot.lane.b32.xlu0 %v2032, 32
        %v2145 = vpop.permute.xlu0 %2144
        %2146 = vrot.lane.b32.xlu0 %v2033, 32
        %v2147 = vpop.permute.xlu0 %2146
        %2148 = vrot.lane.b32.xlu0 %v2034, 32
        %v2149 = vpop.permute.xlu0 %2148
        %2150 = vrot.lane.b32.xlu0 %v2035, 32
        %v2151 = vpop.permute.xlu0 %2150
        %2152 = vrot.lane.b32.xlu0 %v2036, 32
        %v2153 = vpop.permute.xlu0 %2152
        %2154 = vrot.lane.b32.xlu0 %v2037, 32
        %v2155 = vpop.permute.xlu0 %2154
        %2156 = vrot.lane.b32.xlu0 %v2038, 32
        %v2157 = vpop.permute.xlu0 %2156
        %2158 = vrot.lane.b32.xlu0 %v2039, 32
        %v2159 = vpop.permute.xlu0 %2158
        %2160 = vrot.lane.b32.xlu0 %v2040, 32
        %v2161 = vpop.permute.xlu0 %2160
        %2162 = vrot.lane.b32.xlu0 %v2041, 32
        %v2163 = vpop.permute.xlu0 %2162
        %2164 = vrot.lane.b32.xlu0 %v2042, 32
        %v2165 = vpop.permute.xlu0 %2164
        %2166 = vrot.lane.b32.xlu0 %v2043, 32
        %v2167 = vpop.permute.xlu0 %2166
        %2168 = vrot.lane.b32.xlu0 %v2044, 32
        %v2169 = vpop.permute.xlu0 %2168
        %2170 = vrot.lane.b32.xlu0 %v2045, 32
        %v2171 = vpop.permute.xlu0 %2170
        %2172 = vrot.lane.b32.xlu0 %v2046, 32
        %v2173 = vpop.permute.xlu0 %2172
        %2174 = vrot.lane.b32.xlu0 %v2047, 32
        %v2175 = vpop.permute.xlu0 %2174
        %2192 = vrot.lane.b32.xlu0 %v2032, 64
        %v2193 = vpop.permute.xlu0 %2192
        %2194 = vrot.lane.b32.xlu0 %v2033, 64
        %v2195 = vpop.permute.xlu0 %2194
        %2196 = vrot.lane.b32.xlu0 %v2034, 64
        %v2197 = vpop.permute.xlu0 %2196
        %2198 = vrot.lane.b32.xlu0 %v2035, 64
        %v2199 = vpop.permute.xlu0 %2198
        %2200 = vrot.lane.b32.xlu0 %v2036, 64
        %v2201 = vpop.permute.xlu0 %2200
        %2202 = vrot.lane.b32.xlu0 %v2037, 64
        %v2203 = vpop.permute.xlu0 %2202
        %2204 = vrot.lane.b32.xlu0 %v2038, 64
        %v2205 = vpop.permute.xlu0 %2204
        %2206 = vrot.lane.b32.xlu0 %v2039, 64
        %v2207 = vpop.permute.xlu0 %2206
        %2208 = vrot.lane.b32.xlu0 %v2040, 64
        %v2209 = vpop.permute.xlu0 %2208
        %2210 = vrot.lane.b32.xlu0 %v2041, 64
        %v2211 = vpop.permute.xlu0 %2210
        %2212 = vrot.lane.b32.xlu0 %v2042, 64
        %v2213 = vpop.permute.xlu0 %2212
        %2214 = vrot.lane.b32.xlu0 %v2043, 64
        %v2215 = vpop.permute.xlu0 %2214
        %2216 = vrot.lane.b32.xlu0 %v2044, 64
        %v2217 = vpop.permute.xlu0 %2216
        %2218 = vrot.lane.b32.xlu0 %v2045, 64
        %v2219 = vpop.permute.xlu0 %2218
        %2220 = vrot.lane.b32.xlu0 %v2046, 64
        %v2221 = vpop.permute.xlu0 %2220
        %2222 = vrot.lane.b32.xlu0 %v2047, 64
        %v2223 = vpop.permute.xlu0 %2222
        %v2240 = vsel %vm629, %v2097, %v2032
        %v2241 = vsel %vm629, %v2099, %v2033
        %v2242 = vsel %vm629, %v2101, %v2034
        %v2243 = vsel %vm629, %v2103, %v2035
        %v2244 = vsel %vm629, %v2105, %v2036
        %v2245 = vsel %vm629, %v2107, %v2037
        %v2246 = vsel %vm629, %v2109, %v2038
        %v2247 = vsel %vm629, %v2111, %v2039
        %v2248 = vsel %vm629, %v2113, %v2040
        %v2249 = vsel %vm629, %v2115, %v2041
        %v2250 = vsel %vm629, %v2117, %v2042
        %v2251 = vsel %vm629, %v2119, %v2043
        %v2252 = vsel %vm629, %v2121, %v2044
        %v2253 = vsel %vm629, %v2123, %v2045
        %v2254 = vsel %vm629, %v2125, %v2046
        %v2255 = vsel %vm629, %v2127, %v2047
        %v2256 = vsel %vm646, %v2240, %v2145
        %v2257 = vsel %vm646, %v2241, %v2147
        %v2258 = vsel %vm646, %v2242, %v2149
        %v2259 = vsel %vm646, %v2243, %v2151
        %v2260 = vsel %vm646, %v2244, %v2153
        %v2261 = vsel %vm646, %v2245, %v2155
        %v2262 = vsel %vm646, %v2246, %v2157
        %v2263 = vsel %vm646, %v2247, %v2159
        %v2264 = vsel %vm646, %v2248, %v2161
        %v2265 = vsel %vm646, %v2249, %v2163
        %v2266 = vsel %vm646, %v2250, %v2165
        %v2267 = vsel %vm646, %v2251, %v2167
        %v2268 = vsel %vm646, %v2252, %v2169
        %v2269 = vsel %vm646, %v2253, %v2171
        %v2270 = vsel %vm646, %v2254, %v2173
        %v2271 = vsel %vm646, %v2255, %v2175
        %v2272 = vsel %vm663, %v2256, %v2193
        %v2273 = vsel %vm663, %v2257, %v2195
        %v2274 = vsel %vm663, %v2258, %v2197
        %v2275 = vsel %vm663, %v2259, %v2199
        %v2276 = vsel %vm663, %v2260, %v2201
        %v2277 = vsel %vm663, %v2261, %v2203
        %v2278 = vsel %vm663, %v2262, %v2205
        %v2279 = vsel %vm663, %v2263, %v2207
        %v2280 = vsel %vm663, %v2264, %v2209
        %v2281 = vsel %vm663, %v2265, %v2211
        %v2282 = vsel %vm663, %v2266, %v2213
        %v2283 = vsel %vm663, %v2267, %v2215
        %v2284 = vsel %vm663, %v2268, %v2217
        %v2285 = vsel %vm663, %v2269, %v2219
        %v2286 = vsel %vm663, %v2270, %v2221
        %v2287 = vsel %vm663, %v2271, %v2223
        %v2288 = vmul.f32 %v2272, %v680
        %v2289 = vmul.f32 %v2273, %v681
        %v2290 = vmul.f32 %v2274, %v682
        %v2291 = vmul.f32 %v2275, %v683
        %v2292 = vmul.f32 %v2276, %v684
        %v2293 = vmul.f32 %v2277, %v685
        %v2294 = vmul.f32 %v2278, %v686
        %v2295 = vmul.f32 %v2279, %v687
        %v2296 = vmul.f32 %v2280, %v688
        %v2297 = vmul.f32 %v2281, %v689
        %v2298 = vmul.f32 %v2282, %v690
        %v2299 = vmul.f32 %v2283, %v691
        %v2300 = vmul.f32 %v2284, %v692
        %v2301 = vmul.f32 %v2285, %v693
        %v2302 = vmul.f32 %v2286, %v694
        %v2303 = vmul.f32 %v2287, %v695
        %v2304 = vpack.c.bf16 %v2289, %v2288
        %v2305 = vpack.c.bf16 %v2291, %v2290
        %v2306 = vpack.c.bf16 %v2293, %v2292
        %v2307 = vpack.c.bf16 %v2295, %v2294
        %v2308 = vpack.c.bf16 %v2297, %v2296
        %v2309 = vpack.c.bf16 %v2299, %v2298
        %v2310 = vpack.c.bf16 %v2301, %v2300
        %v2311 = vpack.c.bf16 %v2303, %v2302
        %2328 = vrot.lane.b32.xlu0 %v2048, 96
        %v2329 = vpop.permute.xlu0 %2328
        %2330 = vrot.lane.b32.xlu0 %v2049, 96
        %v2331 = vpop.permute.xlu0 %2330
        %2332 = vrot.lane.b32.xlu0 %v2050, 96
        %v2333 = vpop.permute.xlu0 %2332
        %2334 = vrot.lane.b32.xlu0 %v2051, 96
        %v2335 = vpop.permute.xlu0 %2334
        %2336 = vrot.lane.b32.xlu0 %v2052, 96
        %v2337 = vpop.permute.xlu0 %2336
        %2338 = vrot.lane.b32.xlu0 %v2053, 96
        %v2339 = vpop.permute.xlu0 %2338
        %2340 = vrot.lane.b32.xlu0 %v2054, 96
        %v2341 = vpop.permute.xlu0 %2340
        %2342 = vrot.lane.b32.xlu0 %v2055, 96
        %v2343 = vpop.permute.xlu0 %2342
        %2344 = vrot.lane.b32.xlu0 %v2056, 96
        %v2345 = vpop.permute.xlu0 %2344
        %2346 = vrot.lane.b32.xlu0 %v2057, 96
        %v2347 = vpop.permute.xlu0 %2346
        %2348 = vrot.lane.b32.xlu0 %v2058, 96
        %v2349 = vpop.permute.xlu0 %2348
        %2350 = vrot.lane.b32.xlu0 %v2059, 96
        %v2351 = vpop.permute.xlu0 %2350
        %2352 = vrot.lane.b32.xlu0 %v2060, 96
        %v2353 = vpop.permute.xlu0 %2352
        %2354 = vrot.lane.b32.xlu0 %v2061, 96
        %v2355 = vpop.permute.xlu0 %2354
        %2356 = vrot.lane.b32.xlu0 %v2062, 96
        %v2357 = vpop.permute.xlu0 %2356
        %2358 = vrot.lane.b32.xlu0 %v2063, 96
        %v2359 = vpop.permute.xlu0 %2358
        %2376 = vrot.lane.b32.xlu0 %v2048, 32
        %v2377 = vpop.permute.xlu0 %2376
        %2378 = vrot.lane.b32.xlu0 %v2049, 32
        %v2379 = vpop.permute.xlu0 %2378
        %2380 = vrot.lane.b32.xlu0 %v2050, 32
        %v2381 = vpop.permute.xlu0 %2380
        %2382 = vrot.lane.b32.xlu0 %v2051, 32
        %v2383 = vpop.permute.xlu0 %2382
        %2384 = vrot.lane.b32.xlu0 %v2052, 32
        %v2385 = vpop.permute.xlu0 %2384
        %2386 = vrot.lane.b32.xlu0 %v2053, 32
        %v2387 = vpop.permute.xlu0 %2386
        %2388 = vrot.lane.b32.xlu0 %v2054, 32
        %v2389 = vpop.permute.xlu0 %2388
        %2390 = vrot.lane.b32.xlu0 %v2055, 32
        %v2391 = vpop.permute.xlu0 %2390
        %2392 = vrot.lane.b32.xlu0 %v2056, 32
        %v2393 = vpop.permute.xlu0 %2392
        %2394 = vrot.lane.b32.xlu0 %v2057, 32
        %v2395 = vpop.permute.xlu0 %2394
        %2396 = vrot.lane.b32.xlu0 %v2058, 32
        %v2397 = vpop.permute.xlu0 %2396
        %2398 = vrot.lane.b32.xlu0 %v2059, 32
        %v2399 = vpop.permute.xlu0 %2398
        %2400 = vrot.lane.b32.xlu0 %v2060, 32
        %v2401 = vpop.permute.xlu0 %2400
        %2402 = vrot.lane.b32.xlu0 %v2061, 32
        %v2403 = vpop.permute.xlu0 %2402
        %2404 = vrot.lane.b32.xlu0 %v2062, 32
        %v2405 = vpop.permute.xlu0 %2404
        %2406 = vrot.lane.b32.xlu0 %v2063, 32
        %v2407 = vpop.permute.xlu0 %2406
        %2424 = vrot.lane.b32.xlu0 %v2048, 64
        %v2425 = vpop.permute.xlu0 %2424
        %2426 = vrot.lane.b32.xlu0 %v2049, 64
        %v2427 = vpop.permute.xlu0 %2426
        %2428 = vrot.lane.b32.xlu0 %v2050, 64
        %v2429 = vpop.permute.xlu0 %2428
        %2430 = vrot.lane.b32.xlu0 %v2051, 64
        %v2431 = vpop.permute.xlu0 %2430
        %2432 = vrot.lane.b32.xlu0 %v2052, 64
        %v2433 = vpop.permute.xlu0 %2432
        %2434 = vrot.lane.b32.xlu0 %v2053, 64
        %v2435 = vpop.permute.xlu0 %2434
        %2436 = vrot.lane.b32.xlu0 %v2054, 64
        %v2437 = vpop.permute.xlu0 %2436
        %2438 = vrot.lane.b32.xlu0 %v2055, 64
        %v2439 = vpop.permute.xlu0 %2438
        %2440 = vrot.lane.b32.xlu0 %v2056, 64
        %v2441 = vpop.permute.xlu0 %2440
        %2442 = vrot.lane.b32.xlu0 %v2057, 64
        %v2443 = vpop.permute.xlu0 %2442
        %2444 = vrot.lane.b32.xlu0 %v2058, 64
        %v2445 = vpop.permute.xlu0 %2444
        %2446 = vrot.lane.b32.xlu0 %v2059, 64
        %v2447 = vpop.permute.xlu0 %2446
        %2448 = vrot.lane.b32.xlu0 %v2060, 64
        %v2449 = vpop.permute.xlu0 %2448
        %2450 = vrot.lane.b32.xlu0 %v2061, 64
        %v2451 = vpop.permute.xlu0 %2450
        %2452 = vrot.lane.b32.xlu0 %v2062, 64
        %v2453 = vpop.permute.xlu0 %2452
        %2454 = vrot.lane.b32.xlu0 %v2063, 64
        %v2455 = vpop.permute.xlu0 %2454
        %v2472 = vsel %vm629, %v2329, %v2048
        %v2473 = vsel %vm629, %v2331, %v2049
        %v2474 = vsel %vm629, %v2333, %v2050
        %v2475 = vsel %vm629, %v2335, %v2051
        %v2476 = vsel %vm629, %v2337, %v2052
        %v2477 = vsel %vm629, %v2339, %v2053
        %v2478 = vsel %vm629, %v2341, %v2054
        %v2479 = vsel %vm629, %v2343, %v2055
        %v2480 = vsel %vm629, %v2345, %v2056
        %v2481 = vsel %vm629, %v2347, %v2057
        %v2482 = vsel %vm629, %v2349, %v2058
        %v2483 = vsel %vm629, %v2351, %v2059
        %v2484 = vsel %vm629, %v2353, %v2060
        %v2485 = vsel %vm629, %v2355, %v2061
        %v2486 = vsel %vm629, %v2357, %v2062
        %v2487 = vsel %vm629, %v2359, %v2063
        %v2488 = vsel %vm646, %v2472, %v2377
        %v2489 = vsel %vm646, %v2473, %v2379
        %v2490 = vsel %vm646, %v2474, %v2381
        %v2491 = vsel %vm646, %v2475, %v2383
        %v2492 = vsel %vm646, %v2476, %v2385
        %v2493 = vsel %vm646, %v2477, %v2387
        %v2494 = vsel %vm646, %v2478, %v2389
        %v2495 = vsel %vm646, %v2479, %v2391
        %v2496 = vsel %vm646, %v2480, %v2393
        %v2497 = vsel %vm646, %v2481, %v2395
        %v2498 = vsel %vm646, %v2482, %v2397
        %v2499 = vsel %vm646, %v2483, %v2399
        %v2500 = vsel %vm646, %v2484, %v2401
        %v2501 = vsel %vm646, %v2485, %v2403
        %v2502 = vsel %vm646, %v2486, %v2405
        %v2503 = vsel %vm646, %v2487, %v2407
        %v2504 = vsel %vm663, %v2488, %v2425
        %v2505 = vsel %vm663, %v2489, %v2427
        %v2506 = vsel %vm663, %v2490, %v2429
        %v2507 = vsel %vm663, %v2491, %v2431
        %v2508 = vsel %vm663, %v2492, %v2433
        %v2509 = vsel %vm663, %v2493, %v2435
        %v2510 = vsel %vm663, %v2494, %v2437
        %v2511 = vsel %vm663, %v2495, %v2439
        %v2512 = vsel %vm663, %v2496, %v2441
        %v2513 = vsel %vm663, %v2497, %v2443
        %v2514 = vsel %vm663, %v2498, %v2445
        %v2515 = vsel %vm663, %v2499, %v2447
        %v2516 = vsel %vm663, %v2500, %v2449
        %v2517 = vsel %vm663, %v2501, %v2451
        %v2518 = vsel %vm663, %v2502, %v2453
        %v2519 = vsel %vm663, %v2503, %v2455
        %v2520 = vmul.f32 %v2504, %v664
        %v2521 = vmul.f32 %v2505, %v665
        %v2522 = vmul.f32 %v2506, %v666
        %v2523 = vmul.f32 %v2507, %v667
        %v2524 = vmul.f32 %v2508, %v668
        %v2525 = vmul.f32 %v2509, %v669
        %v2526 = vmul.f32 %v2510, %v670
        %v2527 = vmul.f32 %v2511, %v671
        %v2528 = vmul.f32 %v2512, %v672
        %v2529 = vmul.f32 %v2513, %v673
        %v2530 = vmul.f32 %v2514, %v674
        %v2531 = vmul.f32 %v2515, %v675
        %v2532 = vmul.f32 %v2516, %v676
        %v2533 = vmul.f32 %v2517, %v677
        %v2534 = vmul.f32 %v2518, %v678
        %v2535 = vmul.f32 %v2519, %v679
        %v2536 = vpack.c.bf16 %v2521, %v2520
        %v2537 = vpack.c.bf16 %v2523, %v2522
        %v2538 = vpack.c.bf16 %v2525, %v2524
        %v2539 = vpack.c.bf16 %v2527, %v2526
        %v2540 = vpack.c.bf16 %v2529, %v2528
        %v2541 = vpack.c.bf16 %v2531, %v2530
        %v2542 = vpack.c.bf16 %v2533, %v2532
        %v2543 = vpack.c.bf16 %v2535, %v2534
        %2560 = vrot.lane.b32.xlu0 %v2064, 96
        %v2561 = vpop.permute.xlu0 %2560
        %2562 = vrot.lane.b32.xlu0 %v2065, 96
        %v2563 = vpop.permute.xlu0 %2562
        %2564 = vrot.lane.b32.xlu0 %v2066, 96
        %v2565 = vpop.permute.xlu0 %2564
        %2566 = vrot.lane.b32.xlu0 %v2067, 96
        %v2567 = vpop.permute.xlu0 %2566
        %2568 = vrot.lane.b32.xlu0 %v2068, 96
        %v2569 = vpop.permute.xlu0 %2568
        %2570 = vrot.lane.b32.xlu0 %v2069, 96
        %v2571 = vpop.permute.xlu0 %2570
        %2572 = vrot.lane.b32.xlu0 %v2070, 96
        %v2573 = vpop.permute.xlu0 %2572
        %2574 = vrot.lane.b32.xlu0 %v2071, 96
        %v2575 = vpop.permute.xlu0 %2574
        %2576 = vrot.lane.b32.xlu0 %v2072, 96
        %v2577 = vpop.permute.xlu0 %2576
        %2578 = vrot.lane.b32.xlu0 %v2073, 96
        %v2579 = vpop.permute.xlu0 %2578
        %2580 = vrot.lane.b32.xlu0 %v2074, 96
        %v2581 = vpop.permute.xlu0 %2580
        %2582 = vrot.lane.b32.xlu0 %v2075, 96
        %v2583 = vpop.permute.xlu0 %2582
        %2584 = vrot.lane.b32.xlu0 %v2076, 96
        %v2585 = vpop.permute.xlu0 %2584
        %2586 = vrot.lane.b32.xlu0 %v2077, 96
        %v2587 = vpop.permute.xlu0 %2586
        %2588 = vrot.lane.b32.xlu0 %v2078, 96
        %v2589 = vpop.permute.xlu0 %2588
        %2590 = vrot.lane.b32.xlu0 %v2079, 96
        %v2591 = vpop.permute.xlu0 %2590
        %2608 = vrot.lane.b32.xlu0 %v2064, 32
        %v2609 = vpop.permute.xlu0 %2608
        %2610 = vrot.lane.b32.xlu0 %v2065, 32
        %v2611 = vpop.permute.xlu0 %2610
        %2612 = vrot.lane.b32.xlu0 %v2066, 32
        %v2613 = vpop.permute.xlu0 %2612
        %2614 = vrot.lane.b32.xlu0 %v2067, 32
        %v2615 = vpop.permute.xlu0 %2614
        %2616 = vrot.lane.b32.xlu0 %v2068, 32
        %v2617 = vpop.permute.xlu0 %2616
        %2618 = vrot.lane.b32.xlu0 %v2069, 32
        %v2619 = vpop.permute.xlu0 %2618
        %2620 = vrot.lane.b32.xlu0 %v2070, 32
        %v2621 = vpop.permute.xlu0 %2620
        %2622 = vrot.lane.b32.xlu0 %v2071, 32
        %v2623 = vpop.permute.xlu0 %2622
        %2624 = vrot.lane.b32.xlu0 %v2072, 32
        %v2625 = vpop.permute.xlu0 %2624
        %2626 = vrot.lane.b32.xlu0 %v2073, 32
        %v2627 = vpop.permute.xlu0 %2626
        %2628 = vrot.lane.b32.xlu0 %v2074, 32
        %v2629 = vpop.permute.xlu0 %2628
        %2630 = vrot.lane.b32.xlu0 %v2075, 32
        %v2631 = vpop.permute.xlu0 %2630
        %2632 = vrot.lane.b32.xlu0 %v2076, 32
        %v2633 = vpop.permute.xlu0 %2632
        %2634 = vrot.lane.b32.xlu0 %v2077, 32
        %v2635 = vpop.permute.xlu0 %2634
        %2636 = vrot.lane.b32.xlu0 %v2078, 32
        %v2637 = vpop.permute.xlu0 %2636
        %2638 = vrot.lane.b32.xlu0 %v2079, 32
        %v2639 = vpop.permute.xlu0 %2638
        %2656 = vrot.lane.b32.xlu0 %v2064, 64
        %v2657 = vpop.permute.xlu0 %2656
        %2658 = vrot.lane.b32.xlu0 %v2065, 64
        %v2659 = vpop.permute.xlu0 %2658
        %2660 = vrot.lane.b32.xlu0 %v2066, 64
        %v2661 = vpop.permute.xlu0 %2660
        %2662 = vrot.lane.b32.xlu0 %v2067, 64
        %v2663 = vpop.permute.xlu0 %2662
        %2664 = vrot.lane.b32.xlu0 %v2068, 64
        %v2665 = vpop.permute.xlu0 %2664
        %2666 = vrot.lane.b32.xlu0 %v2069, 64
        %v2667 = vpop.permute.xlu0 %2666
        %2668 = vrot.lane.b32.xlu0 %v2070, 64
        %v2669 = vpop.permute.xlu0 %2668
        %2670 = vrot.lane.b32.xlu0 %v2071, 64
        %v2671 = vpop.permute.xlu0 %2670
        %2672 = vrot.lane.b32.xlu0 %v2072, 64
        %v2673 = vpop.permute.xlu0 %2672
        %2674 = vrot.lane.b32.xlu0 %v2073, 64
        %v2675 = vpop.permute.xlu0 %2674
        %2676 = vrot.lane.b32.xlu0 %v2074, 64
        %v2677 = vpop.permute.xlu0 %2676
        %2678 = vrot.lane.b32.xlu0 %v2075, 64
        %v2679 = vpop.permute.xlu0 %2678
        %2680 = vrot.lane.b32.xlu0 %v2076, 64
        %v2681 = vpop.permute.xlu0 %2680
        %2682 = vrot.lane.b32.xlu0 %v2077, 64
        %v2683 = vpop.permute.xlu0 %2682
        %2684 = vrot.lane.b32.xlu0 %v2078, 64
        %v2685 = vpop.permute.xlu0 %2684
        %2686 = vrot.lane.b32.xlu0 %v2079, 64
        %v2687 = vpop.permute.xlu0 %2686
        %v2704 = vsel %vm629, %v2561, %v2064
        %v2705 = vsel %vm629, %v2563, %v2065
        %v2706 = vsel %vm629, %v2565, %v2066
        %v2707 = vsel %vm629, %v2567, %v2067
        %v2708 = vsel %vm629, %v2569, %v2068
        %v2709 = vsel %vm629, %v2571, %v2069
        %v2710 = vsel %vm629, %v2573, %v2070
        %v2711 = vsel %vm629, %v2575, %v2071
        %v2712 = vsel %vm629, %v2577, %v2072
        %v2713 = vsel %vm629, %v2579, %v2073
        %v2714 = vsel %vm629, %v2581, %v2074
        %v2715 = vsel %vm629, %v2583, %v2075
        %v2716 = vsel %vm629, %v2585, %v2076
        %v2717 = vsel %vm629, %v2587, %v2077
        %v2718 = vsel %vm629, %v2589, %v2078
        %v2719 = vsel %vm629, %v2591, %v2079
        %v2720 = vsel %vm646, %v2704, %v2609
        %v2721 = vsel %vm646, %v2705, %v2611
        %v2722 = vsel %vm646, %v2706, %v2613
        %v2723 = vsel %vm646, %v2707, %v2615
        %v2724 = vsel %vm646, %v2708, %v2617
        %v2725 = vsel %vm646, %v2709, %v2619
        %v2726 = vsel %vm646, %v2710, %v2621
        %v2727 = vsel %vm646, %v2711, %v2623
        %v2728 = vsel %vm646, %v2712, %v2625
        %v2729 = vsel %vm646, %v2713, %v2627
        %v2730 = vsel %vm646, %v2714, %v2629
        %v2731 = vsel %vm646, %v2715, %v2631
        %v2732 = vsel %vm646, %v2716, %v2633
        %v2733 = vsel %vm646, %v2717, %v2635
        %v2734 = vsel %vm646, %v2718, %v2637
        %v2735 = vsel %vm646, %v2719, %v2639
        %v2736 = vsel %vm663, %v2720, %v2657
        %v2737 = vsel %vm663, %v2721, %v2659
        %v2738 = vsel %vm663, %v2722, %v2661
        %v2739 = vsel %vm663, %v2723, %v2663
        %v2740 = vsel %vm663, %v2724, %v2665
        %v2741 = vsel %vm663, %v2725, %v2667
        %v2742 = vsel %vm663, %v2726, %v2669
        %v2743 = vsel %vm663, %v2727, %v2671
        %v2744 = vsel %vm663, %v2728, %v2673
        %v2745 = vsel %vm663, %v2729, %v2675
        %v2746 = vsel %vm663, %v2730, %v2677
        %v2747 = vsel %vm663, %v2731, %v2679
        %v2748 = vsel %vm663, %v2732, %v2681
        %v2749 = vsel %vm663, %v2733, %v2683
        %v2750 = vsel %vm663, %v2734, %v2685
        %v2751 = vsel %vm663, %v2735, %v2687
        %v2752 = vmul.f32 %v2736, %v664
        %v2753 = vmul.f32 %v2737, %v665
        %v2754 = vmul.f32 %v2738, %v666
        %v2755 = vmul.f32 %v2739, %v667
        %v2756 = vmul.f32 %v2740, %v668
        %v2757 = vmul.f32 %v2741, %v669
        %v2758 = vmul.f32 %v2742, %v670
        %v2759 = vmul.f32 %v2743, %v671
        %v2760 = vmul.f32 %v2744, %v672
        %v2761 = vmul.f32 %v2745, %v673
        %v2762 = vmul.f32 %v2746, %v674
        %v2763 = vmul.f32 %v2747, %v675
        %v2764 = vmul.f32 %v2748, %v676
        %v2765 = vmul.f32 %v2749, %v677
        %v2766 = vmul.f32 %v2750, %v678
        %v2767 = vmul.f32 %v2751, %v679
        %v2768 = vpack.c.bf16 %v2753, %v2752
        %v2769 = vpack.c.bf16 %v2755, %v2754
        %v2770 = vpack.c.bf16 %v2757, %v2756
        %v2771 = vpack.c.bf16 %v2759, %v2758
        %v2772 = vpack.c.bf16 %v2761, %v2760
        %v2773 = vpack.c.bf16 %v2763, %v2762
        %v2774 = vpack.c.bf16 %v2765, %v2764
        %v2775 = vpack.c.bf16 %v2767, %v2766
        %2776 = vmatprep.subr.bf16.mxu0 0
        %2777 = vmatpush1.bf16.xpose.msra.mxu0 %v2543
        %2778 = vmatprep.subr.bf16.mxu0 0
        %2779 = vmatpush1.bf16.xpose.msra.mxu0 %v2542
        %2780 = vmatprep.subr.bf16.mxu0 0
        %2781 = vmatpush1.bf16.xpose.msra.mxu0 %v2541
        %2782 = vmatprep.subr.bf16.mxu0 0
        %2783 = vmatpush1.bf16.xpose.msra.mxu0 %v2540
        %2784 = vmatprep.subr.bf16.mxu0 0
        %2785 = vmatpush1.bf16.xpose.msra.mxu0 %v2539
        %2786 = vmatprep.subr.bf16.mxu0 0
        %2787 = vmatpush1.bf16.xpose.msra.mxu0 %v2538
        %2788 = vmatprep.subr.bf16.mxu0 0
        %2789 = vmatpush1.bf16.xpose.msra.mxu0 %v2537
        %2790 = vmatprep.subr.bf16.mxu0 0
        %2791 = vmatpush1.bf16.xpose.msra.mxu0 %v2536
        %2792 = vmatprep.subr.bf16.mxu0 0
        %2793 = vmatpush2.bf16.xpose.msra.mxu0 0
        %2794 = vmatprep.subr.bf16.mxu0 0
        %2795 = vmatpush2.bf16.xpose.msra.mxu0 0
        %2796 = vmatprep.subr.bf16.mxu0 0
        %2797 = vmatpush2.bf16.xpose.msra.mxu0 0
        %2798 = vmatprep.subr.bf16.mxu0 0
        %2799 = vmatpush2.bf16.xpose.msra.mxu0 0
        %2800 = vmatprep.subr.bf16.mxu0 0
        %2801 = vmatpush2.bf16.xpose.msra.mxu0 0
        %2802 = vmatprep.subr.bf16.mxu0 0
        %2803 = vmatpush2.bf16.xpose.msra.mxu0 0
        %2804 = vmatprep.subr.bf16.mxu0 0
        %2805 = vmatpush2.bf16.xpose.msra.mxu0 0
        %2806 = vmatprep.subr.bf16.mxu0 0
        %2807 = vmatpush2.bf16.xpose.msra.mxu0 0
        %2808 = vmatprep.mubr.bf16.mxu0 0
        %2809 = vmatmul.mubr.bf16.gmra.mxu0 %v2304
        %v2810 = vpop.f32.mrf.mxu0
        %v2811 = vadd.f32 %v1444, %v2810
        %v2812 = vpop.f32.mrf.mxu0
        %v2813 = vpop.f32.mrf.mxu0
        %v2814 = vadd.f32 %v1444, %v2813
        %v2815 = vpop.f32.mrf.mxu0
        %2816 = vmatprep.mubr.bf16.mxu0 0
        %2817 = vmatmul.mubr.bf16.gmra.mxu0 %v2305
        %v2818 = vpop.f32.mrf.mxu0
        %v2819 = vadd.f32 %v1444, %v2818
        %v2820 = vpop.f32.mrf.mxu0
        %v2821 = vpop.f32.mrf.mxu0
        %v2822 = vadd.f32 %v1444, %v2821
        %v2823 = vpop.f32.mrf.mxu0
        %2824 = vmatprep.mubr.bf16.mxu0 0
        %2825 = vmatmul.mubr.bf16.gmra.mxu0 %v2306
        %v2826 = vpop.f32.mrf.mxu0
        %v2827 = vadd.f32 %v1444, %v2826
        %v2828 = vpop.f32.mrf.mxu0
        %v2829 = vpop.f32.mrf.mxu0
        %v2830 = vadd.f32 %v1444, %v2829
        %v2831 = vpop.f32.mrf.mxu0
        %2832 = vmatprep.mubr.bf16.mxu0 0
        %2833 = vmatmul.mubr.bf16.gmra.mxu0 %v2307
        %v2834 = vpop.f32.mrf.mxu0
        %v2835 = vadd.f32 %v1444, %v2834
        %v2836 = vpop.f32.mrf.mxu0
        %v2837 = vpop.f32.mrf.mxu0
        %v2838 = vadd.f32 %v1444, %v2837
        %v2839 = vpop.f32.mrf.mxu0
        %2840 = vmatprep.mubr.bf16.mxu0 0
        %2841 = vmatmul.mubr.bf16.gmra.mxu0 %v2308
        %v2842 = vpop.f32.mrf.mxu0
        %v2843 = vadd.f32 %v1444, %v2842
        %v2844 = vpop.f32.mrf.mxu0
        %v2845 = vpop.f32.mrf.mxu0
        %v2846 = vadd.f32 %v1444, %v2845
        %v2847 = vpop.f32.mrf.mxu0
        %2848 = vmatprep.mubr.bf16.mxu0 0
        %2849 = vmatmul.mubr.bf16.gmra.mxu0 %v2309
        %v2850 = vpop.f32.mrf.mxu0
        %v2851 = vadd.f32 %v1444, %v2850
        %v2852 = vpop.f32.mrf.mxu0
        %v2853 = vpop.f32.mrf.mxu0
        %v2854 = vadd.f32 %v1444, %v2853
        %v2855 = vpop.f32.mrf.mxu0
        %2856 = vmatprep.mubr.bf16.mxu0 0
        %2857 = vmatmul.mubr.bf16.gmra.mxu0 %v2310
        %v2858 = vpop.f32.mrf.mxu0
        %v2859 = vadd.f32 %v1444, %v2858
        %v2860 = vpop.f32.mrf.mxu0
        %v2861 = vpop.f32.mrf.mxu0
        %v2862 = vadd.f32 %v1444, %v2861
        %v2863 = vpop.f32.mrf.mxu0
        %2864 = vmatprep.mubr.bf16.mxu0 0
        %2865 = vmatmul.mubr.bf16.gmra.mxu0 %v2311
        %v2866 = vpop.f32.mrf.mxu0
        %v2867 = vadd.f32 %v1444, %v2866
        %v2868 = vpop.f32.mrf.mxu0
        %v2869 = vpop.f32.mrf.mxu0
        %v2870 = vadd.f32 %v1444, %v2869
        %v2871 = vpop.f32.mrf.mxu0
        %2872 = vdwg.mxu0
        %2873 = vmax.xlane.f32.xlu0 %v2811
        %v2874 = vpop.xlane.xlu0 %2873
        %2875 = vmax.xlane.f32.xlu0 %v2814
        %v2876 = vpop.xlane.xlu0 %2875
        %2877 = vmax.xlane.f32.xlu0 %v2819
        %v2878 = vpop.xlane.xlu0 %2877
        %2879 = vmax.xlane.f32.xlu0 %v2822
        %v2880 = vpop.xlane.xlu0 %2879
        %2881 = vmax.xlane.f32.xlu0 %v2827
        %v2882 = vpop.xlane.xlu0 %2881
        %2883 = vmax.xlane.f32.xlu0 %v2830
        %v2884 = vpop.xlane.xlu0 %2883
        %2885 = vmax.xlane.f32.xlu0 %v2835
        %v2886 = vpop.xlane.xlu0 %2885
        %2887 = vmax.xlane.f32.xlu0 %v2838
        %v2888 = vpop.xlane.xlu0 %2887
        %2889 = vmax.xlane.f32.xlu0 %v2843
        %v2890 = vpop.xlane.xlu0 %2889
        %2891 = vmax.xlane.f32.xlu0 %v2846
        %v2892 = vpop.xlane.xlu0 %2891
        %2893 = vmax.xlane.f32.xlu0 %v2851
        %v2894 = vpop.xlane.xlu0 %2893
        %2895 = vmax.xlane.f32.xlu0 %v2854
        %v2896 = vpop.xlane.xlu0 %2895
        %2897 = vmax.xlane.f32.xlu0 %v2859
        %v2898 = vpop.xlane.xlu0 %2897
        %2899 = vmax.xlane.f32.xlu0 %v2862
        %v2900 = vpop.xlane.xlu0 %2899
        %2901 = vmax.xlane.f32.xlu0 %v2867
        %v2902 = vpop.xlane.xlu0 %2901
        %2903 = vmax.xlane.f32.xlu0 %v2870
        %v2904 = vpop.xlane.xlu0 %2903
        %v2905 = vsub.f32 %v2811, %v2874
        %v2906 = vsub.f32 %v2814, %v2876
        %v2907 = vsub.f32 %v2819, %v2878
        %v2908 = vsub.f32 %v2822, %v2880
        %v2909 = vsub.f32 %v2827, %v2882
        %v2910 = vsub.f32 %v2830, %v2884
        %v2911 = vsub.f32 %v2835, %v2886
        %v2912 = vsub.f32 %v2838, %v2888
        %v2913 = vsub.f32 %v2843, %v2890
        %v2914 = vsub.f32 %v2846, %v2892
        %v2915 = vsub.f32 %v2851, %v2894
        %v2916 = vsub.f32 %v2854, %v2896
        %v2917 = vsub.f32 %v2859, %v2898
        %v2918 = vsub.f32 %v2862, %v2900
        %v2919 = vsub.f32 %v2867, %v2902
        %v2920 = vsub.f32 %v2870, %v2904
        %v2921 = vmul.f32 %v2905, 1.442695
        %v2922 = vpow.pop %v2921
        %v2923 = vmul.f32 %v2906, 1.442695
        %v2924 = vpow.pop %v2923
        %v2925 = vmul.f32 %v2907, 1.442695
        %v2926 = vpow.pop %v2925
        %v2927 = vmul.f32 %v2908, 1.442695
        %v2928 = vpow.pop %v2927
        %v2929 = vmul.f32 %v2909, 1.442695
        %v2930 = vpow.pop %v2929
        %v2931 = vmul.f32 %v2910, 1.442695
        %v2932 = vpow.pop %v2931
        %v2933 = vmul.f32 %v2911, 1.442695
        %v2934 = vpow.pop %v2933
        %v2935 = vmul.f32 %v2912, 1.442695
        %v2936 = vpow.pop %v2935
        %v2937 = vmul.f32 %v2913, 1.442695
        %v2938 = vpow.pop %v2937
        %v2939 = vmul.f32 %v2914, 1.442695
        %v2940 = vpow.pop %v2939
        %v2941 = vmul.f32 %v2915, 1.442695
        %v2942 = vpow.pop %v2941
        %v2943 = vmul.f32 %v2916, 1.442695
        %v2944 = vpow.pop %v2943
        %v2945 = vmul.f32 %v2917, 1.442695
        %v2946 = vpow.pop %v2945
        %v2947 = vmul.f32 %v2918, 1.442695
        %v2948 = vpow.pop %v2947
        %v2949 = vmul.f32 %v2919, 1.442695
        %v2950 = vpow.pop %v2949
        %v2951 = vmul.f32 %v2920, 1.442695
        %v2952 = vpow.pop %v2951
        %2953 = vadd.xlane.f32.xlu0 %v2922
        %v2954 = vpop.xlane.xlu0 %2953
        %2955 = vadd.xlane.f32.xlu0 %v2924
        %v2956 = vpop.xlane.xlu0 %2955
        %2957 = vadd.xlane.f32.xlu0 %v2926
        %v2958 = vpop.xlane.xlu0 %2957
        %2959 = vadd.xlane.f32.xlu0 %v2928
        %v2960 = vpop.xlane.xlu0 %2959
        %2961 = vadd.xlane.f32.xlu0 %v2930
        %v2962 = vpop.xlane.xlu0 %2961
        %2963 = vadd.xlane.f32.xlu0 %v2932
        %v2964 = vpop.xlane.xlu0 %2963
        %2965 = vadd.xlane.f32.xlu0 %v2934
        %v2966 = vpop.xlane.xlu0 %2965
        %2967 = vadd.xlane.f32.xlu0 %v2936
        %v2968 = vpop.xlane.xlu0 %2967
        %2969 = vadd.xlane.f32.xlu0 %v2938
        %v2970 = vpop.xlane.xlu0 %2969
        %2971 = vadd.xlane.f32.xlu0 %v2940
        %v2972 = vpop.xlane.xlu0 %2971
        %2973 = vadd.xlane.f32.xlu0 %v2942
        %v2974 = vpop.xlane.xlu0 %2973
        %2975 = vadd.xlane.f32.xlu0 %v2944
        %v2976 = vpop.xlane.xlu0 %2975
        %2977 = vadd.xlane.f32.xlu0 %v2946
        %v2978 = vpop.xlane.xlu0 %2977
        %2979 = vadd.xlane.f32.xlu0 %v2948
        %v2980 = vpop.xlane.xlu0 %2979
        %2981 = vadd.xlane.f32.xlu0 %v2950
        %v2982 = vpop.xlane.xlu0 %2981
        %2983 = vadd.xlane.f32.xlu0 %v2952
        %v2984 = vpop.xlane.xlu0 %2983
        %v2985 = vrcp.pop %v2954
        %v2986 = vrcp.pop %v2956
        %v2987 = vrcp.pop %v2958
        %v2988 = vrcp.pop %v2960
        %v2989 = vrcp.pop %v2962
        %v2990 = vrcp.pop %v2964
        %v2991 = vrcp.pop %v2966
        %v2992 = vrcp.pop %v2968
        %v2993 = vrcp.pop %v2970
        %v2994 = vrcp.pop %v2972
        %v2995 = vrcp.pop %v2974
        %v2996 = vrcp.pop %v2976
        %v2997 = vrcp.pop %v2978
        %v2998 = vrcp.pop %v2980
        %v2999 = vrcp.pop %v2982
        %v3000 = vrcp.pop %v2984
        %v3001 = vpack.c.bf16 %v2924, %v2922
        %v3002 = vpack.c.bf16 %v2928, %v2926
        %v3003 = vpack.c.bf16 %v2932, %v2930
        %v3004 = vpack.c.bf16 %v2936, %v2934
        %v3005 = vpack.c.bf16 %v2940, %v2938
        %v3006 = vpack.c.bf16 %v2944, %v2942
        %v3007 = vpack.c.bf16 %v2948, %v2946
        %v3008 = vpack.c.bf16 %v2952, %v2950
        %3009 = vmatprep.subr.bf16.mxu0 0
        %3010 = vmatpush1.bf16.msra.mxu0 %v2775
        %3011 = vmatprep.subr.bf16.mxu0 0
        %3012 = vmatpush1.bf16.msra.mxu0 %v2774
        %3013 = vmatprep.subr.bf16.mxu0 0
        %3014 = vmatpush1.bf16.msra.mxu0 %v2773
        %3015 = vmatprep.subr.bf16.mxu0 0
        %3016 = vmatpush1.bf16.msra.mxu0 %v2772
        %3017 = vmatprep.subr.bf16.mxu0 0
        %3018 = vmatpush1.bf16.msra.mxu0 %v2771
        %3019 = vmatprep.subr.bf16.mxu0 0
        %3020 = vmatpush1.bf16.msra.mxu0 %v2770
        %3021 = vmatprep.subr.bf16.mxu0 0
        %3022 = vmatpush1.bf16.msra.mxu0 %v2769
        %3023 = vmatprep.subr.bf16.mxu0 0
        %3024 = vmatpush1.bf16.msra.mxu0 %v2768
        %3025 = vmatprep.subr.bf16.mxu0 0
        %3026 = vmatpush2.bf16.msra.mxu0 0
        %3027 = vmatprep.subr.bf16.mxu0 0
        %3028 = vmatpush2.bf16.msra.mxu0 0
        %3029 = vmatprep.subr.bf16.mxu0 0
        %3030 = vmatpush2.bf16.msra.mxu0 0
        %3031 = vmatprep.subr.bf16.mxu0 0
        %3032 = vmatpush2.bf16.msra.mxu0 0
        %3033 = vmatprep.subr.bf16.mxu0 0
        %3034 = vmatpush2.bf16.msra.mxu0 0
        %3035 = vmatprep.subr.bf16.mxu0 0
        %3036 = vmatpush2.bf16.msra.mxu0 0
        %3037 = vmatprep.subr.bf16.mxu0 0
        %3038 = vmatpush2.bf16.msra.mxu0 0
        %3039 = vmatprep.subr.bf16.mxu0 0
        %3040 = vmatpush2.bf16.msra.mxu0 0
        %3041 = vmatprep.mubr.bf16.mxu0 0
        %3042 = vmatmul.mubr.bf16.gmra.mxu0 %v3001
        %v3043 = vpop.f32.mrf.mxu0
        %v3044 = vadd.f32 0.0, %v3043
        %v3045 = vpop.f32.mrf.mxu0
        %v3046 = vpop.f32.mrf.mxu0
        %v3047 = vadd.f32 0.0, %v3046
        %v3048 = vpop.f32.mrf.mxu0
        %3049 = vmatprep.mubr.bf16.mxu0 0
        %3050 = vmatmul.mubr.bf16.gmra.mxu0 %v3002
        %v3051 = vpop.f32.mrf.mxu0
        %v3052 = vadd.f32 0.0, %v3051
        %v3053 = vpop.f32.mrf.mxu0
        %v3054 = vpop.f32.mrf.mxu0
        %v3055 = vadd.f32 0.0, %v3054
        %v3056 = vpop.f32.mrf.mxu0
        %3057 = vmatprep.mubr.bf16.mxu0 0
        %3058 = vmatmul.mubr.bf16.gmra.mxu0 %v3003
        %v3059 = vpop.f32.mrf.mxu0
        %v3060 = vadd.f32 0.0, %v3059
        %v3061 = vpop.f32.mrf.mxu0
        %v3062 = vpop.f32.mrf.mxu0
        %v3063 = vadd.f32 0.0, %v3062
        %v3064 = vpop.f32.mrf.mxu0
        %3065 = vmatprep.mubr.bf16.mxu0 0
        %3066 = vmatmul.mubr.bf16.gmra.mxu0 %v3004
        %v3067 = vpop.f32.mrf.mxu0
        %v3068 = vadd.f32 0.0, %v3067
        %v3069 = vpop.f32.mrf.mxu0
        %v3070 = vpop.f32.mrf.mxu0
        %v3071 = vadd.f32 0.0, %v3070
        %v3072 = vpop.f32.mrf.mxu0
        %3073 = vmatprep.mubr.bf16.mxu0 0
        %3074 = vmatmul.mubr.bf16.gmra.mxu0 %v3005
        %v3075 = vpop.f32.mrf.mxu0
        %v3076 = vadd.f32 0.0, %v3075
        %v3077 = vpop.f32.mrf.mxu0
        %v3078 = vpop.f32.mrf.mxu0
        %v3079 = vadd.f32 0.0, %v3078
        %v3080 = vpop.f32.mrf.mxu0
        %3081 = vmatprep.mubr.bf16.mxu0 0
        %3082 = vmatmul.mubr.bf16.gmra.mxu0 %v3006
        %v3083 = vpop.f32.mrf.mxu0
        %v3084 = vadd.f32 0.0, %v3083
        %v3085 = vpop.f32.mrf.mxu0
        %v3086 = vpop.f32.mrf.mxu0
        %v3087 = vadd.f32 0.0, %v3086
        %v3088 = vpop.f32.mrf.mxu0
        %3089 = vmatprep.mubr.bf16.mxu0 0
        %3090 = vmatmul.mubr.bf16.gmra.mxu0 %v3007
        %v3091 = vpop.f32.mrf.mxu0
        %v3092 = vadd.f32 0.0, %v3091
        %v3093 = vpop.f32.mrf.mxu0
        %v3094 = vpop.f32.mrf.mxu0
        %v3095 = vadd.f32 0.0, %v3094
        %v3096 = vpop.f32.mrf.mxu0
        %3097 = vmatprep.mubr.bf16.mxu0 0
        %3098 = vmatmul.mubr.bf16.gmra.mxu0 %v3008
        %v3099 = vpop.f32.mrf.mxu0
        %v3100 = vadd.f32 0.0, %v3099
        %v3101 = vpop.f32.mrf.mxu0
        %v3102 = vpop.f32.mrf.mxu0
        %v3103 = vadd.f32 0.0, %v3102
        %v3104 = vpop.f32.mrf.mxu0
        %3105 = vdwg.mxu0
        %v3106 = vmul.f32 %v3044, %v664
        %v3107 = vmul.f32 %v3047, %v665
        %v3108 = vmul.f32 %v3052, %v666
        %v3109 = vmul.f32 %v3055, %v667
        %v3110 = vmul.f32 %v3060, %v668
        %v3111 = vmul.f32 %v3063, %v669
        %v3112 = vmul.f32 %v3068, %v670
        %v3113 = vmul.f32 %v3071, %v671
        %v3114 = vmul.f32 %v3076, %v672
        %v3115 = vmul.f32 %v3079, %v673
        %v3116 = vmul.f32 %v3084, %v674
        %v3117 = vmul.f32 %v3087, %v675
        %v3118 = vmul.f32 %v3092, %v676
        %v3119 = vmul.f32 %v3095, %v677
        %v3120 = vmul.f32 %v3100, %v678
        %v3121 = vmul.f32 %v3103, %v679
        %3138 = vrot.lane.b32.xlu0 %v3106, 96
        %v3139 = vpop.permute.xlu0 %3138
        %3140 = vrot.lane.b32.xlu0 %v3107, 96
        %v3141 = vpop.permute.xlu0 %3140
        %3142 = vrot.lane.b32.xlu0 %v3108, 96
        %v3143 = vpop.permute.xlu0 %3142
        %3144 = vrot.lane.b32.xlu0 %v3109, 96
        %v3145 = vpop.permute.xlu0 %3144
        %3146 = vrot.lane.b32.xlu0 %v3110, 96
        %v3147 = vpop.permute.xlu0 %3146
        %3148 = vrot.lane.b32.xlu0 %v3111, 96
        %v3149 = vpop.permute.xlu0 %3148
        %3150 = vrot.lane.b32.xlu0 %v3112, 96
        %v3151 = vpop.permute.xlu0 %3150
        %3152 = vrot.lane.b32.xlu0 %v3113, 96
        %v3153 = vpop.permute.xlu0 %3152
        %3154 = vrot.lane.b32.xlu0 %v3114, 96
        %v3155 = vpop.permute.xlu0 %3154
        %3156 = vrot.lane.b32.xlu0 %v3115, 96
        %v3157 = vpop.permute.xlu0 %3156
        %3158 = vrot.lane.b32.xlu0 %v3116, 96
        %v3159 = vpop.permute.xlu0 %3158
        %3160 = vrot.lane.b32.xlu0 %v3117, 96
        %v3161 = vpop.permute.xlu0 %3160
        %3162 = vrot.lane.b32.xlu0 %v3118, 96
        %v3163 = vpop.permute.xlu0 %3162
        %3164 = vrot.lane.b32.xlu0 %v3119, 96
        %v3165 = vpop.permute.xlu0 %3164
        %3166 = vrot.lane.b32.xlu0 %v3120, 96
        %v3167 = vpop.permute.xlu0 %3166
        %3168 = vrot.lane.b32.xlu0 %v3121, 96
        %v3169 = vpop.permute.xlu0 %3168
        %v3186 = vadd.f32 %v3106, %v3139
        %v3187 = vadd.f32 %v3107, %v3141
        %v3188 = vadd.f32 %v3108, %v3143
        %v3189 = vadd.f32 %v3109, %v3145
        %v3190 = vadd.f32 %v3110, %v3147
        %v3191 = vadd.f32 %v3111, %v3149
        %v3192 = vadd.f32 %v3112, %v3151
        %v3193 = vadd.f32 %v3113, %v3153
        %v3194 = vadd.f32 %v3114, %v3155
        %v3195 = vadd.f32 %v3115, %v3157
        %v3196 = vadd.f32 %v3116, %v3159
        %v3197 = vadd.f32 %v3117, %v3161
        %v3198 = vadd.f32 %v3118, %v3163
        %v3199 = vadd.f32 %v3119, %v3165
        %v3200 = vadd.f32 %v3120, %v3167
        %v3201 = vadd.f32 %v3121, %v3169
        %3202 = vrot.lane.b32.xlu0 %v3106, 64
        %v3203 = vpop.permute.xlu0 %3202
        %3204 = vrot.lane.b32.xlu0 %v3107, 64
        %v3205 = vpop.permute.xlu0 %3204
        %3206 = vrot.lane.b32.xlu0 %v3108, 64
        %v3207 = vpop.permute.xlu0 %3206
        %3208 = vrot.lane.b32.xlu0 %v3109, 64
        %v3209 = vpop.permute.xlu0 %3208
        %3210 = vrot.lane.b32.xlu0 %v3110, 64
        %v3211 = vpop.permute.xlu0 %3210
        %3212 = vrot.lane.b32.xlu0 %v3111, 64
        %v3213 = vpop.permute.xlu0 %3212
        %3214 = vrot.lane.b32.xlu0 %v3112, 64
        %v3215 = vpop.permute.xlu0 %3214
        %3216 = vrot.lane.b32.xlu0 %v3113, 64
        %v3217 = vpop.permute.xlu0 %3216
        %3218 = vrot.lane.b32.xlu0 %v3114, 64
        %v3219 = vpop.permute.xlu0 %3218
        %3220 = vrot.lane.b32.xlu0 %v3115, 64
        %v3221 = vpop.permute.xlu0 %3220
        %3222 = vrot.lane.b32.xlu0 %v3116, 64
        %v3223 = vpop.permute.xlu0 %3222
        %3224 = vrot.lane.b32.xlu0 %v3117, 64
        %v3225 = vpop.permute.xlu0 %3224
        %3226 = vrot.lane.b32.xlu0 %v3118, 64
        %v3227 = vpop.permute.xlu0 %3226
        %3228 = vrot.lane.b32.xlu0 %v3119, 64
        %v3229 = vpop.permute.xlu0 %3228
        %3230 = vrot.lane.b32.xlu0 %v3120, 64
        %v3231 = vpop.permute.xlu0 %3230
        %3232 = vrot.lane.b32.xlu0 %v3121, 64
        %v3233 = vpop.permute.xlu0 %3232
        %v3250 = vadd.f32 %v3186, %v3203
        %v3251 = vadd.f32 %v3187, %v3205
        %v3252 = vadd.f32 %v3188, %v3207
        %v3253 = vadd.f32 %v3189, %v3209
        %v3254 = vadd.f32 %v3190, %v3211
        %v3255 = vadd.f32 %v3191, %v3213
        %v3256 = vadd.f32 %v3192, %v3215
        %v3257 = vadd.f32 %v3193, %v3217
        %v3258 = vadd.f32 %v3194, %v3219
        %v3259 = vadd.f32 %v3195, %v3221
        %v3260 = vadd.f32 %v3196, %v3223
        %v3261 = vadd.f32 %v3197, %v3225
        %v3262 = vadd.f32 %v3198, %v3227
        %v3263 = vadd.f32 %v3199, %v3229
        %v3264 = vadd.f32 %v3200, %v3231
        %v3265 = vadd.f32 %v3201, %v3233
        %3266 = vrot.lane.b32.xlu0 %v3106, 32
        %v3267 = vpop.permute.xlu0 %3266
        %3268 = vrot.lane.b32.xlu0 %v3107, 32
        %v3269 = vpop.permute.xlu0 %3268
        %3270 = vrot.lane.b32.xlu0 %v3108, 32
        %v3271 = vpop.permute.xlu0 %3270
        %3272 = vrot.lane.b32.xlu0 %v3109, 32
        %v3273 = vpop.permute.xlu0 %3272
        %3274 = vrot.lane.b32.xlu0 %v3110, 32
        %v3275 = vpop.permute.xlu0 %3274
        %3276 = vrot.lane.b32.xlu0 %v3111, 32
        %v3277 = vpop.permute.xlu0 %3276
        %3278 = vrot.lane.b32.xlu0 %v3112, 32
        %v3279 = vpop.permute.xlu0 %3278
        %3280 = vrot.lane.b32.xlu0 %v3113, 32
        %v3281 = vpop.permute.xlu0 %3280
        %3282 = vrot.lane.b32.xlu0 %v3114, 32
        %v3283 = vpop.permute.xlu0 %3282
        %3284 = vrot.lane.b32.xlu0 %v3115, 32
        %v3285 = vpop.permute.xlu0 %3284
        %3286 = vrot.lane.b32.xlu0 %v3116, 32
        %v3287 = vpop.permute.xlu0 %3286
        %3288 = vrot.lane.b32.xlu0 %v3117, 32
        %v3289 = vpop.permute.xlu0 %3288
        %3290 = vrot.lane.b32.xlu0 %v3118, 32
        %v3291 = vpop.permute.xlu0 %3290
        %3292 = vrot.lane.b32.xlu0 %v3119, 32
        %v3293 = vpop.permute.xlu0 %3292
        %3294 = vrot.lane.b32.xlu0 %v3120, 32
        %v3295 = vpop.permute.xlu0 %3294
        %3296 = vrot.lane.b32.xlu0 %v3121, 32
        %v3297 = vpop.permute.xlu0 %3296
        %v3314 = vadd.f32 %v3250, %v3267
        %v3315 = vadd.f32 %v3251, %v3269
        %v3316 = vadd.f32 %v3252, %v3271
        %v3317 = vadd.f32 %v3253, %v3273
        %v3318 = vadd.f32 %v3254, %v3275
        %v3319 = vadd.f32 %v3255, %v3277
        %v3320 = vadd.f32 %v3256, %v3279
        %v3321 = vadd.f32 %v3257, %v3281
        %v3322 = vadd.f32 %v3258, %v3283
        %v3323 = vadd.f32 %v3259, %v3285
        %v3324 = vadd.f32 %v3260, %v3287
        %v3325 = vadd.f32 %v3261, %v3289
        %v3326 = vadd.f32 %v3262, %v3291
        %v3327 = vadd.f32 %v3263, %v3293
        %v3328 = vadd.f32 %v3264, %v3295
        %v3329 = vadd.f32 %v3265, %v3297
        %v3330 = vmul.f32 %v3314, %v2985
        %v3331 = vmul.f32 %v3315, %v2986
        %v3332 = vmul.f32 %v3316, %v2987
        %v3333 = vmul.f32 %v3317, %v2988
        %v3334 = vmul.f32 %v3318, %v2989
        %v3335 = vmul.f32 %v3319, %v2990
        %v3336 = vmul.f32 %v3320, %v2991
        %v3337 = vmul.f32 %v3321, %v2992
        %v3338 = vmul.f32 %v3322, %v2993
        %v3339 = vmul.f32 %v3323, %v2994
        %v3340 = vmul.f32 %v3324, %v2995
        %v3341 = vmul.f32 %v3325, %v2996
        %v3342 = vmul.f32 %v3326, %v2997
        %v3343 = vmul.f32 %v3327, %v2998
        %v3344 = vmul.f32 %v3328, %v2999
        %v3345 = vmul.f32 %v3329, %v3000
        %3362 = vrot.lane.b32.xlu0 %v3330, 32
        %v3363 = vpop.permute.xlu0 %3362
        %3364 = vrot.lane.b32.xlu0 %v3331, 32
        %v3365 = vpop.permute.xlu0 %3364
        %3366 = vrot.lane.b32.xlu0 %v3332, 32
        %v3367 = vpop.permute.xlu0 %3366
        %3368 = vrot.lane.b32.xlu0 %v3333, 32
        %v3369 = vpop.permute.xlu0 %3368
        %3370 = vrot.lane.b32.xlu0 %v3334, 32
        %v3371 = vpop.permute.xlu0 %3370
        %3372 = vrot.lane.b32.xlu0 %v3335, 32
        %v3373 = vpop.permute.xlu0 %3372
        %3374 = vrot.lane.b32.xlu0 %v3336, 32
        %v3375 = vpop.permute.xlu0 %3374
        %3376 = vrot.lane.b32.xlu0 %v3337, 32
        %v3377 = vpop.permute.xlu0 %3376
        %3378 = vrot.lane.b32.xlu0 %v3338, 32
        %v3379 = vpop.permute.xlu0 %3378
        %3380 = vrot.lane.b32.xlu0 %v3339, 32
        %v3381 = vpop.permute.xlu0 %3380
        %3382 = vrot.lane.b32.xlu0 %v3340, 32
        %v3383 = vpop.permute.xlu0 %3382
        %3384 = vrot.lane.b32.xlu0 %v3341, 32
        %v3385 = vpop.permute.xlu0 %3384
        %3386 = vrot.lane.b32.xlu0 %v3342, 32
        %v3387 = vpop.permute.xlu0 %3386
        %3388 = vrot.lane.b32.xlu0 %v3343, 32
        %v3389 = vpop.permute.xlu0 %3388
        %3390 = vrot.lane.b32.xlu0 %v3344, 32
        %v3391 = vpop.permute.xlu0 %3390
        %3392 = vrot.lane.b32.xlu0 %v3345, 32
        %v3393 = vpop.permute.xlu0 %3392
        %vm3410 = vcmask 523520
        %3411 = vst.msk [vmem:[%s323] sm:$0xff] %vm3410, %v3363
        %3412 = vst.msk [vmem:[%s323 + $0x8] sm:$0xff] %vm3410, %v3365
        %3413 = vst.msk [vmem:[%s323 + $0x10] sm:$0xff] %vm3410, %v3367
        %3414 = vst.msk [vmem:[%s323 + $0x18] sm:$0xff] %vm3410, %v3369
        %3415 = vst.msk [vmem:[%s323 + $0x20] sm:$0xff] %vm3410, %v3371
        %3416 = vst.msk [vmem:[%s323 + $0x28] sm:$0xff] %vm3410, %v3373
        %3417 = vst.msk [vmem:[%s323 + $0x30] sm:$0xff] %vm3410, %v3375
        %3418 = vst.msk [vmem:[%s323 + $0x38] sm:$0xff] %vm3410, %v3377
        %3419 = vst.msk [vmem:[%s323 + $0x40] sm:$0xff] %vm3410, %v3379
        %3420 = vst.msk [vmem:[%s323 + $0x48] sm:$0xff] %vm3410, %v3381
        %3421 = vst.msk [vmem:[%s323 + $0x50] sm:$0xff] %vm3410, %v3383
        %3422 = vst.msk [vmem:[%s323 + $0x58] sm:$0xff] %vm3410, %v3385
        %3423 = vst.msk [vmem:[%s323 + $0x60] sm:$0xff] %vm3410, %v3387
        %3424 = vst.msk [vmem:[%s323 + $0x68] sm:$0xff] %vm3410, %v3389
        %3425 = vst.msk [vmem:[%s323 + $0x70] sm:$0xff] %vm3410, %v3391
        %3426 = vst.msk [vmem:[%s323 + $0x78] sm:$0xff] %vm3410, %v3393
        %v3427 = vld [vmem:[%s328] sm:$0xff]
        %v3428 = vld [vmem:[%s328 + $0x8] sm:$0xff]
        %v3429 = vld [vmem:[%s328 + $0x10] sm:$0xff]
        %v3430 = vld [vmem:[%s328 + $0x18] sm:$0xff]
        %v3431 = vld [vmem:[%s328 + $0x20] sm:$0xff]
        %v3432 = vld [vmem:[%s328 + $0x28] sm:$0xff]
        %v3433 = vld [vmem:[%s328 + $0x30] sm:$0xff]
        %v3434 = vld [vmem:[%s328 + $0x38] sm:$0xff]
        %v3435 = vld [vmem:[%s328 + $0x40] sm:$0xff]
        %v3436 = vld [vmem:[%s328 + $0x48] sm:$0xff]
        %v3437 = vld [vmem:[%s328 + $0x50] sm:$0xff]
        %v3438 = vld [vmem:[%s328 + $0x58] sm:$0xff]
        %v3439 = vld [vmem:[%s328 + $0x60] sm:$0xff]
        %v3440 = vld [vmem:[%s328 + $0x68] sm:$0xff]
        %v3441 = vld [vmem:[%s328 + $0x70] sm:$0xff]
        %v3442 = vld [vmem:[%s328 + $0x78] sm:$0xff]
        %v3443 = vld [vmem:[%s270] sm:$0xff]
        %v3444 = vld [vmem:[%s270 + $0x8] sm:$0xff]
        %v3445 = vld [vmem:[%s270 + $0x10] sm:$0xff]
        %v3446 = vld [vmem:[%s270 + $0x18] sm:$0xff]
        %v3447 = vld [vmem:[%s270 + $0x20] sm:$0xff]
        %v3448 = vld [vmem:[%s270 + $0x28] sm:$0xff]
        %v3449 = vld [vmem:[%s270 + $0x30] sm:$0xff]
        %v3450 = vld [vmem:[%s270 + $0x38] sm:$0xff]
        %v3451 = vld [vmem:[%s270 + $0x40] sm:$0xff]
        %v3452 = vld [vmem:[%s270 + $0x48] sm:$0xff]
        %v3453 = vld [vmem:[%s270 + $0x50] sm:$0xff]
        %v3454 = vld [vmem:[%s270 + $0x58] sm:$0xff]
        %v3455 = vld [vmem:[%s270 + $0x60] sm:$0xff]
        %v3456 = vld [vmem:[%s270 + $0x68] sm:$0xff]
        %v3457 = vld [vmem:[%s270 + $0x70] sm:$0xff]
        %v3458 = vld [vmem:[%s270 + $0x78] sm:$0xff]
        %v3459 = vld [vmem:[%s279] sm:$0xff]
        %v3460 = vld [vmem:[%s279 + $0x8] sm:$0xff]
        %v3461 = vld [vmem:[%s279 + $0x10] sm:$0xff]
        %v3462 = vld [vmem:[%s279 + $0x18] sm:$0xff]
        %v3463 = vld [vmem:[%s279 + $0x20] sm:$0xff]
        %v3464 = vld [vmem:[%s279 + $0x28] sm:$0xff]
        %v3465 = vld [vmem:[%s279 + $0x30] sm:$0xff]
        %v3466 = vld [vmem:[%s279 + $0x38] sm:$0xff]
        %v3467 = vld [vmem:[%s279 + $0x40] sm:$0xff]
        %v3468 = vld [vmem:[%s279 + $0x48] sm:$0xff]
        %v3469 = vld [vmem:[%s279 + $0x50] sm:$0xff]
        %v3470 = vld [vmem:[%s279 + $0x58] sm:$0xff]
        %v3471 = vld [vmem:[%s279 + $0x60] sm:$0xff]
        %v3472 = vld [vmem:[%s279 + $0x68] sm:$0xff]
        %v3473 = vld [vmem:[%s279 + $0x70] sm:$0xff]
        %v3474 = vld [vmem:[%s279 + $0x78] sm:$0xff]
        %3491 = vrot.lane.b32.xlu0 %v3427, 64
        %v3492 = vpop.permute.xlu0 %3491
        %3493 = vrot.lane.b32.xlu0 %v3428, 64
        %v3494 = vpop.permute.xlu0 %3493
        %3495 = vrot.lane.b32.xlu0 %v3429, 64
        %v3496 = vpop.permute.xlu0 %3495
        %3497 = vrot.lane.b32.xlu0 %v3430, 64
        %v3498 = vpop.permute.xlu0 %3497
        %3499 = vrot.lane.b32.xlu0 %v3431, 64
        %v3500 = vpop.permute.xlu0 %3499
        %3501 = vrot.lane.b32.xlu0 %v3432, 64
        %v3502 = vpop.permute.xlu0 %3501
        %3503 = vrot.lane.b32.xlu0 %v3433, 64
        %v3504 = vpop.permute.xlu0 %3503
        %3505 = vrot.lane.b32.xlu0 %v3434, 64
        %v3506 = vpop.permute.xlu0 %3505
        %3507 = vrot.lane.b32.xlu0 %v3435, 64
        %v3508 = vpop.permute.xlu0 %3507
        %3509 = vrot.lane.b32.xlu0 %v3436, 64
        %v3510 = vpop.permute.xlu0 %3509
        %3511 = vrot.lane.b32.xlu0 %v3437, 64
        %v3512 = vpop.permute.xlu0 %3511
        %3513 = vrot.lane.b32.xlu0 %v3438, 64
        %v3514 = vpop.permute.xlu0 %3513
        %3515 = vrot.lane.b32.xlu0 %v3439, 64
        %v3516 = vpop.permute.xlu0 %3515
        %3517 = vrot.lane.b32.xlu0 %v3440, 64
        %v3518 = vpop.permute.xlu0 %3517
        %3519 = vrot.lane.b32.xlu0 %v3441, 64
        %v3520 = vpop.permute.xlu0 %3519
        %3521 = vrot.lane.b32.xlu0 %v3442, 64
        %v3522 = vpop.permute.xlu0 %3521
        %3539 = vrot.lane.b32.xlu0 %v3427, 96
        %v3540 = vpop.permute.xlu0 %3539
        %3541 = vrot.lane.b32.xlu0 %v3428, 96
        %v3542 = vpop.permute.xlu0 %3541
        %3543 = vrot.lane.b32.xlu0 %v3429, 96
        %v3544 = vpop.permute.xlu0 %3543
        %3545 = vrot.lane.b32.xlu0 %v3430, 96
        %v3546 = vpop.permute.xlu0 %3545
        %3547 = vrot.lane.b32.xlu0 %v3431, 96
        %v3548 = vpop.permute.xlu0 %3547
        %3549 = vrot.lane.b32.xlu0 %v3432, 96
        %v3550 = vpop.permute.xlu0 %3549
        %3551 = vrot.lane.b32.xlu0 %v3433, 96
        %v3552 = vpop.permute.xlu0 %3551
        %3553 = vrot.lane.b32.xlu0 %v3434, 96
        %v3554 = vpop.permute.xlu0 %3553
        %3555 = vrot.lane.b32.xlu0 %v3435, 96
        %v3556 = vpop.permute.xlu0 %3555
        %3557 = vrot.lane.b32.xlu0 %v3436, 96
        %v3558 = vpop.permute.xlu0 %3557
        %3559 = vrot.lane.b32.xlu0 %v3437, 96
        %v3560 = vpop.permute.xlu0 %3559
        %3561 = vrot.lane.b32.xlu0 %v3438, 96
        %v3562 = vpop.permute.xlu0 %3561
        %3563 = vrot.lane.b32.xlu0 %v3439, 96
        %v3564 = vpop.permute.xlu0 %3563
        %3565 = vrot.lane.b32.xlu0 %v3440, 96
        %v3566 = vpop.permute.xlu0 %3565
        %3567 = vrot.lane.b32.xlu0 %v3441, 96
        %v3568 = vpop.permute.xlu0 %3567
        %3569 = vrot.lane.b32.xlu0 %v3442, 96
        %v3570 = vpop.permute.xlu0 %3569
        %3587 = vrot.lane.b32.xlu0 %v3427, 32
        %v3588 = vpop.permute.xlu0 %3587
        %3589 = vrot.lane.b32.xlu0 %v3428, 32
        %v3590 = vpop.permute.xlu0 %3589
        %3591 = vrot.lane.b32.xlu0 %v3429, 32
        %v3592 = vpop.permute.xlu0 %3591
        %3593 = vrot.lane.b32.xlu0 %v3430, 32
        %v3594 = vpop.permute.xlu0 %3593
        %3595 = vrot.lane.b32.xlu0 %v3431, 32
        %v3596 = vpop.permute.xlu0 %3595
        %3597 = vrot.lane.b32.xlu0 %v3432, 32
        %v3598 = vpop.permute.xlu0 %3597
        %3599 = vrot.lane.b32.xlu0 %v3433, 32
        %v3600 = vpop.permute.xlu0 %3599
        %3601 = vrot.lane.b32.xlu0 %v3434, 32
        %v3602 = vpop.permute.xlu0 %3601
        %3603 = vrot.lane.b32.xlu0 %v3435, 32
        %v3604 = vpop.permute.xlu0 %3603
        %3605 = vrot.lane.b32.xlu0 %v3436, 32
        %v3606 = vpop.permute.xlu0 %3605
        %3607 = vrot.lane.b32.xlu0 %v3437, 32
        %v3608 = vpop.permute.xlu0 %3607
        %3609 = vrot.lane.b32.xlu0 %v3438, 32
        %v3610 = vpop.permute.xlu0 %3609
        %3611 = vrot.lane.b32.xlu0 %v3439, 32
        %v3612 = vpop.permute.xlu0 %3611
        %3613 = vrot.lane.b32.xlu0 %v3440, 32
        %v3614 = vpop.permute.xlu0 %3613
        %3615 = vrot.lane.b32.xlu0 %v3441, 32
        %v3616 = vpop.permute.xlu0 %3615
        %3617 = vrot.lane.b32.xlu0 %v3442, 32
        %v3618 = vpop.permute.xlu0 %3617
        %v3635 = vsel %vm629, %v3492, %v3540
        %v3636 = vsel %vm629, %v3494, %v3542
        %v3637 = vsel %vm629, %v3496, %v3544
        %v3638 = vsel %vm629, %v3498, %v3546
        %v3639 = vsel %vm629, %v3500, %v3548
        %v3640 = vsel %vm629, %v3502, %v3550
        %v3641 = vsel %vm629, %v3504, %v3552
        %v3642 = vsel %vm629, %v3506, %v3554
        %v3643 = vsel %vm629, %v3508, %v3556
        %v3644 = vsel %vm629, %v3510, %v3558
        %v3645 = vsel %vm629, %v3512, %v3560
        %v3646 = vsel %vm629, %v3514, %v3562
        %v3647 = vsel %vm629, %v3516, %v3564
        %v3648 = vsel %vm629, %v3518, %v3566
        %v3649 = vsel %vm629, %v3520, %v3568
        %v3650 = vsel %vm629, %v3522, %v3570
        %v3651 = vsel %vm646, %v3635, %v3427
        %v3652 = vsel %vm646, %v3636, %v3428
        %v3653 = vsel %vm646, %v3637, %v3429
        %v3654 = vsel %vm646, %v3638, %v3430
        %v3655 = vsel %vm646, %v3639, %v3431
        %v3656 = vsel %vm646, %v3640, %v3432
        %v3657 = vsel %vm646, %v3641, %v3433
        %v3658 = vsel %vm646, %v3642, %v3434
        %v3659 = vsel %vm646, %v3643, %v3435
        %v3660 = vsel %vm646, %v3644, %v3436
        %v3661 = vsel %vm646, %v3645, %v3437
        %v3662 = vsel %vm646, %v3646, %v3438
        %v3663 = vsel %vm646, %v3647, %v3439
        %v3664 = vsel %vm646, %v3648, %v3440
        %v3665 = vsel %vm646, %v3649, %v3441
        %v3666 = vsel %vm646, %v3650, %v3442
        %v3667 = vsel %vm663, %v3651, %v3588
        %v3668 = vsel %vm663, %v3652, %v3590
        %v3669 = vsel %vm663, %v3653, %v3592
        %v3670 = vsel %vm663, %v3654, %v3594
        %v3671 = vsel %vm663, %v3655, %v3596
        %v3672 = vsel %vm663, %v3656, %v3598
        %v3673 = vsel %vm663, %v3657, %v3600
        %v3674 = vsel %vm663, %v3658, %v3602
        %v3675 = vsel %vm663, %v3659, %v3604
        %v3676 = vsel %vm663, %v3660, %v3606
        %v3677 = vsel %vm663, %v3661, %v3608
        %v3678 = vsel %vm663, %v3662, %v3610
        %v3679 = vsel %vm663, %v3663, %v3612
        %v3680 = vsel %vm663, %v3664, %v3614
        %v3681 = vsel %vm663, %v3665, %v3616
        %v3682 = vsel %vm663, %v3666, %v3618
        %v3683 = vmul.f32 %v3667, %v680
        %v3684 = vmul.f32 %v3668, %v681
        %v3685 = vmul.f32 %v3669, %v682
        %v3686 = vmul.f32 %v3670, %v683
        %v3687 = vmul.f32 %v3671, %v684
        %v3688 = vmul.f32 %v3672, %v685
        %v3689 = vmul.f32 %v3673, %v686
        %v3690 = vmul.f32 %v3674, %v687
        %v3691 = vmul.f32 %v3675, %v688
        %v3692 = vmul.f32 %v3676, %v689
        %v3693 = vmul.f32 %v3677, %v690
        %v3694 = vmul.f32 %v3678, %v691
        %v3695 = vmul.f32 %v3679, %v692
        %v3696 = vmul.f32 %v3680, %v693
        %v3697 = vmul.f32 %v3681, %v694
        %v3698 = vmul.f32 %v3682, %v695
        %v3699 = vpack.c.bf16 %v3684, %v3683
        %v3700 = vpack.c.bf16 %v3686, %v3685
        %v3701 = vpack.c.bf16 %v3688, %v3687
        %v3702 = vpack.c.bf16 %v3690, %v3689
        %v3703 = vpack.c.bf16 %v3692, %v3691
        %v3704 = vpack.c.bf16 %v3694, %v3693
        %v3705 = vpack.c.bf16 %v3696, %v3695
        %v3706 = vpack.c.bf16 %v3698, %v3697
        %3723 = vrot.lane.b32.xlu0 %v3443, 64
        %v3724 = vpop.permute.xlu0 %3723
        %3725 = vrot.lane.b32.xlu0 %v3444, 64
        %v3726 = vpop.permute.xlu0 %3725
        %3727 = vrot.lane.b32.xlu0 %v3445, 64
        %v3728 = vpop.permute.xlu0 %3727
        %3729 = vrot.lane.b32.xlu0 %v3446, 64
        %v3730 = vpop.permute.xlu0 %3729
        %3731 = vrot.lane.b32.xlu0 %v3447, 64
        %v3732 = vpop.permute.xlu0 %3731
        %3733 = vrot.lane.b32.xlu0 %v3448, 64
        %v3734 = vpop.permute.xlu0 %3733
        %3735 = vrot.lane.b32.xlu0 %v3449, 64
        %v3736 = vpop.permute.xlu0 %3735
        %3737 = vrot.lane.b32.xlu0 %v3450, 64
        %v3738 = vpop.permute.xlu0 %3737
        %3739 = vrot.lane.b32.xlu0 %v3451, 64
        %v3740 = vpop.permute.xlu0 %3739
        %3741 = vrot.lane.b32.xlu0 %v3452, 64
        %v3742 = vpop.permute.xlu0 %3741
        %3743 = vrot.lane.b32.xlu0 %v3453, 64
        %v3744 = vpop.permute.xlu0 %3743
        %3745 = vrot.lane.b32.xlu0 %v3454, 64
        %v3746 = vpop.permute.xlu0 %3745
        %3747 = vrot.lane.b32.xlu0 %v3455, 64
        %v3748 = vpop.permute.xlu0 %3747
        %3749 = vrot.lane.b32.xlu0 %v3456, 64
        %v3750 = vpop.permute.xlu0 %3749
        %3751 = vrot.lane.b32.xlu0 %v3457, 64
        %v3752 = vpop.permute.xlu0 %3751
        %3753 = vrot.lane.b32.xlu0 %v3458, 64
        %v3754 = vpop.permute.xlu0 %3753
        %3771 = vrot.lane.b32.xlu0 %v3443, 96
        %v3772 = vpop.permute.xlu0 %3771
        %3773 = vrot.lane.b32.xlu0 %v3444, 96
        %v3774 = vpop.permute.xlu0 %3773
        %3775 = vrot.lane.b32.xlu0 %v3445, 96
        %v3776 = vpop.permute.xlu0 %3775
        %3777 = vrot.lane.b32.xlu0 %v3446, 96
        %v3778 = vpop.permute.xlu0 %3777
        %3779 = vrot.lane.b32.xlu0 %v3447, 96
        %v3780 = vpop.permute.xlu0 %3779
        %3781 = vrot.lane.b32.xlu0 %v3448, 96
        %v3782 = vpop.permute.xlu0 %3781
        %3783 = vrot.lane.b32.xlu0 %v3449, 96
        %v3784 = vpop.permute.xlu0 %3783
        %3785 = vrot.lane.b32.xlu0 %v3450, 96
        %v3786 = vpop.permute.xlu0 %3785
        %3787 = vrot.lane.b32.xlu0 %v3451, 96
        %v3788 = vpop.permute.xlu0 %3787
        %3789 = vrot.lane.b32.xlu0 %v3452, 96
        %v3790 = vpop.permute.xlu0 %3789
        %3791 = vrot.lane.b32.xlu0 %v3453, 96
        %v3792 = vpop.permute.xlu0 %3791
        %3793 = vrot.lane.b32.xlu0 %v3454, 96
        %v3794 = vpop.permute.xlu0 %3793
        %3795 = vrot.lane.b32.xlu0 %v3455, 96
        %v3796 = vpop.permute.xlu0 %3795
        %3797 = vrot.lane.b32.xlu0 %v3456, 96
        %v3798 = vpop.permute.xlu0 %3797
        %3799 = vrot.lane.b32.xlu0 %v3457, 96
        %v3800 = vpop.permute.xlu0 %3799
        %3801 = vrot.lane.b32.xlu0 %v3458, 96
        %v3802 = vpop.permute.xlu0 %3801
        %3819 = vrot.lane.b32.xlu0 %v3443, 32
        %v3820 = vpop.permute.xlu0 %3819
        %3821 = vrot.lane.b32.xlu0 %v3444, 32
        %v3822 = vpop.permute.xlu0 %3821
        %3823 = vrot.lane.b32.xlu0 %v3445, 32
        %v3824 = vpop.permute.xlu0 %3823
        %3825 = vrot.lane.b32.xlu0 %v3446, 32
        %v3826 = vpop.permute.xlu0 %3825
        %3827 = vrot.lane.b32.xlu0 %v3447, 32
        %v3828 = vpop.permute.xlu0 %3827
        %3829 = vrot.lane.b32.xlu0 %v3448, 32
        %v3830 = vpop.permute.xlu0 %3829
        %3831 = vrot.lane.b32.xlu0 %v3449, 32
        %v3832 = vpop.permute.xlu0 %3831
        %3833 = vrot.lane.b32.xlu0 %v3450, 32
        %v3834 = vpop.permute.xlu0 %3833
        %3835 = vrot.lane.b32.xlu0 %v3451, 32
        %v3836 = vpop.permute.xlu0 %3835
        %3837 = vrot.lane.b32.xlu0 %v3452, 32
        %v3838 = vpop.permute.xlu0 %3837
        %3839 = vrot.lane.b32.xlu0 %v3453, 32
        %v3840 = vpop.permute.xlu0 %3839
        %3841 = vrot.lane.b32.xlu0 %v3454, 32
        %v3842 = vpop.permute.xlu0 %3841
        %3843 = vrot.lane.b32.xlu0 %v3455, 32
        %v3844 = vpop.permute.xlu0 %3843
        %3845 = vrot.lane.b32.xlu0 %v3456, 32
        %v3846 = vpop.permute.xlu0 %3845
        %3847 = vrot.lane.b32.xlu0 %v3457, 32
        %v3848 = vpop.permute.xlu0 %3847
        %3849 = vrot.lane.b32.xlu0 %v3458, 32
        %v3850 = vpop.permute.xlu0 %3849
        %v3867 = vsel %vm629, %v3724, %v3772
        %v3868 = vsel %vm629, %v3726, %v3774
        %v3869 = vsel %vm629, %v3728, %v3776
        %v3870 = vsel %vm629, %v3730, %v3778
        %v3871 = vsel %vm629, %v3732, %v3780
        %v3872 = vsel %vm629, %v3734, %v3782
        %v3873 = vsel %vm629, %v3736, %v3784
        %v3874 = vsel %vm629, %v3738, %v3786
        %v3875 = vsel %vm629, %v3740, %v3788
        %v3876 = vsel %vm629, %v3742, %v3790
        %v3877 = vsel %vm629, %v3744, %v3792
        %v3878 = vsel %vm629, %v3746, %v3794
        %v3879 = vsel %vm629, %v3748, %v3796
        %v3880 = vsel %vm629, %v3750, %v3798
        %v3881 = vsel %vm629, %v3752, %v3800
        %v3882 = vsel %vm629, %v3754, %v3802
        %v3883 = vsel %vm646, %v3867, %v3443
        %v3884 = vsel %vm646, %v3868, %v3444
        %v3885 = vsel %vm646, %v3869, %v3445
        %v3886 = vsel %vm646, %v3870, %v3446
        %v3887 = vsel %vm646, %v3871, %v3447
        %v3888 = vsel %vm646, %v3872, %v3448
        %v3889 = vsel %vm646, %v3873, %v3449
        %v3890 = vsel %vm646, %v3874, %v3450
        %v3891 = vsel %vm646, %v3875, %v3451
        %v3892 = vsel %vm646, %v3876, %v3452
        %v3893 = vsel %vm646, %v3877, %v3453
        %v3894 = vsel %vm646, %v3878, %v3454
        %v3895 = vsel %vm646, %v3879, %v3455
        %v3896 = vsel %vm646, %v3880, %v3456
        %v3897 = vsel %vm646, %v3881, %v3457
        %v3898 = vsel %vm646, %v3882, %v3458
        %v3899 = vsel %vm663, %v3883, %v3820
        %v3900 = vsel %vm663, %v3884, %v3822
        %v3901 = vsel %vm663, %v3885, %v3824
        %v3902 = vsel %vm663, %v3886, %v3826
        %v3903 = vsel %vm663, %v3887, %v3828
        %v3904 = vsel %vm663, %v3888, %v3830
        %v3905 = vsel %vm663, %v3889, %v3832
        %v3906 = vsel %vm663, %v3890, %v3834
        %v3907 = vsel %vm663, %v3891, %v3836
        %v3908 = vsel %vm663, %v3892, %v3838
        %v3909 = vsel %vm663, %v3893, %v3840
        %v3910 = vsel %vm663, %v3894, %v3842
        %v3911 = vsel %vm663, %v3895, %v3844
        %v3912 = vsel %vm663, %v3896, %v3846
        %v3913 = vsel %vm663, %v3897, %v3848
        %v3914 = vsel %vm663, %v3898, %v3850
        %v3915 = vmul.f32 %v3899, %v664
        %v3916 = vmul.f32 %v3900, %v665
        %v3917 = vmul.f32 %v3901, %v666
        %v3918 = vmul.f32 %v3902, %v667
        %v3919 = vmul.f32 %v3903, %v668
        %v3920 = vmul.f32 %v3904, %v669
        %v3921 = vmul.f32 %v3905, %v670
        %v3922 = vmul.f32 %v3906, %v671
        %v3923 = vmul.f32 %v3907, %v672
        %v3924 = vmul.f32 %v3908, %v673
        %v3925 = vmul.f32 %v3909, %v674
        %v3926 = vmul.f32 %v3910, %v675
        %v3927 = vmul.f32 %v3911, %v676
        %v3928 = vmul.f32 %v3912, %v677
        %v3929 = vmul.f32 %v3913, %v678
        %v3930 = vmul.f32 %v3914, %v679
        %v3931 = vpack.c.bf16 %v3916, %v3915
        %v3932 = vpack.c.bf16 %v3918, %v3917
        %v3933 = vpack.c.bf16 %v3920, %v3919
        %v3934 = vpack.c.bf16 %v3922, %v3921
        %v3935 = vpack.c.bf16 %v3924, %v3923
        %v3936 = vpack.c.bf16 %v3926, %v3925
        %v3937 = vpack.c.bf16 %v3928, %v3927
        %v3938 = vpack.c.bf16 %v3930, %v3929
        %3955 = vrot.lane.b32.xlu0 %v3459, 64
        %v3956 = vpop.permute.xlu0 %3955
        %3957 = vrot.lane.b32.xlu0 %v3460, 64
        %v3958 = vpop.permute.xlu0 %3957
        %3959 = vrot.lane.b32.xlu0 %v3461, 64
        %v3960 = vpop.permute.xlu0 %3959
        %3961 = vrot.lane.b32.xlu0 %v3462, 64
        %v3962 = vpop.permute.xlu0 %3961
        %3963 = vrot.lane.b32.xlu0 %v3463, 64
        %v3964 = vpop.permute.xlu0 %3963
        %3965 = vrot.lane.b32.xlu0 %v3464, 64
        %v3966 = vpop.permute.xlu0 %3965
        %3967 = vrot.lane.b32.xlu0 %v3465, 64
        %v3968 = vpop.permute.xlu0 %3967
        %3969 = vrot.lane.b32.xlu0 %v3466, 64
        %v3970 = vpop.permute.xlu0 %3969
        %3971 = vrot.lane.b32.xlu0 %v3467, 64
        %v3972 = vpop.permute.xlu0 %3971
        %3973 = vrot.lane.b32.xlu0 %v3468, 64
        %v3974 = vpop.permute.xlu0 %3973
        %3975 = vrot.lane.b32.xlu0 %v3469, 64
        %v3976 = vpop.permute.xlu0 %3975
        %3977 = vrot.lane.b32.xlu0 %v3470, 64
        %v3978 = vpop.permute.xlu0 %3977
        %3979 = vrot.lane.b32.xlu0 %v3471, 64
        %v3980 = vpop.permute.xlu0 %3979
        %3981 = vrot.lane.b32.xlu0 %v3472, 64
        %v3982 = vpop.permute.xlu0 %3981
        %3983 = vrot.lane.b32.xlu0 %v3473, 64
        %v3984 = vpop.permute.xlu0 %3983
        %3985 = vrot.lane.b32.xlu0 %v3474, 64
        %v3986 = vpop.permute.xlu0 %3985
        %4003 = vrot.lane.b32.xlu0 %v3459, 96
        %v4004 = vpop.permute.xlu0 %4003
        %4005 = vrot.lane.b32.xlu0 %v3460, 96
        %v4006 = vpop.permute.xlu0 %4005
        %4007 = vrot.lane.b32.xlu0 %v3461, 96
        %v4008 = vpop.permute.xlu0 %4007
        %4009 = vrot.lane.b32.xlu0 %v3462, 96
        %v4010 = vpop.permute.xlu0 %4009
        %4011 = vrot.lane.b32.xlu0 %v3463, 96
        %v4012 = vpop.permute.xlu0 %4011
        %4013 = vrot.lane.b32.xlu0 %v3464, 96
        %v4014 = vpop.permute.xlu0 %4013
        %4015 = vrot.lane.b32.xlu0 %v3465, 96
        %v4016 = vpop.permute.xlu0 %4015
        %4017 = vrot.lane.b32.xlu0 %v3466, 96
        %v4018 = vpop.permute.xlu0 %4017
        %4019 = vrot.lane.b32.xlu0 %v3467, 96
        %v4020 = vpop.permute.xlu0 %4019
        %4021 = vrot.lane.b32.xlu0 %v3468, 96
        %v4022 = vpop.permute.xlu0 %4021
        %4023 = vrot.lane.b32.xlu0 %v3469, 96
        %v4024 = vpop.permute.xlu0 %4023
        %4025 = vrot.lane.b32.xlu0 %v3470, 96
        %v4026 = vpop.permute.xlu0 %4025
        %4027 = vrot.lane.b32.xlu0 %v3471, 96
        %v4028 = vpop.permute.xlu0 %4027
        %4029 = vrot.lane.b32.xlu0 %v3472, 96
        %v4030 = vpop.permute.xlu0 %4029
        %4031 = vrot.lane.b32.xlu0 %v3473, 96
        %v4032 = vpop.permute.xlu0 %4031
        %4033 = vrot.lane.b32.xlu0 %v3474, 96
        %v4034 = vpop.permute.xlu0 %4033
        %4051 = vrot.lane.b32.xlu0 %v3459, 32
        %v4052 = vpop.permute.xlu0 %4051
        %4053 = vrot.lane.b32.xlu0 %v3460, 32
        %v4054 = vpop.permute.xlu0 %4053
        %4055 = vrot.lane.b32.xlu0 %v3461, 32
        %v4056 = vpop.permute.xlu0 %4055
        %4057 = vrot.lane.b32.xlu0 %v3462, 32
        %v4058 = vpop.permute.xlu0 %4057
        %4059 = vrot.lane.b32.xlu0 %v3463, 32
        %v4060 = vpop.permute.xlu0 %4059
        %4061 = vrot.lane.b32.xlu0 %v3464, 32
        %v4062 = vpop.permute.xlu0 %4061
        %4063 = vrot.lane.b32.xlu0 %v3465, 32
        %v4064 = vpop.permute.xlu0 %4063
        %4065 = vrot.lane.b32.xlu0 %v3466, 32
        %v4066 = vpop.permute.xlu0 %4065
        %4067 = vrot.lane.b32.xlu0 %v3467, 32
        %v4068 = vpop.permute.xlu0 %4067
        %4069 = vrot.lane.b32.xlu0 %v3468, 32
        %v4070 = vpop.permute.xlu0 %4069
        %4071 = vrot.lane.b32.xlu0 %v3469, 32
        %v4072 = vpop.permute.xlu0 %4071
        %4073 = vrot.lane.b32.xlu0 %v3470, 32
        %v4074 = vpop.permute.xlu0 %4073
        %4075 = vrot.lane.b32.xlu0 %v3471, 32
        %v4076 = vpop.permute.xlu0 %4075
        %4077 = vrot.lane.b32.xlu0 %v3472, 32
        %v4078 = vpop.permute.xlu0 %4077
        %4079 = vrot.lane.b32.xlu0 %v3473, 32
        %v4080 = vpop.permute.xlu0 %4079
        %4081 = vrot.lane.b32.xlu0 %v3474, 32
        %v4082 = vpop.permute.xlu0 %4081
        %v4099 = vsel %vm629, %v3956, %v4004
        %v4100 = vsel %vm629, %v3958, %v4006
        %v4101 = vsel %vm629, %v3960, %v4008
        %v4102 = vsel %vm629, %v3962, %v4010
        %v4103 = vsel %vm629, %v3964, %v4012
        %v4104 = vsel %vm629, %v3966, %v4014
        %v4105 = vsel %vm629, %v3968, %v4016
        %v4106 = vsel %vm629, %v3970, %v4018
        %v4107 = vsel %vm629, %v3972, %v4020
        %v4108 = vsel %vm629, %v3974, %v4022
        %v4109 = vsel %vm629, %v3976, %v4024
        %v4110 = vsel %vm629, %v3978, %v4026
        %v4111 = vsel %vm629, %v3980, %v4028
        %v4112 = vsel %vm629, %v3982, %v4030
        %v4113 = vsel %vm629, %v3984, %v4032
        %v4114 = vsel %vm629, %v3986, %v4034
        %v4115 = vsel %vm646, %v4099, %v3459
        %v4116 = vsel %vm646, %v4100, %v3460
        %v4117 = vsel %vm646, %v4101, %v3461
        %v4118 = vsel %vm646, %v4102, %v3462
        %v4119 = vsel %vm646, %v4103, %v3463
        %v4120 = vsel %vm646, %v4104, %v3464
        %v4121 = vsel %vm646, %v4105, %v3465
        %v4122 = vsel %vm646, %v4106, %v3466
        %v4123 = vsel %vm646, %v4107, %v3467
        %v4124 = vsel %vm646, %v4108, %v3468
        %v4125 = vsel %vm646, %v4109, %v3469
        %v4126 = vsel %vm646, %v4110, %v3470
        %v4127 = vsel %vm646, %v4111, %v3471
        %v4128 = vsel %vm646, %v4112, %v3472
        %v4129 = vsel %vm646, %v4113, %v3473
        %v4130 = vsel %vm646, %v4114, %v3474
        %v4131 = vsel %vm663, %v4115, %v4052
        %v4132 = vsel %vm663, %v4116, %v4054
        %v4133 = vsel %vm663, %v4117, %v4056
        %v4134 = vsel %vm663, %v4118, %v4058
        %v4135 = vsel %vm663, %v4119, %v4060
        %v4136 = vsel %vm663, %v4120, %v4062
        %v4137 = vsel %vm663, %v4121, %v4064
        %v4138 = vsel %vm663, %v4122, %v4066
        %v4139 = vsel %vm663, %v4123, %v4068
        %v4140 = vsel %vm663, %v4124, %v4070
        %v4141 = vsel %vm663, %v4125, %v4072
        %v4142 = vsel %vm663, %v4126, %v4074
        %v4143 = vsel %vm663, %v4127, %v4076
        %v4144 = vsel %vm663, %v4128, %v4078
        %v4145 = vsel %vm663, %v4129, %v4080
        %v4146 = vsel %vm663, %v4130, %v4082
        %v4147 = vmul.f32 %v4131, %v664
        %v4148 = vmul.f32 %v4132, %v665
        %v4149 = vmul.f32 %v4133, %v666
        %v4150 = vmul.f32 %v4134, %v667
        %v4151 = vmul.f32 %v4135, %v668
        %v4152 = vmul.f32 %v4136, %v669
        %v4153 = vmul.f32 %v4137, %v670
        %v4154 = vmul.f32 %v4138, %v671
        %v4155 = vmul.f32 %v4139, %v672
        %v4156 = vmul.f32 %v4140, %v673
        %v4157 = vmul.f32 %v4141, %v674
        %v4158 = vmul.f32 %v4142, %v675
        %v4159 = vmul.f32 %v4143, %v676
        %v4160 = vmul.f32 %v4144, %v677
        %v4161 = vmul.f32 %v4145, %v678
        %v4162 = vmul.f32 %v4146, %v679
        %v4163 = vpack.c.bf16 %v4148, %v4147
        %v4164 = vpack.c.bf16 %v4150, %v4149
        %v4165 = vpack.c.bf16 %v4152, %v4151
        %v4166 = vpack.c.bf16 %v4154, %v4153
        %v4167 = vpack.c.bf16 %v4156, %v4155
        %v4168 = vpack.c.bf16 %v4158, %v4157
        %v4169 = vpack.c.bf16 %v4160, %v4159
        %v4170 = vpack.c.bf16 %v4162, %v4161
        %4171 = vmatprep.subr.bf16.mxu0 0
        %4172 = vmatpush1.bf16.xpose.msra.mxu0 %v3938
        %4173 = vmatprep.subr.bf16.mxu0 0
        %4174 = vmatpush1.bf16.xpose.msra.mxu0 %v3937
        %4175 = vmatprep.subr.bf16.mxu0 0
        %4176 = vmatpush1.bf16.xpose.msra.mxu0 %v3936
        %4177 = vmatprep.subr.bf16.mxu0 0
        %4178 = vmatpush1.bf16.xpose.msra.mxu0 %v3935
        %4179 = vmatprep.subr.bf16.mxu0 0
        %4180 = vmatpush1.bf16.xpose.msra.mxu0 %v3934
        %4181 = vmatprep.subr.bf16.mxu0 0
        %4182 = vmatpush1.bf16.xpose.msra.mxu0 %v3933
        %4183 = vmatprep.subr.bf16.mxu0 0
        %4184 = vmatpush1.bf16.xpose.msra.mxu0 %v3932
        %4185 = vmatprep.subr.bf16.mxu0 0
        %4186 = vmatpush1.bf16.xpose.msra.mxu0 %v3931
        %4187 = vmatprep.subr.bf16.mxu0 0
        %4188 = vmatpush2.bf16.xpose.msra.mxu0 0
        %4189 = vmatprep.subr.bf16.mxu0 0
        %4190 = vmatpush2.bf16.xpose.msra.mxu0 0
        %4191 = vmatprep.subr.bf16.mxu0 0
        %4192 = vmatpush2.bf16.xpose.msra.mxu0 0
        %4193 = vmatprep.subr.bf16.mxu0 0
        %4194 = vmatpush2.bf16.xpose.msra.mxu0 0
        %4195 = vmatprep.subr.bf16.mxu0 0
        %4196 = vmatpush2.bf16.xpose.msra.mxu0 0
        %4197 = vmatprep.subr.bf16.mxu0 0
        %4198 = vmatpush2.bf16.xpose.msra.mxu0 0
        %4199 = vmatprep.subr.bf16.mxu0 0
        %4200 = vmatpush2.bf16.xpose.msra.mxu0 0
        %4201 = vmatprep.subr.bf16.mxu0 0
        %4202 = vmatpush2.bf16.xpose.msra.mxu0 0
        %4203 = vmatprep.mubr.bf16.mxu0 0
        %4204 = vmatmul.mubr.bf16.gmra.mxu0 %v3699
        %v4205 = vpop.f32.mrf.mxu0
        %v4206 = vadd.f32 %v1444, %v4205
        %v4207 = vpop.f32.mrf.mxu0
        %v4208 = vpop.f32.mrf.mxu0
        %v4209 = vadd.f32 %v1444, %v4208
        %v4210 = vpop.f32.mrf.mxu0
        %4211 = vmatprep.mubr.bf16.mxu0 0
        %4212 = vmatmul.mubr.bf16.gmra.mxu0 %v3700
        %v4213 = vpop.f32.mrf.mxu0
        %v4214 = vadd.f32 %v1444, %v4213
        %v4215 = vpop.f32.mrf.mxu0
        %v4216 = vpop.f32.mrf.mxu0
        %v4217 = vadd.f32 %v1444, %v4216
        %v4218 = vpop.f32.mrf.mxu0
        %4219 = vmatprep.mubr.bf16.mxu0 0
        %4220 = vmatmul.mubr.bf16.gmra.mxu0 %v3701
        %v4221 = vpop.f32.mrf.mxu0
        %v4222 = vadd.f32 %v1444, %v4221
        %v4223 = vpop.f32.mrf.mxu0
        %v4224 = vpop.f32.mrf.mxu0
        %v4225 = vadd.f32 %v1444, %v4224
        %v4226 = vpop.f32.mrf.mxu0
        %4227 = vmatprep.mubr.bf16.mxu0 0
        %4228 = vmatmul.mubr.bf16.gmra.mxu0 %v3702
        %v4229 = vpop.f32.mrf.mxu0
        %v4230 = vadd.f32 %v1444, %v4229
        %v4231 = vpop.f32.mrf.mxu0
        %v4232 = vpop.f32.mrf.mxu0
        %v4233 = vadd.f32 %v1444, %v4232
        %v4234 = vpop.f32.mrf.mxu0
        %4235 = vmatprep.mubr.bf16.mxu0 0
        %4236 = vmatmul.mubr.bf16.gmra.mxu0 %v3703
        %v4237 = vpop.f32.mrf.mxu0
        %v4238 = vadd.f32 %v1444, %v4237
        %v4239 = vpop.f32.mrf.mxu0
        %v4240 = vpop.f32.mrf.mxu0
        %v4241 = vadd.f32 %v1444, %v4240
        %v4242 = vpop.f32.mrf.mxu0
        %4243 = vmatprep.mubr.bf16.mxu0 0
        %4244 = vmatmul.mubr.bf16.gmra.mxu0 %v3704
        %v4245 = vpop.f32.mrf.mxu0
        %v4246 = vadd.f32 %v1444, %v4245
        %v4247 = vpop.f32.mrf.mxu0
        %v4248 = vpop.f32.mrf.mxu0
        %v4249 = vadd.f32 %v1444, %v4248
        %v4250 = vpop.f32.mrf.mxu0
        %4251 = vmatprep.mubr.bf16.mxu0 0
        %4252 = vmatmul.mubr.bf16.gmra.mxu0 %v3705
        %v4253 = vpop.f32.mrf.mxu0
        %v4254 = vadd.f32 %v1444, %v4253
        %v4255 = vpop.f32.mrf.mxu0
        %v4256 = vpop.f32.mrf.mxu0
        %v4257 = vadd.f32 %v1444, %v4256
        %v4258 = vpop.f32.mrf.mxu0
        %4259 = vmatprep.mubr.bf16.mxu0 0
        %4260 = vmatmul.mubr.bf16.gmra.mxu0 %v3706
        %v4261 = vpop.f32.mrf.mxu0
        %v4262 = vadd.f32 %v1444, %v4261
        %v4263 = vpop.f32.mrf.mxu0
        %v4264 = vpop.f32.mrf.mxu0
        %v4265 = vadd.f32 %v1444, %v4264
        %v4266 = vpop.f32.mrf.mxu0
        %4267 = vdwg.mxu0
        %4268 = vmax.xlane.f32.xlu0 %v4206
        %v4269 = vpop.xlane.xlu0 %4268
        %4270 = vmax.xlane.f32.xlu0 %v4209
        %v4271 = vpop.xlane.xlu0 %4270
        %4272 = vmax.xlane.f32.xlu0 %v4214
        %v4273 = vpop.xlane.xlu0 %4272
        %4274 = vmax.xlane.f32.xlu0 %v4217
        %v4275 = vpop.xlane.xlu0 %4274
        %4276 = vmax.xlane.f32.xlu0 %v4222
        %v4277 = vpop.xlane.xlu0 %4276
        %4278 = vmax.xlane.f32.xlu0 %v4225
        %v4279 = vpop.xlane.xlu0 %4278
        %4280 = vmax.xlane.f32.xlu0 %v4230
        %v4281 = vpop.xlane.xlu0 %4280
        %4282 = vmax.xlane.f32.xlu0 %v4233
        %v4283 = vpop.xlane.xlu0 %4282
        %4284 = vmax.xlane.f32.xlu0 %v4238
        %v4285 = vpop.xlane.xlu0 %4284
        %4286 = vmax.xlane.f32.xlu0 %v4241
        %v4287 = vpop.xlane.xlu0 %4286
        %4288 = vmax.xlane.f32.xlu0 %v4246
        %v4289 = vpop.xlane.xlu0 %4288
        %4290 = vmax.xlane.f32.xlu0 %v4249
        %v4291 = vpop.xlane.xlu0 %4290
        %4292 = vmax.xlane.f32.xlu0 %v4254
        %v4293 = vpop.xlane.xlu0 %4292
        %4294 = vmax.xlane.f32.xlu0 %v4257
        %v4295 = vpop.xlane.xlu0 %4294
        %4296 = vmax.xlane.f32.xlu0 %v4262
        %v4297 = vpop.xlane.xlu0 %4296
        %4298 = vmax.xlane.f32.xlu0 %v4265
        %v4299 = vpop.xlane.xlu0 %4298
        %v4300 = vsub.f32 %v4206, %v4269
        %v4301 = vsub.f32 %v4209, %v4271
        %v4302 = vsub.f32 %v4214, %v4273
        %v4303 = vsub.f32 %v4217, %v4275
        %v4304 = vsub.f32 %v4222, %v4277
        %v4305 = vsub.f32 %v4225, %v4279
        %v4306 = vsub.f32 %v4230, %v4281
        %v4307 = vsub.f32 %v4233, %v4283
        %v4308 = vsub.f32 %v4238, %v4285
        %v4309 = vsub.f32 %v4241, %v4287
        %v4310 = vsub.f32 %v4246, %v4289
        %v4311 = vsub.f32 %v4249, %v4291
        %v4312 = vsub.f32 %v4254, %v4293
        %v4313 = vsub.f32 %v4257, %v4295
        %v4314 = vsub.f32 %v4262, %v4297
        %v4315 = vsub.f32 %v4265, %v4299
        %v4316 = vmul.f32 %v4300, 1.442695
        %v4317 = vpow.pop %v4316
        %v4318 = vmul.f32 %v4301, 1.442695
        %v4319 = vpow.pop %v4318
        %v4320 = vmul.f32 %v4302, 1.442695
        %v4321 = vpow.pop %v4320
        %v4322 = vmul.f32 %v4303, 1.442695
        %v4323 = vpow.pop %v4322
        %v4324 = vmul.f32 %v4304, 1.442695
        %v4325 = vpow.pop %v4324
        %v4326 = vmul.f32 %v4305, 1.442695
        %v4327 = vpow.pop %v4326
        %v4328 = vmul.f32 %v4306, 1.442695
        %v4329 = vpow.pop %v4328
        %v4330 = vmul.f32 %v4307, 1.442695
        %v4331 = vpow.pop %v4330
        %v4332 = vmul.f32 %v4308, 1.442695
        %v4333 = vpow.pop %v4332
        %v4334 = vmul.f32 %v4309, 1.442695
        %v4335 = vpow.pop %v4334
        %v4336 = vmul.f32 %v4310, 1.442695
        %v4337 = vpow.pop %v4336
        %v4338 = vmul.f32 %v4311, 1.442695
        %v4339 = vpow.pop %v4338
        %v4340 = vmul.f32 %v4312, 1.442695
        %v4341 = vpow.pop %v4340
        %v4342 = vmul.f32 %v4313, 1.442695
        %v4343 = vpow.pop %v4342
        %v4344 = vmul.f32 %v4314, 1.442695
        %v4345 = vpow.pop %v4344
        %v4346 = vmul.f32 %v4315, 1.442695
        %v4347 = vpow.pop %v4346
        %4348 = vadd.xlane.f32.xlu0 %v4317
        %v4349 = vpop.xlane.xlu0 %4348
        %4350 = vadd.xlane.f32.xlu0 %v4319
        %v4351 = vpop.xlane.xlu0 %4350
        %4352 = vadd.xlane.f32.xlu0 %v4321
        %v4353 = vpop.xlane.xlu0 %4352
        %4354 = vadd.xlane.f32.xlu0 %v4323
        %v4355 = vpop.xlane.xlu0 %4354
        %4356 = vadd.xlane.f32.xlu0 %v4325
        %v4357 = vpop.xlane.xlu0 %4356
        %4358 = vadd.xlane.f32.xlu0 %v4327
        %v4359 = vpop.xlane.xlu0 %4358
        %4360 = vadd.xlane.f32.xlu0 %v4329
        %v4361 = vpop.xlane.xlu0 %4360
        %4362 = vadd.xlane.f32.xlu0 %v4331
        %v4363 = vpop.xlane.xlu0 %4362
        %4364 = vadd.xlane.f32.xlu0 %v4333
        %v4365 = vpop.xlane.xlu0 %4364
        %4366 = vadd.xlane.f32.xlu0 %v4335
        %v4367 = vpop.xlane.xlu0 %4366
        %4368 = vadd.xlane.f32.xlu0 %v4337
        %v4369 = vpop.xlane.xlu0 %4368
        %4370 = vadd.xlane.f32.xlu0 %v4339
        %v4371 = vpop.xlane.xlu0 %4370
        %4372 = vadd.xlane.f32.xlu0 %v4341
        %v4373 = vpop.xlane.xlu0 %4372
        %4374 = vadd.xlane.f32.xlu0 %v4343
        %v4375 = vpop.xlane.xlu0 %4374
        %4376 = vadd.xlane.f32.xlu0 %v4345
        %v4377 = vpop.xlane.xlu0 %4376
        %4378 = vadd.xlane.f32.xlu0 %v4347
        %v4379 = vpop.xlane.xlu0 %4378
        %v4380 = vrcp.pop %v4349
        %v4381 = vrcp.pop %v4351
        %v4382 = vrcp.pop %v4353
        %v4383 = vrcp.pop %v4355
        %v4384 = vrcp.pop %v4357
        %v4385 = vrcp.pop %v4359
        %v4386 = vrcp.pop %v4361
        %v4387 = vrcp.pop %v4363
        %v4388 = vrcp.pop %v4365
        %v4389 = vrcp.pop %v4367
        %v4390 = vrcp.pop %v4369
        %v4391 = vrcp.pop %v4371
        %v4392 = vrcp.pop %v4373
        %v4393 = vrcp.pop %v4375
        %v4394 = vrcp.pop %v4377
        %v4395 = vrcp.pop %v4379
        %v4396 = vpack.c.bf16 %v4319, %v4317
        %v4397 = vpack.c.bf16 %v4323, %v4321
        %v4398 = vpack.c.bf16 %v4327, %v4325
        %v4399 = vpack.c.bf16 %v4331, %v4329
        %v4400 = vpack.c.bf16 %v4335, %v4333
        %v4401 = vpack.c.bf16 %v4339, %v4337
        %v4402 = vpack.c.bf16 %v4343, %v4341
        %v4403 = vpack.c.bf16 %v4347, %v4345
        %4404 = vmatprep.subr.bf16.mxu0 0
        %4405 = vmatpush1.bf16.msra.mxu0 %v4170
        %4406 = vmatprep.subr.bf16.mxu0 0
        %4407 = vmatpush1.bf16.msra.mxu0 %v4169
        %4408 = vmatprep.subr.bf16.mxu0 0
        %4409 = vmatpush1.bf16.msra.mxu0 %v4168
        %4410 = vmatprep.subr.bf16.mxu0 0
        %4411 = vmatpush1.bf16.msra.mxu0 %v4167
        %4412 = vmatprep.subr.bf16.mxu0 0
        %4413 = vmatpush1.bf16.msra.mxu0 %v4166
        %4414 = vmatprep.subr.bf16.mxu0 0
        %4415 = vmatpush1.bf16.msra.mxu0 %v4165
        %4416 = vmatprep.subr.bf16.mxu0 0
        %4417 = vmatpush1.bf16.msra.mxu0 %v4164
        %4418 = vmatprep.subr.bf16.mxu0 0
        %4419 = vmatpush1.bf16.msra.mxu0 %v4163
        %4420 = vmatprep.subr.bf16.mxu0 0
        %4421 = vmatpush2.bf16.msra.mxu0 0
        %4422 = vmatprep.subr.bf16.mxu0 0
        %4423 = vmatpush2.bf16.msra.mxu0 0
        %4424 = vmatprep.subr.bf16.mxu0 0
        %4425 = vmatpush2.bf16.msra.mxu0 0
        %4426 = vmatprep.subr.bf16.mxu0 0
        %4427 = vmatpush2.bf16.msra.mxu0 0
        %4428 = vmatprep.subr.bf16.mxu0 0
        %4429 = vmatpush2.bf16.msra.mxu0 0
        %4430 = vmatprep.subr.bf16.mxu0 0
        %4431 = vmatpush2.bf16.msra.mxu0 0
        %4432 = vmatprep.subr.bf16.mxu0 0
        %4433 = vmatpush2.bf16.msra.mxu0 0
        %4434 = vmatprep.subr.bf16.mxu0 0
        %4435 = vmatpush2.bf16.msra.mxu0 0
        %4436 = vmatprep.mubr.bf16.mxu0 0
        %4437 = vmatmul.mubr.bf16.gmra.mxu0 %v4396
        %v4438 = vpop.f32.mrf.mxu0
        %v4439 = vadd.f32 0.0, %v4438
        %v4440 = vpop.f32.mrf.mxu0
        %v4441 = vpop.f32.mrf.mxu0
        %v4442 = vadd.f32 0.0, %v4441
        %v4443 = vpop.f32.mrf.mxu0
        %4444 = vmatprep.mubr.bf16.mxu0 0
        %4445 = vmatmul.mubr.bf16.gmra.mxu0 %v4397
        %v4446 = vpop.f32.mrf.mxu0
        %v4447 = vadd.f32 0.0, %v4446
        %v4448 = vpop.f32.mrf.mxu0
        %v4449 = vpop.f32.mrf.mxu0
        %v4450 = vadd.f32 0.0, %v4449
        %v4451 = vpop.f32.mrf.mxu0
        %4452 = vmatprep.mubr.bf16.mxu0 0
        %4453 = vmatmul.mubr.bf16.gmra.mxu0 %v4398
        %v4454 = vpop.f32.mrf.mxu0
        %v4455 = vadd.f32 0.0, %v4454
        %v4456 = vpop.f32.mrf.mxu0
        %v4457 = vpop.f32.mrf.mxu0
        %v4458 = vadd.f32 0.0, %v4457
        %v4459 = vpop.f32.mrf.mxu0
        %4460 = vmatprep.mubr.bf16.mxu0 0
        %4461 = vmatmul.mubr.bf16.gmra.mxu0 %v4399
        %v4462 = vpop.f32.mrf.mxu0
        %v4463 = vadd.f32 0.0, %v4462
        %v4464 = vpop.f32.mrf.mxu0
        %v4465 = vpop.f32.mrf.mxu0
        %v4466 = vadd.f32 0.0, %v4465
        %v4467 = vpop.f32.mrf.mxu0
        %4468 = vmatprep.mubr.bf16.mxu0 0
        %4469 = vmatmul.mubr.bf16.gmra.mxu0 %v4400
        %v4470 = vpop.f32.mrf.mxu0
        %v4471 = vadd.f32 0.0, %v4470
        %v4472 = vpop.f32.mrf.mxu0
        %v4473 = vpop.f32.mrf.mxu0
        %v4474 = vadd.f32 0.0, %v4473
        %v4475 = vpop.f32.mrf.mxu0
        %4476 = vmatprep.mubr.bf16.mxu0 0
        %4477 = vmatmul.mubr.bf16.gmra.mxu0 %v4401
        %v4478 = vpop.f32.mrf.mxu0
        %v4479 = vadd.f32 0.0, %v4478
        %v4480 = vpop.f32.mrf.mxu0
        %v4481 = vpop.f32.mrf.mxu0
        %v4482 = vadd.f32 0.0, %v4481
        %v4483 = vpop.f32.mrf.mxu0
        %4484 = vmatprep.mubr.bf16.mxu0 0
        %4485 = vmatmul.mubr.bf16.gmra.mxu0 %v4402
        %v4486 = vpop.f32.mrf.mxu0
        %v4487 = vadd.f32 0.0, %v4486
        %v4488 = vpop.f32.mrf.mxu0
        %v4489 = vpop.f32.mrf.mxu0
        %v4490 = vadd.f32 0.0, %v4489
        %v4491 = vpop.f32.mrf.mxu0
        %4492 = vmatprep.mubr.bf16.mxu0 0
        %4493 = vmatmul.mubr.bf16.gmra.mxu0 %v4403
        %v4494 = vpop.f32.mrf.mxu0
        %v4495 = vadd.f32 0.0, %v4494
        %v4496 = vpop.f32.mrf.mxu0
        %v4497 = vpop.f32.mrf.mxu0
        %v4498 = vadd.f32 0.0, %v4497
        %v4499 = vpop.f32.mrf.mxu0
        %4500 = vdwg.mxu0
        %v4501 = vmul.f32 %v4439, %v664
        %v4502 = vmul.f32 %v4442, %v665
        %v4503 = vmul.f32 %v4447, %v666
        %v4504 = vmul.f32 %v4450, %v667
        %v4505 = vmul.f32 %v4455, %v668
        %v4506 = vmul.f32 %v4458, %v669
        %v4507 = vmul.f32 %v4463, %v670
        %v4508 = vmul.f32 %v4466, %v671
        %v4509 = vmul.f32 %v4471, %v672
        %v4510 = vmul.f32 %v4474, %v673
        %v4511 = vmul.f32 %v4479, %v674
        %v4512 = vmul.f32 %v4482, %v675
        %v4513 = vmul.f32 %v4487, %v676
        %v4514 = vmul.f32 %v4490, %v677
        %v4515 = vmul.f32 %v4495, %v678
        %v4516 = vmul.f32 %v4498, %v679
        %4533 = vrot.lane.b32.xlu0 %v4501, 96
        %v4534 = vpop.permute.xlu0 %4533
        %4535 = vrot.lane.b32.xlu0 %v4502, 96
        %v4536 = vpop.permute.xlu0 %4535
        %4537 = vrot.lane.b32.xlu0 %v4503, 96
        %v4538 = vpop.permute.xlu0 %4537
        %4539 = vrot.lane.b32.xlu0 %v4504, 96
        %v4540 = vpop.permute.xlu0 %4539
        %4541 = vrot.lane.b32.xlu0 %v4505, 96
        %v4542 = vpop.permute.xlu0 %4541
        %4543 = vrot.lane.b32.xlu0 %v4506, 96
        %v4544 = vpop.permute.xlu0 %4543
        %4545 = vrot.lane.b32.xlu0 %v4507, 96
        %v4546 = vpop.permute.xlu0 %4545
        %4547 = vrot.lane.b32.xlu0 %v4508, 96
        %v4548 = vpop.permute.xlu0 %4547
        %4549 = vrot.lane.b32.xlu0 %v4509, 96
        %v4550 = vpop.permute.xlu0 %4549
        %4551 = vrot.lane.b32.xlu0 %v4510, 96
        %v4552 = vpop.permute.xlu0 %4551
        %4553 = vrot.lane.b32.xlu0 %v4511, 96
        %v4554 = vpop.permute.xlu0 %4553
        %4555 = vrot.lane.b32.xlu0 %v4512, 96
        %v4556 = vpop.permute.xlu0 %4555
        %4557 = vrot.lane.b32.xlu0 %v4513, 96
        %v4558 = vpop.permute.xlu0 %4557
        %4559 = vrot.lane.b32.xlu0 %v4514, 96
        %v4560 = vpop.permute.xlu0 %4559
        %4561 = vrot.lane.b32.xlu0 %v4515, 96
        %v4562 = vpop.permute.xlu0 %4561
        %4563 = vrot.lane.b32.xlu0 %v4516, 96
        %v4564 = vpop.permute.xlu0 %4563
        %v4581 = vadd.f32 %v4501, %v4534
        %v4582 = vadd.f32 %v4502, %v4536
        %v4583 = vadd.f32 %v4503, %v4538
        %v4584 = vadd.f32 %v4504, %v4540
        %v4585 = vadd.f32 %v4505, %v4542
        %v4586 = vadd.f32 %v4506, %v4544
        %v4587 = vadd.f32 %v4507, %v4546
        %v4588 = vadd.f32 %v4508, %v4548
        %v4589 = vadd.f32 %v4509, %v4550
        %v4590 = vadd.f32 %v4510, %v4552
        %v4591 = vadd.f32 %v4511, %v4554
        %v4592 = vadd.f32 %v4512, %v4556
        %v4593 = vadd.f32 %v4513, %v4558
        %v4594 = vadd.f32 %v4514, %v4560
        %v4595 = vadd.f32 %v4515, %v4562
        %v4596 = vadd.f32 %v4516, %v4564
        %4597 = vrot.lane.b32.xlu0 %v4501, 64
        %v4598 = vpop.permute.xlu0 %4597
        %4599 = vrot.lane.b32.xlu0 %v4502, 64
        %v4600 = vpop.permute.xlu0 %4599
        %4601 = vrot.lane.b32.xlu0 %v4503, 64
        %v4602 = vpop.permute.xlu0 %4601
        %4603 = vrot.lane.b32.xlu0 %v4504, 64
        %v4604 = vpop.permute.xlu0 %4603
        %4605 = vrot.lane.b32.xlu0 %v4505, 64
        %v4606 = vpop.permute.xlu0 %4605
        %4607 = vrot.lane.b32.xlu0 %v4506, 64
        %v4608 = vpop.permute.xlu0 %4607
        %4609 = vrot.lane.b32.xlu0 %v4507, 64
        %v4610 = vpop.permute.xlu0 %4609
        %4611 = vrot.lane.b32.xlu0 %v4508, 64
        %v4612 = vpop.permute.xlu0 %4611
        %4613 = vrot.lane.b32.xlu0 %v4509, 64
        %v4614 = vpop.permute.xlu0 %4613
        %4615 = vrot.lane.b32.xlu0 %v4510, 64
        %v4616 = vpop.permute.xlu0 %4615
        %4617 = vrot.lane.b32.xlu0 %v4511, 64
        %v4618 = vpop.permute.xlu0 %4617
        %4619 = vrot.lane.b32.xlu0 %v4512, 64
        %v4620 = vpop.permute.xlu0 %4619
        %4621 = vrot.lane.b32.xlu0 %v4513, 64
        %v4622 = vpop.permute.xlu0 %4621
        %4623 = vrot.lane.b32.xlu0 %v4514, 64
        %v4624 = vpop.permute.xlu0 %4623
        %4625 = vrot.lane.b32.xlu0 %v4515, 64
        %v4626 = vpop.permute.xlu0 %4625
        %4627 = vrot.lane.b32.xlu0 %v4516, 64
        %v4628 = vpop.permute.xlu0 %4627
        %v4645 = vadd.f32 %v4581, %v4598
        %v4646 = vadd.f32 %v4582, %v4600
        %v4647 = vadd.f32 %v4583, %v4602
        %v4648 = vadd.f32 %v4584, %v4604
        %v4649 = vadd.f32 %v4585, %v4606
        %v4650 = vadd.f32 %v4586, %v4608
        %v4651 = vadd.f32 %v4587, %v4610
        %v4652 = vadd.f32 %v4588, %v4612
        %v4653 = vadd.f32 %v4589, %v4614
        %v4654 = vadd.f32 %v4590, %v4616
        %v4655 = vadd.f32 %v4591, %v4618
        %v4656 = vadd.f32 %v4592, %v4620
        %v4657 = vadd.f32 %v4593, %v4622
        %v4658 = vadd.f32 %v4594, %v4624
        %v4659 = vadd.f32 %v4595, %v4626
        %v4660 = vadd.f32 %v4596, %v4628
        %4661 = vrot.lane.b32.xlu0 %v4501, 32
        %v4662 = vpop.permute.xlu0 %4661
        %4663 = vrot.lane.b32.xlu0 %v4502, 32
        %v4664 = vpop.permute.xlu0 %4663
        %4665 = vrot.lane.b32.xlu0 %v4503, 32
        %v4666 = vpop.permute.xlu0 %4665
        %4667 = vrot.lane.b32.xlu0 %v4504, 32
        %v4668 = vpop.permute.xlu0 %4667
        %4669 = vrot.lane.b32.xlu0 %v4505, 32
        %v4670 = vpop.permute.xlu0 %4669
        %4671 = vrot.lane.b32.xlu0 %v4506, 32
        %v4672 = vpop.permute.xlu0 %4671
        %4673 = vrot.lane.b32.xlu0 %v4507, 32
        %v4674 = vpop.permute.xlu0 %4673
        %4675 = vrot.lane.b32.xlu0 %v4508, 32
        %v4676 = vpop.permute.xlu0 %4675
        %4677 = vrot.lane.b32.xlu0 %v4509, 32
        %v4678 = vpop.permute.xlu0 %4677
        %4679 = vrot.lane.b32.xlu0 %v4510, 32
        %v4680 = vpop.permute.xlu0 %4679
        %4681 = vrot.lane.b32.xlu0 %v4511, 32
        %v4682 = vpop.permute.xlu0 %4681
        %4683 = vrot.lane.b32.xlu0 %v4512, 32
        %v4684 = vpop.permute.xlu0 %4683
        %4685 = vrot.lane.b32.xlu0 %v4513, 32
        %v4686 = vpop.permute.xlu0 %4685
        %4687 = vrot.lane.b32.xlu0 %v4514, 32
        %v4688 = vpop.permute.xlu0 %4687
        %4689 = vrot.lane.b32.xlu0 %v4515, 32
        %v4690 = vpop.permute.xlu0 %4689
        %4691 = vrot.lane.b32.xlu0 %v4516, 32
        %v4692 = vpop.permute.xlu0 %4691
        %v4709 = vadd.f32 %v4645, %v4662
        %v4710 = vadd.f32 %v4646, %v4664
        %v4711 = vadd.f32 %v4647, %v4666
        %v4712 = vadd.f32 %v4648, %v4668
        %v4713 = vadd.f32 %v4649, %v4670
        %v4714 = vadd.f32 %v4650, %v4672
        %v4715 = vadd.f32 %v4651, %v4674
        %v4716 = vadd.f32 %v4652, %v4676
        %v4717 = vadd.f32 %v4653, %v4678
        %v4718 = vadd.f32 %v4654, %v4680
        %v4719 = vadd.f32 %v4655, %v4682
        %v4720 = vadd.f32 %v4656, %v4684
        %v4721 = vadd.f32 %v4657, %v4686
        %v4722 = vadd.f32 %v4658, %v4688
        %v4723 = vadd.f32 %v4659, %v4690
        %v4724 = vadd.f32 %v4660, %v4692
        %v4725 = vmul.f32 %v4709, %v4380
        %v4726 = vmul.f32 %v4710, %v4381
        %v4727 = vmul.f32 %v4711, %v4382
        %v4728 = vmul.f32 %v4712, %v4383
        %v4729 = vmul.f32 %v4713, %v4384
        %v4730 = vmul.f32 %v4714, %v4385
        %v4731 = vmul.f32 %v4715, %v4386
        %v4732 = vmul.f32 %v4716, %v4387
        %v4733 = vmul.f32 %v4717, %v4388
        %v4734 = vmul.f32 %v4718, %v4389
        %v4735 = vmul.f32 %v4719, %v4390
        %v4736 = vmul.f32 %v4720, %v4391
        %v4737 = vmul.f32 %v4721, %v4392
        %v4738 = vmul.f32 %v4722, %v4393
        %v4739 = vmul.f32 %v4723, %v4394
        %v4740 = vmul.f32 %v4724, %v4395
        %4757 = vrot.lane.b32.xlu0 %v4725, 64
        %v4758 = vpop.permute.xlu0 %4757
        %4759 = vrot.lane.b32.xlu0 %v4726, 64
        %v4760 = vpop.permute.xlu0 %4759
        %4761 = vrot.lane.b32.xlu0 %v4727, 64
        %v4762 = vpop.permute.xlu0 %4761
        %4763 = vrot.lane.b32.xlu0 %v4728, 64
        %v4764 = vpop.permute.xlu0 %4763
        %4765 = vrot.lane.b32.xlu0 %v4729, 64
        %v4766 = vpop.permute.xlu0 %4765
        %4767 = vrot.lane.b32.xlu0 %v4730, 64
        %v4768 = vpop.permute.xlu0 %4767
        %4769 = vrot.lane.b32.xlu0 %v4731, 64
        %v4770 = vpop.permute.xlu0 %4769
        %4771 = vrot.lane.b32.xlu0 %v4732, 64
        %v4772 = vpop.permute.xlu0 %4771
        %4773 = vrot.lane.b32.xlu0 %v4733, 64
        %v4774 = vpop.permute.xlu0 %4773
        %4775 = vrot.lane.b32.xlu0 %v4734, 64
        %v4776 = vpop.permute.xlu0 %4775
        %4777 = vrot.lane.b32.xlu0 %v4735, 64
        %v4778 = vpop.permute.xlu0 %4777
        %4779 = vrot.lane.b32.xlu0 %v4736, 64
        %v4780 = vpop.permute.xlu0 %4779
        %4781 = vrot.lane.b32.xlu0 %v4737, 64
        %v4782 = vpop.permute.xlu0 %4781
        %4783 = vrot.lane.b32.xlu0 %v4738, 64
        %v4784 = vpop.permute.xlu0 %4783
        %4785 = vrot.lane.b32.xlu0 %v4739, 64
        %v4786 = vpop.permute.xlu0 %4785
        %4787 = vrot.lane.b32.xlu0 %v4740, 64
        %v4788 = vpop.permute.xlu0 %4787
        %vm4805 = vcmask 785920
        %4806 = vst.msk [vmem:[%s323] sm:$0xff] %vm4805, %v4758
        %4807 = vst.msk [vmem:[%s323 + $0x8] sm:$0xff] %vm4805, %v4760
        %4808 = vst.msk [vmem:[%s323 + $0x10] sm:$0xff] %vm4805, %v4762
        %4809 = vst.msk [vmem:[%s323 + $0x18] sm:$0xff] %vm4805, %v4764
        %4810 = vst.msk [vmem:[%s323 + $0x20] sm:$0xff] %vm4805, %v4766
        %4811 = vst.msk [vmem:[%s323 + $0x28] sm:$0xff] %vm4805, %v4768
        %4812 = vst.msk [vmem:[%s323 + $0x30] sm:$0xff] %vm4805, %v4770
        %4813 = vst.msk [vmem:[%s323 + $0x38] sm:$0xff] %vm4805, %v4772
        %4814 = vst.msk [vmem:[%s323 + $0x40] sm:$0xff] %vm4805, %v4774
        %4815 = vst.msk [vmem:[%s323 + $0x48] sm:$0xff] %vm4805, %v4776
        %4816 = vst.msk [vmem:[%s323 + $0x50] sm:$0xff] %vm4805, %v4778
        %4817 = vst.msk [vmem:[%s323 + $0x58] sm:$0xff] %vm4805, %v4780
        %4818 = vst.msk [vmem:[%s323 + $0x60] sm:$0xff] %vm4805, %v4782
        %4819 = vst.msk [vmem:[%s323 + $0x68] sm:$0xff] %vm4805, %v4784
        %4820 = vst.msk [vmem:[%s323 + $0x70] sm:$0xff] %vm4805, %v4786
        %4821 = vst.msk [vmem:[%s323 + $0x78] sm:$0xff] %vm4805, %v4788
        %v4822 = vld [vmem:[%s328] sm:$0xff]
        %v4823 = vld [vmem:[%s328 + $0x8] sm:$0xff]
        %v4824 = vld [vmem:[%s328 + $0x10] sm:$0xff]
        %v4825 = vld [vmem:[%s328 + $0x18] sm:$0xff]
        %v4826 = vld [vmem:[%s328 + $0x20] sm:$0xff]
        %v4827 = vld [vmem:[%s328 + $0x28] sm:$0xff]
        %v4828 = vld [vmem:[%s328 + $0x30] sm:$0xff]
        %v4829 = vld [vmem:[%s328 + $0x38] sm:$0xff]
        %v4830 = vld [vmem:[%s328 + $0x40] sm:$0xff]
        %v4831 = vld [vmem:[%s328 + $0x48] sm:$0xff]
        %v4832 = vld [vmem:[%s328 + $0x50] sm:$0xff]
        %v4833 = vld [vmem:[%s328 + $0x58] sm:$0xff]
        %v4834 = vld [vmem:[%s328 + $0x60] sm:$0xff]
        %v4835 = vld [vmem:[%s328 + $0x68] sm:$0xff]
        %v4836 = vld [vmem:[%s328 + $0x70] sm:$0xff]
        %v4837 = vld [vmem:[%s328 + $0x78] sm:$0xff]
        %v4838 = vld [vmem:[%s270] sm:$0xff]
        %v4839 = vld [vmem:[%s270 + $0x8] sm:$0xff]
        %v4840 = vld [vmem:[%s270 + $0x10] sm:$0xff]
        %v4841 = vld [vmem:[%s270 + $0x18] sm:$0xff]
        %v4842 = vld [vmem:[%s270 + $0x20] sm:$0xff]
        %v4843 = vld [vmem:[%s270 + $0x28] sm:$0xff]
        %v4844 = vld [vmem:[%s270 + $0x30] sm:$0xff]
        %v4845 = vld [vmem:[%s270 + $0x38] sm:$0xff]
        %v4846 = vld [vmem:[%s270 + $0x40] sm:$0xff]
        %v4847 = vld [vmem:[%s270 + $0x48] sm:$0xff]
        %v4848 = vld [vmem:[%s270 + $0x50] sm:$0xff]
        %v4849 = vld [vmem:[%s270 + $0x58] sm:$0xff]
        %v4850 = vld [vmem:[%s270 + $0x60] sm:$0xff]
        %v4851 = vld [vmem:[%s270 + $0x68] sm:$0xff]
        %v4852 = vld [vmem:[%s270 + $0x70] sm:$0xff]
        %v4853 = vld [vmem:[%s270 + $0x78] sm:$0xff]
        %v4854 = vld [vmem:[%s279] sm:$0xff]
        %v4855 = vld [vmem:[%s279 + $0x8] sm:$0xff]
        %v4856 = vld [vmem:[%s279 + $0x10] sm:$0xff]
        %v4857 = vld [vmem:[%s279 + $0x18] sm:$0xff]
        %v4858 = vld [vmem:[%s279 + $0x20] sm:$0xff]
        %v4859 = vld [vmem:[%s279 + $0x28] sm:$0xff]
        %v4860 = vld [vmem:[%s279 + $0x30] sm:$0xff]
        %v4861 = vld [vmem:[%s279 + $0x38] sm:$0xff]
        %v4862 = vld [vmem:[%s279 + $0x40] sm:$0xff]
        %v4863 = vld [vmem:[%s279 + $0x48] sm:$0xff]
        %v4864 = vld [vmem:[%s279 + $0x50] sm:$0xff]
        %v4865 = vld [vmem:[%s279 + $0x58] sm:$0xff]
        %v4866 = vld [vmem:[%s279 + $0x60] sm:$0xff]
        %v4867 = vld [vmem:[%s279 + $0x68] sm:$0xff]
        %v4868 = vld [vmem:[%s279 + $0x70] sm:$0xff]
        %v4869 = vld [vmem:[%s279 + $0x78] sm:$0xff]
        %4886 = vrot.lane.b32.xlu0 %v4822, 32
        %v4887 = vpop.permute.xlu0 %4886
        %4888 = vrot.lane.b32.xlu0 %v4823, 32
        %v4889 = vpop.permute.xlu0 %4888
        %4890 = vrot.lane.b32.xlu0 %v4824, 32
        %v4891 = vpop.permute.xlu0 %4890
        %4892 = vrot.lane.b32.xlu0 %v4825, 32
        %v4893 = vpop.permute.xlu0 %4892
        %4894 = vrot.lane.b32.xlu0 %v4826, 32
        %v4895 = vpop.permute.xlu0 %4894
        %4896 = vrot.lane.b32.xlu0 %v4827, 32
        %v4897 = vpop.permute.xlu0 %4896
        %4898 = vrot.lane.b32.xlu0 %v4828, 32
        %v4899 = vpop.permute.xlu0 %4898
        %4900 = vrot.lane.b32.xlu0 %v4829, 32
        %v4901 = vpop.permute.xlu0 %4900
        %4902 = vrot.lane.b32.xlu0 %v4830, 32
        %v4903 = vpop.permute.xlu0 %4902
        %4904 = vrot.lane.b32.xlu0 %v4831, 32
        %v4905 = vpop.permute.xlu0 %4904
        %4906 = vrot.lane.b32.xlu0 %v4832, 32
        %v4907 = vpop.permute.xlu0 %4906
        %4908 = vrot.lane.b32.xlu0 %v4833, 32
        %v4909 = vpop.permute.xlu0 %4908
        %4910 = vrot.lane.b32.xlu0 %v4834, 32
        %v4911 = vpop.permute.xlu0 %4910
        %4912 = vrot.lane.b32.xlu0 %v4835, 32
        %v4913 = vpop.permute.xlu0 %4912
        %4914 = vrot.lane.b32.xlu0 %v4836, 32
        %v4915 = vpop.permute.xlu0 %4914
        %4916 = vrot.lane.b32.xlu0 %v4837, 32
        %v4917 = vpop.permute.xlu0 %4916
        %4934 = vrot.lane.b32.xlu0 %v4822, 64
        %v4935 = vpop.permute.xlu0 %4934
        %4936 = vrot.lane.b32.xlu0 %v4823, 64
        %v4937 = vpop.permute.xlu0 %4936
        %4938 = vrot.lane.b32.xlu0 %v4824, 64
        %v4939 = vpop.permute.xlu0 %4938
        %4940 = vrot.lane.b32.xlu0 %v4825, 64
        %v4941 = vpop.permute.xlu0 %4940
        %4942 = vrot.lane.b32.xlu0 %v4826, 64
        %v4943 = vpop.permute.xlu0 %4942
        %4944 = vrot.lane.b32.xlu0 %v4827, 64
        %v4945 = vpop.permute.xlu0 %4944
        %4946 = vrot.lane.b32.xlu0 %v4828, 64
        %v4947 = vpop.permute.xlu0 %4946
        %4948 = vrot.lane.b32.xlu0 %v4829, 64
        %v4949 = vpop.permute.xlu0 %4948
        %4950 = vrot.lane.b32.xlu0 %v4830, 64
        %v4951 = vpop.permute.xlu0 %4950
        %4952 = vrot.lane.b32.xlu0 %v4831, 64
        %v4953 = vpop.permute.xlu0 %4952
        %4954 = vrot.lane.b32.xlu0 %v4832, 64
        %v4955 = vpop.permute.xlu0 %4954
        %4956 = vrot.lane.b32.xlu0 %v4833, 64
        %v4957 = vpop.permute.xlu0 %4956
        %4958 = vrot.lane.b32.xlu0 %v4834, 64
        %v4959 = vpop.permute.xlu0 %4958
        %4960 = vrot.lane.b32.xlu0 %v4835, 64
        %v4961 = vpop.permute.xlu0 %4960
        %4962 = vrot.lane.b32.xlu0 %v4836, 64
        %v4963 = vpop.permute.xlu0 %4962
        %4964 = vrot.lane.b32.xlu0 %v4837, 64
        %v4965 = vpop.permute.xlu0 %4964
        %4982 = vrot.lane.b32.xlu0 %v4822, 96
        %v4983 = vpop.permute.xlu0 %4982
        %4984 = vrot.lane.b32.xlu0 %v4823, 96
        %v4985 = vpop.permute.xlu0 %4984
        %4986 = vrot.lane.b32.xlu0 %v4824, 96
        %v4987 = vpop.permute.xlu0 %4986
        %4988 = vrot.lane.b32.xlu0 %v4825, 96
        %v4989 = vpop.permute.xlu0 %4988
        %4990 = vrot.lane.b32.xlu0 %v4826, 96
        %v4991 = vpop.permute.xlu0 %4990
        %4992 = vrot.lane.b32.xlu0 %v4827, 96
        %v4993 = vpop.permute.xlu0 %4992
        %4994 = vrot.lane.b32.xlu0 %v4828, 96
        %v4995 = vpop.permute.xlu0 %4994
        %4996 = vrot.lane.b32.xlu0 %v4829, 96
        %v4997 = vpop.permute.xlu0 %4996
        %4998 = vrot.lane.b32.xlu0 %v4830, 96
        %v4999 = vpop.permute.xlu0 %4998
        %5000 = vrot.lane.b32.xlu0 %v4831, 96
        %v5001 = vpop.permute.xlu0 %5000
        %5002 = vrot.lane.b32.xlu0 %v4832, 96
        %v5003 = vpop.permute.xlu0 %5002
        %5004 = vrot.lane.b32.xlu0 %v4833, 96
        %v5005 = vpop.permute.xlu0 %5004
        %5006 = vrot.lane.b32.xlu0 %v4834, 96
        %v5007 = vpop.permute.xlu0 %5006
        %5008 = vrot.lane.b32.xlu0 %v4835, 96
        %v5009 = vpop.permute.xlu0 %5008
        %5010 = vrot.lane.b32.xlu0 %v4836, 96
        %v5011 = vpop.permute.xlu0 %5010
        %5012 = vrot.lane.b32.xlu0 %v4837, 96
        %v5013 = vpop.permute.xlu0 %5012
        %v5030 = vsel %vm629, %v4887, %v4935
        %v5031 = vsel %vm629, %v4889, %v4937
        %v5032 = vsel %vm629, %v4891, %v4939
        %v5033 = vsel %vm629, %v4893, %v4941
        %v5034 = vsel %vm629, %v4895, %v4943
        %v5035 = vsel %vm629, %v4897, %v4945
        %v5036 = vsel %vm629, %v4899, %v4947
        %v5037 = vsel %vm629, %v4901, %v4949
        %v5038 = vsel %vm629, %v4903, %v4951
        %v5039 = vsel %vm629, %v4905, %v4953
        %v5040 = vsel %vm629, %v4907, %v4955
        %v5041 = vsel %vm629, %v4909, %v4957
        %v5042 = vsel %vm629, %v4911, %v4959
        %v5043 = vsel %vm629, %v4913, %v4961
        %v5044 = vsel %vm629, %v4915, %v4963
        %v5045 = vsel %vm629, %v4917, %v4965
        %v5046 = vsel %vm646, %v5030, %v4983
        %v5047 = vsel %vm646, %v5031, %v4985
        %v5048 = vsel %vm646, %v5032, %v4987
        %v5049 = vsel %vm646, %v5033, %v4989
        %v5050 = vsel %vm646, %v5034, %v4991
        %v5051 = vsel %vm646, %v5035, %v4993
        %v5052 = vsel %vm646, %v5036, %v4995
        %v5053 = vsel %vm646, %v5037, %v4997
        %v5054 = vsel %vm646, %v5038, %v4999
        %v5055 = vsel %vm646, %v5039, %v5001
        %v5056 = vsel %vm646, %v5040, %v5003
        %v5057 = vsel %vm646, %v5041, %v5005
        %v5058 = vsel %vm646, %v5042, %v5007
        %v5059 = vsel %vm646, %v5043, %v5009
        %v5060 = vsel %vm646, %v5044, %v5011
        %v5061 = vsel %vm646, %v5045, %v5013
        %v5062 = vsel %vm663, %v5046, %v4822
        %v5063 = vsel %vm663, %v5047, %v4823
        %v5064 = vsel %vm663, %v5048, %v4824
        %v5065 = vsel %vm663, %v5049, %v4825
        %v5066 = vsel %vm663, %v5050, %v4826
        %v5067 = vsel %vm663, %v5051, %v4827
        %v5068 = vsel %vm663, %v5052, %v4828
        %v5069 = vsel %vm663, %v5053, %v4829
        %v5070 = vsel %vm663, %v5054, %v4830
        %v5071 = vsel %vm663, %v5055, %v4831
        %v5072 = vsel %vm663, %v5056, %v4832
        %v5073 = vsel %vm663, %v5057, %v4833
        %v5074 = vsel %vm663, %v5058, %v4834
        %v5075 = vsel %vm663, %v5059, %v4835
        %v5076 = vsel %vm663, %v5060, %v4836
        %v5077 = vsel %vm663, %v5061, %v4837
        %v5078 = vmul.f32 %v5062, %v680
        %v5079 = vmul.f32 %v5063, %v681
        %v5080 = vmul.f32 %v5064, %v682
        %v5081 = vmul.f32 %v5065, %v683
        %v5082 = vmul.f32 %v5066, %v684
        %v5083 = vmul.f32 %v5067, %v685
        %v5084 = vmul.f32 %v5068, %v686
        %v5085 = vmul.f32 %v5069, %v687
        %v5086 = vmul.f32 %v5070, %v688
        %v5087 = vmul.f32 %v5071, %v689
        %v5088 = vmul.f32 %v5072, %v690
        %v5089 = vmul.f32 %v5073, %v691
        %v5090 = vmul.f32 %v5074, %v692
        %v5091 = vmul.f32 %v5075, %v693
        %v5092 = vmul.f32 %v5076, %v694
        %v5093 = vmul.f32 %v5077, %v695
        %v5094 = vpack.c.bf16 %v5079, %v5078
        %v5095 = vpack.c.bf16 %v5081, %v5080
        %v5096 = vpack.c.bf16 %v5083, %v5082
        %v5097 = vpack.c.bf16 %v5085, %v5084
        %v5098 = vpack.c.bf16 %v5087, %v5086
        %v5099 = vpack.c.bf16 %v5089, %v5088
        %v5100 = vpack.c.bf16 %v5091, %v5090
        %v5101 = vpack.c.bf16 %v5093, %v5092
        %5118 = vrot.lane.b32.xlu0 %v4838, 32
        %v5119 = vpop.permute.xlu0 %5118
        %5120 = vrot.lane.b32.xlu0 %v4839, 32
        %v5121 = vpop.permute.xlu0 %5120
        %5122 = vrot.lane.b32.xlu0 %v4840, 32
        %v5123 = vpop.permute.xlu0 %5122
        %5124 = vrot.lane.b32.xlu0 %v4841, 32
        %v5125 = vpop.permute.xlu0 %5124
        %5126 = vrot.lane.b32.xlu0 %v4842, 32
        %v5127 = vpop.permute.xlu0 %5126
        %5128 = vrot.lane.b32.xlu0 %v4843, 32
        %v5129 = vpop.permute.xlu0 %5128
        %5130 = vrot.lane.b32.xlu0 %v4844, 32
        %v5131 = vpop.permute.xlu0 %5130
        %5132 = vrot.lane.b32.xlu0 %v4845, 32
        %v5133 = vpop.permute.xlu0 %5132
        %5134 = vrot.lane.b32.xlu0 %v4846, 32
        %v5135 = vpop.permute.xlu0 %5134
        %5136 = vrot.lane.b32.xlu0 %v4847, 32
        %v5137 = vpop.permute.xlu0 %5136
        %5138 = vrot.lane.b32.xlu0 %v4848, 32
        %v5139 = vpop.permute.xlu0 %5138
        %5140 = vrot.lane.b32.xlu0 %v4849, 32
        %v5141 = vpop.permute.xlu0 %5140
        %5142 = vrot.lane.b32.xlu0 %v4850, 32
        %v5143 = vpop.permute.xlu0 %5142
        %5144 = vrot.lane.b32.xlu0 %v4851, 32
        %v5145 = vpop.permute.xlu0 %5144
        %5146 = vrot.lane.b32.xlu0 %v4852, 32
        %v5147 = vpop.permute.xlu0 %5146
        %5148 = vrot.lane.b32.xlu0 %v4853, 32
        %v5149 = vpop.permute.xlu0 %5148
        %5166 = vrot.lane.b32.xlu0 %v4838, 64
        %v5167 = vpop.permute.xlu0 %5166
        %5168 = vrot.lane.b32.xlu0 %v4839, 64
        %v5169 = vpop.permute.xlu0 %5168
        %5170 = vrot.lane.b32.xlu0 %v4840, 64
        %v5171 = vpop.permute.xlu0 %5170
        %5172 = vrot.lane.b32.xlu0 %v4841, 64
        %v5173 = vpop.permute.xlu0 %5172
        %5174 = vrot.lane.b32.xlu0 %v4842, 64
        %v5175 = vpop.permute.xlu0 %5174
        %5176 = vrot.lane.b32.xlu0 %v4843, 64
        %v5177 = vpop.permute.xlu0 %5176
        %5178 = vrot.lane.b32.xlu0 %v4844, 64
        %v5179 = vpop.permute.xlu0 %5178
        %5180 = vrot.lane.b32.xlu0 %v4845, 64
        %v5181 = vpop.permute.xlu0 %5180
        %5182 = vrot.lane.b32.xlu0 %v4846, 64
        %v5183 = vpop.permute.xlu0 %5182
        %5184 = vrot.lane.b32.xlu0 %v4847, 64
        %v5185 = vpop.permute.xlu0 %5184
        %5186 = vrot.lane.b32.xlu0 %v4848, 64
        %v5187 = vpop.permute.xlu0 %5186
        %5188 = vrot.lane.b32.xlu0 %v4849, 64
        %v5189 = vpop.permute.xlu0 %5188
        %5190 = vrot.lane.b32.xlu0 %v4850, 64
        %v5191 = vpop.permute.xlu0 %5190
        %5192 = vrot.lane.b32.xlu0 %v4851, 64
        %v5193 = vpop.permute.xlu0 %5192
        %5194 = vrot.lane.b32.xlu0 %v4852, 64
        %v5195 = vpop.permute.xlu0 %5194
        %5196 = vrot.lane.b32.xlu0 %v4853, 64
        %v5197 = vpop.permute.xlu0 %5196
        %5214 = vrot.lane.b32.xlu0 %v4838, 96
        %v5215 = vpop.permute.xlu0 %5214
        %5216 = vrot.lane.b32.xlu0 %v4839, 96
        %v5217 = vpop.permute.xlu0 %5216
        %5218 = vrot.lane.b32.xlu0 %v4840, 96
        %v5219 = vpop.permute.xlu0 %5218
        %5220 = vrot.lane.b32.xlu0 %v4841, 96
        %v5221 = vpop.permute.xlu0 %5220
        %5222 = vrot.lane.b32.xlu0 %v4842, 96
        %v5223 = vpop.permute.xlu0 %5222
        %5224 = vrot.lane.b32.xlu0 %v4843, 96
        %v5225 = vpop.permute.xlu0 %5224
        %5226 = vrot.lane.b32.xlu0 %v4844, 96
        %v5227 = vpop.permute.xlu0 %5226
        %5228 = vrot.lane.b32.xlu0 %v4845, 96
        %v5229 = vpop.permute.xlu0 %5228
        %5230 = vrot.lane.b32.xlu0 %v4846, 96
        %v5231 = vpop.permute.xlu0 %5230
        %5232 = vrot.lane.b32.xlu0 %v4847, 96
        %v5233 = vpop.permute.xlu0 %5232
        %5234 = vrot.lane.b32.xlu0 %v4848, 96
        %v5235 = vpop.permute.xlu0 %5234
        %5236 = vrot.lane.b32.xlu0 %v4849, 96
        %v5237 = vpop.permute.xlu0 %5236
        %5238 = vrot.lane.b32.xlu0 %v4850, 96
        %v5239 = vpop.permute.xlu0 %5238
        %5240 = vrot.lane.b32.xlu0 %v4851, 96
        %v5241 = vpop.permute.xlu0 %5240
        %5242 = vrot.lane.b32.xlu0 %v4852, 96
        %v5243 = vpop.permute.xlu0 %5242
        %5244 = vrot.lane.b32.xlu0 %v4853, 96
        %v5245 = vpop.permute.xlu0 %5244
        %v5262 = vsel %vm629, %v5119, %v5167
        %v5263 = vsel %vm629, %v5121, %v5169
        %v5264 = vsel %vm629, %v5123, %v5171
        %v5265 = vsel %vm629, %v5125, %v5173
        %v5266 = vsel %vm629, %v5127, %v5175
        %v5267 = vsel %vm629, %v5129, %v5177
        %v5268 = vsel %vm629, %v5131, %v5179
        %v5269 = vsel %vm629, %v5133, %v5181
        %v5270 = vsel %vm629, %v5135, %v5183
        %v5271 = vsel %vm629, %v5137, %v5185
        %v5272 = vsel %vm629, %v5139, %v5187
        %v5273 = vsel %vm629, %v5141, %v5189
        %v5274 = vsel %vm629, %v5143, %v5191
        %v5275 = vsel %vm629, %v5145, %v5193
        %v5276 = vsel %vm629, %v5147, %v5195
        %v5277 = vsel %vm629, %v5149, %v5197
        %v5278 = vsel %vm646, %v5262, %v5215
        %v5279 = vsel %vm646, %v5263, %v5217
        %v5280 = vsel %vm646, %v5264, %v5219
        %v5281 = vsel %vm646, %v5265, %v5221
        %v5282 = vsel %vm646, %v5266, %v5223
        %v5283 = vsel %vm646, %v5267, %v5225
        %v5284 = vsel %vm646, %v5268, %v5227
        %v5285 = vsel %vm646, %v5269, %v5229
        %v5286 = vsel %vm646, %v5270, %v5231
        %v5287 = vsel %vm646, %v5271, %v5233
        %v5288 = vsel %vm646, %v5272, %v5235
        %v5289 = vsel %vm646, %v5273, %v5237
        %v5290 = vsel %vm646, %v5274, %v5239
        %v5291 = vsel %vm646, %v5275, %v5241
        %v5292 = vsel %vm646, %v5276, %v5243
        %v5293 = vsel %vm646, %v5277, %v5245
        %v5294 = vsel %vm663, %v5278, %v4838
        %v5295 = vsel %vm663, %v5279, %v4839
        %v5296 = vsel %vm663, %v5280, %v4840
        %v5297 = vsel %vm663, %v5281, %v4841
        %v5298 = vsel %vm663, %v5282, %v4842
        %v5299 = vsel %vm663, %v5283, %v4843
        %v5300 = vsel %vm663, %v5284, %v4844
        %v5301 = vsel %vm663, %v5285, %v4845
        %v5302 = vsel %vm663, %v5286, %v4846
        %v5303 = vsel %vm663, %v5287, %v4847
        %v5304 = vsel %vm663, %v5288, %v4848
        %v5305 = vsel %vm663, %v5289, %v4849
        %v5306 = vsel %vm663, %v5290, %v4850
        %v5307 = vsel %vm663, %v5291, %v4851
        %v5308 = vsel %vm663, %v5292, %v4852
        %v5309 = vsel %vm663, %v5293, %v4853
        %v5310 = vmul.f32 %v5294, %v664
        %v5311 = vmul.f32 %v5295, %v665
        %v5312 = vmul.f32 %v5296, %v666
        %v5313 = vmul.f32 %v5297, %v667
        %v5314 = vmul.f32 %v5298, %v668
        %v5315 = vmul.f32 %v5299, %v669
        %v5316 = vmul.f32 %v5300, %v670
        %v5317 = vmul.f32 %v5301, %v671
        %v5318 = vmul.f32 %v5302, %v672
        %v5319 = vmul.f32 %v5303, %v673
        %v5320 = vmul.f32 %v5304, %v674
        %v5321 = vmul.f32 %v5305, %v675
        %v5322 = vmul.f32 %v5306, %v676
        %v5323 = vmul.f32 %v5307, %v677
        %v5324 = vmul.f32 %v5308, %v678
        %v5325 = vmul.f32 %v5309, %v679
        %v5326 = vpack.c.bf16 %v5311, %v5310
        %v5327 = vpack.c.bf16 %v5313, %v5312
        %v5328 = vpack.c.bf16 %v5315, %v5314
        %v5329 = vpack.c.bf16 %v5317, %v5316
        %v5330 = vpack.c.bf16 %v5319, %v5318
        %v5331 = vpack.c.bf16 %v5321, %v5320
        %v5332 = vpack.c.bf16 %v5323, %v5322
        %v5333 = vpack.c.bf16 %v5325, %v5324
        %5350 = vrot.lane.b32.xlu0 %v4854, 32
        %v5351 = vpop.permute.xlu0 %5350
        %5352 = vrot.lane.b32.xlu0 %v4855, 32
        %v5353 = vpop.permute.xlu0 %5352
        %5354 = vrot.lane.b32.xlu0 %v4856, 32
        %v5355 = vpop.permute.xlu0 %5354
        %5356 = vrot.lane.b32.xlu0 %v4857, 32
        %v5357 = vpop.permute.xlu0 %5356
        %5358 = vrot.lane.b32.xlu0 %v4858, 32
        %v5359 = vpop.permute.xlu0 %5358
        %5360 = vrot.lane.b32.xlu0 %v4859, 32
        %v5361 = vpop.permute.xlu0 %5360
        %5362 = vrot.lane.b32.xlu0 %v4860, 32
        %v5363 = vpop.permute.xlu0 %5362
        %5364 = vrot.lane.b32.xlu0 %v4861, 32
        %v5365 = vpop.permute.xlu0 %5364
        %5366 = vrot.lane.b32.xlu0 %v4862, 32
        %v5367 = vpop.permute.xlu0 %5366
        %5368 = vrot.lane.b32.xlu0 %v4863, 32
        %v5369 = vpop.permute.xlu0 %5368
        %5370 = vrot.lane.b32.xlu0 %v4864, 32
        %v5371 = vpop.permute.xlu0 %5370
        %5372 = vrot.lane.b32.xlu0 %v4865, 32
        %v5373 = vpop.permute.xlu0 %5372
        %5374 = vrot.lane.b32.xlu0 %v4866, 32
        %v5375 = vpop.permute.xlu0 %5374
        %5376 = vrot.lane.b32.xlu0 %v4867, 32
        %v5377 = vpop.permute.xlu0 %5376
        %5378 = vrot.lane.b32.xlu0 %v4868, 32
        %v5379 = vpop.permute.xlu0 %5378
        %5380 = vrot.lane.b32.xlu0 %v4869, 32
        %v5381 = vpop.permute.xlu0 %5380
        %5398 = vrot.lane.b32.xlu0 %v4854, 64
        %v5399 = vpop.permute.xlu0 %5398
        %5400 = vrot.lane.b32.xlu0 %v4855, 64
        %v5401 = vpop.permute.xlu0 %5400
        %5402 = vrot.lane.b32.xlu0 %v4856, 64
        %v5403 = vpop.permute.xlu0 %5402
        %5404 = vrot.lane.b32.xlu0 %v4857, 64
        %v5405 = vpop.permute.xlu0 %5404
        %5406 = vrot.lane.b32.xlu0 %v4858, 64
        %v5407 = vpop.permute.xlu0 %5406
        %5408 = vrot.lane.b32.xlu0 %v4859, 64
        %v5409 = vpop.permute.xlu0 %5408
        %5410 = vrot.lane.b32.xlu0 %v4860, 64
        %v5411 = vpop.permute.xlu0 %5410
        %5412 = vrot.lane.b32.xlu0 %v4861, 64
        %v5413 = vpop.permute.xlu0 %5412
        %5414 = vrot.lane.b32.xlu0 %v4862, 64
        %v5415 = vpop.permute.xlu0 %5414
        %5416 = vrot.lane.b32.xlu0 %v4863, 64
        %v5417 = vpop.permute.xlu0 %5416
        %5418 = vrot.lane.b32.xlu0 %v4864, 64
        %v5419 = vpop.permute.xlu0 %5418
        %5420 = vrot.lane.b32.xlu0 %v4865, 64
        %v5421 = vpop.permute.xlu0 %5420
        %5422 = vrot.lane.b32.xlu0 %v4866, 64
        %v5423 = vpop.permute.xlu0 %5422
        %5424 = vrot.lane.b32.xlu0 %v4867, 64
        %v5425 = vpop.permute.xlu0 %5424
        %5426 = vrot.lane.b32.xlu0 %v4868, 64
        %v5427 = vpop.permute.xlu0 %5426
        %5428 = vrot.lane.b32.xlu0 %v4869, 64
        %v5429 = vpop.permute.xlu0 %5428
        %5446 = vrot.lane.b32.xlu0 %v4854, 96
        %v5447 = vpop.permute.xlu0 %5446
        %5448 = vrot.lane.b32.xlu0 %v4855, 96
        %v5449 = vpop.permute.xlu0 %5448
        %5450 = vrot.lane.b32.xlu0 %v4856, 96
        %v5451 = vpop.permute.xlu0 %5450
        %5452 = vrot.lane.b32.xlu0 %v4857, 96
        %v5453 = vpop.permute.xlu0 %5452
        %5454 = vrot.lane.b32.xlu0 %v4858, 96
        %v5455 = vpop.permute.xlu0 %5454
        %5456 = vrot.lane.b32.xlu0 %v4859, 96
        %v5457 = vpop.permute.xlu0 %5456
        %5458 = vrot.lane.b32.xlu0 %v4860, 96
        %v5459 = vpop.permute.xlu0 %5458
        %5460 = vrot.lane.b32.xlu0 %v4861, 96
        %v5461 = vpop.permute.xlu0 %5460
        %5462 = vrot.lane.b32.xlu0 %v4862, 96
        %v5463 = vpop.permute.xlu0 %5462
        %5464 = vrot.lane.b32.xlu0 %v4863, 96
        %v5465 = vpop.permute.xlu0 %5464
        %5466 = vrot.lane.b32.xlu0 %v4864, 96
        %v5467 = vpop.permute.xlu0 %5466
        %5468 = vrot.lane.b32.xlu0 %v4865, 96
        %v5469 = vpop.permute.xlu0 %5468
        %5470 = vrot.lane.b32.xlu0 %v4866, 96
        %v5471 = vpop.permute.xlu0 %5470
        %5472 = vrot.lane.b32.xlu0 %v4867, 96
        %v5473 = vpop.permute.xlu0 %5472
        %5474 = vrot.lane.b32.xlu0 %v4868, 96
        %v5475 = vpop.permute.xlu0 %5474
        %5476 = vrot.lane.b32.xlu0 %v4869, 96
        %v5477 = vpop.permute.xlu0 %5476
        %v5494 = vsel %vm629, %v5351, %v5399
        %v5495 = vsel %vm629, %v5353, %v5401
        %v5496 = vsel %vm629, %v5355, %v5403
        %v5497 = vsel %vm629, %v5357, %v5405
        %v5498 = vsel %vm629, %v5359, %v5407
        %v5499 = vsel %vm629, %v5361, %v5409
        %v5500 = vsel %vm629, %v5363, %v5411
        %v5501 = vsel %vm629, %v5365, %v5413
        %v5502 = vsel %vm629, %v5367, %v5415
        %v5503 = vsel %vm629, %v5369, %v5417
        %v5504 = vsel %vm629, %v5371, %v5419
        %v5505 = vsel %vm629, %v5373, %v5421
        %v5506 = vsel %vm629, %v5375, %v5423
        %v5507 = vsel %vm629, %v5377, %v5425
        %v5508 = vsel %vm629, %v5379, %v5427
        %v5509 = vsel %vm629, %v5381, %v5429
        %v5510 = vsel %vm646, %v5494, %v5447
        %v5511 = vsel %vm646, %v5495, %v5449
        %v5512 = vsel %vm646, %v5496, %v5451
        %v5513 = vsel %vm646, %v5497, %v5453
        %v5514 = vsel %vm646, %v5498, %v5455
        %v5515 = vsel %vm646, %v5499, %v5457
        %v5516 = vsel %vm646, %v5500, %v5459
        %v5517 = vsel %vm646, %v5501, %v5461
        %v5518 = vsel %vm646, %v5502, %v5463
        %v5519 = vsel %vm646, %v5503, %v5465
        %v5520 = vsel %vm646, %v5504, %v5467
        %v5521 = vsel %vm646, %v5505, %v5469
        %v5522 = vsel %vm646, %v5506, %v5471
        %v5523 = vsel %vm646, %v5507, %v5473
        %v5524 = vsel %vm646, %v5508, %v5475
        %v5525 = vsel %vm646, %v5509, %v5477
        %v5526 = vsel %vm663, %v5510, %v4854
        %v5527 = vsel %vm663, %v5511, %v4855
        %v5528 = vsel %vm663, %v5512, %v4856
        %v5529 = vsel %vm663, %v5513, %v4857
        %v5530 = vsel %vm663, %v5514, %v4858
        %v5531 = vsel %vm663, %v5515, %v4859
        %v5532 = vsel %vm663, %v5516, %v4860
        %v5533 = vsel %vm663, %v5517, %v4861
        %v5534 = vsel %vm663, %v5518, %v4862
        %v5535 = vsel %vm663, %v5519, %v4863
        %v5536 = vsel %vm663, %v5520, %v4864
        %v5537 = vsel %vm663, %v5521, %v4865
        %v5538 = vsel %vm663, %v5522, %v4866
        %v5539 = vsel %vm663, %v5523, %v4867
        %v5540 = vsel %vm663, %v5524, %v4868
        %v5541 = vsel %vm663, %v5525, %v4869
        %v5542 = vmul.f32 %v5526, %v664
        %v5543 = vmul.f32 %v5527, %v665
        %v5544 = vmul.f32 %v5528, %v666
        %v5545 = vmul.f32 %v5529, %v667
        %v5546 = vmul.f32 %v5530, %v668
        %v5547 = vmul.f32 %v5531, %v669
        %v5548 = vmul.f32 %v5532, %v670
        %v5549 = vmul.f32 %v5533, %v671
        %v5550 = vmul.f32 %v5534, %v672
        %v5551 = vmul.f32 %v5535, %v673
        %v5552 = vmul.f32 %v5536, %v674
        %v5553 = vmul.f32 %v5537, %v675
        %v5554 = vmul.f32 %v5538, %v676
        %v5555 = vmul.f32 %v5539, %v677
        %v5556 = vmul.f32 %v5540, %v678
        %v5557 = vmul.f32 %v5541, %v679
        %v5558 = vpack.c.bf16 %v5543, %v5542
        %v5559 = vpack.c.bf16 %v5545, %v5544
        %v5560 = vpack.c.bf16 %v5547, %v5546
        %v5561 = vpack.c.bf16 %v5549, %v5548
        %v5562 = vpack.c.bf16 %v5551, %v5550
        %v5563 = vpack.c.bf16 %v5553, %v5552
        %v5564 = vpack.c.bf16 %v5555, %v5554
        %v5565 = vpack.c.bf16 %v5557, %v5556
        %5566 = vmatprep.subr.bf16.mxu0 0
        %5567 = vmatpush1.bf16.xpose.msra.mxu0 %v5333
        %5568 = vmatprep.subr.bf16.mxu0 0
        %5569 = vmatpush1.bf16.xpose.msra.mxu0 %v5332
        %5570 = vmatprep.subr.bf16.mxu0 0
        %5571 = vmatpush1.bf16.xpose.msra.mxu0 %v5331
        %5572 = vmatprep.subr.bf16.mxu0 0
        %5573 = vmatpush1.bf16.xpose.msra.mxu0 %v5330
        %5574 = vmatprep.subr.bf16.mxu0 0
        %5575 = vmatpush1.bf16.xpose.msra.mxu0 %v5329
        %5576 = vmatprep.subr.bf16.mxu0 0
        %5577 = vmatpush1.bf16.xpose.msra.mxu0 %v5328
        %5578 = vmatprep.subr.bf16.mxu0 0
        %5579 = vmatpush1.bf16.xpose.msra.mxu0 %v5327
        %5580 = vmatprep.subr.bf16.mxu0 0
        %5581 = vmatpush1.bf16.xpose.msra.mxu0 %v5326
        %5582 = vmatprep.subr.bf16.mxu0 0
        %5583 = vmatpush2.bf16.xpose.msra.mxu0 0
        %5584 = vmatprep.subr.bf16.mxu0 0
        %5585 = vmatpush2.bf16.xpose.msra.mxu0 0
        %5586 = vmatprep.subr.bf16.mxu0 0
        %5587 = vmatpush2.bf16.xpose.msra.mxu0 0
        %5588 = vmatprep.subr.bf16.mxu0 0
        %5589 = vmatpush2.bf16.xpose.msra.mxu0 0
        %5590 = vmatprep.subr.bf16.mxu0 0
        %5591 = vmatpush2.bf16.xpose.msra.mxu0 0
        %5592 = vmatprep.subr.bf16.mxu0 0
        %5593 = vmatpush2.bf16.xpose.msra.mxu0 0
        %5594 = vmatprep.subr.bf16.mxu0 0
        %5595 = vmatpush2.bf16.xpose.msra.mxu0 0
        %5596 = vmatprep.subr.bf16.mxu0 0
        %5597 = vmatpush2.bf16.xpose.msra.mxu0 0
        %5598 = vmatprep.mubr.bf16.mxu0 0
        %5599 = vmatmul.mubr.bf16.gmra.mxu0 %v5094
        %v5600 = vpop.f32.mrf.mxu0
        %v5601 = vadd.f32 %v1444, %v5600
        %v5602 = vpop.f32.mrf.mxu0
        %v5603 = vpop.f32.mrf.mxu0
        %v5604 = vadd.f32 %v1444, %v5603
        %v5605 = vpop.f32.mrf.mxu0
        %5606 = vmatprep.mubr.bf16.mxu0 0
        %5607 = vmatmul.mubr.bf16.gmra.mxu0 %v5095
        %v5608 = vpop.f32.mrf.mxu0
        %v5609 = vadd.f32 %v1444, %v5608
        %v5610 = vpop.f32.mrf.mxu0
        %v5611 = vpop.f32.mrf.mxu0
        %v5612 = vadd.f32 %v1444, %v5611
        %v5613 = vpop.f32.mrf.mxu0
        %5614 = vmatprep.mubr.bf16.mxu0 0
        %5615 = vmatmul.mubr.bf16.gmra.mxu0 %v5096
        %v5616 = vpop.f32.mrf.mxu0
        %v5617 = vadd.f32 %v1444, %v5616
        %v5618 = vpop.f32.mrf.mxu0
        %v5619 = vpop.f32.mrf.mxu0
        %v5620 = vadd.f32 %v1444, %v5619
        %v5621 = vpop.f32.mrf.mxu0
        %5622 = vmatprep.mubr.bf16.mxu0 0
        %5623 = vmatmul.mubr.bf16.gmra.mxu0 %v5097
        %v5624 = vpop.f32.mrf.mxu0
        %v5625 = vadd.f32 %v1444, %v5624
        %v5626 = vpop.f32.mrf.mxu0
        %v5627 = vpop.f32.mrf.mxu0
        %v5628 = vadd.f32 %v1444, %v5627
        %v5629 = vpop.f32.mrf.mxu0
        %5630 = vmatprep.mubr.bf16.mxu0 0
        %5631 = vmatmul.mubr.bf16.gmra.mxu0 %v5098
        %v5632 = vpop.f32.mrf.mxu0
        %v5633 = vadd.f32 %v1444, %v5632
        %v5634 = vpop.f32.mrf.mxu0
        %v5635 = vpop.f32.mrf.mxu0
        %v5636 = vadd.f32 %v1444, %v5635
        %v5637 = vpop.f32.mrf.mxu0
        %5638 = vmatprep.mubr.bf16.mxu0 0
        %5639 = vmatmul.mubr.bf16.gmra.mxu0 %v5099
        %v5640 = vpop.f32.mrf.mxu0
        %v5641 = vadd.f32 %v1444, %v5640
        %v5642 = vpop.f32.mrf.mxu0
        %v5643 = vpop.f32.mrf.mxu0
        %v5644 = vadd.f32 %v1444, %v5643
        %v5645 = vpop.f32.mrf.mxu0
        %5646 = vmatprep.mubr.bf16.mxu0 0
        %5647 = vmatmul.mubr.bf16.gmra.mxu0 %v5100
        %v5648 = vpop.f32.mrf.mxu0
        %v5649 = vadd.f32 %v1444, %v5648
        %v5650 = vpop.f32.mrf.mxu0
        %v5651 = vpop.f32.mrf.mxu0
        %v5652 = vadd.f32 %v1444, %v5651
        %v5653 = vpop.f32.mrf.mxu0
        %5654 = vmatprep.mubr.bf16.mxu0 0
        %5655 = vmatmul.mubr.bf16.gmra.mxu0 %v5101
        %v5656 = vpop.f32.mrf.mxu0
        %v5657 = vadd.f32 %v1444, %v5656
        %v5658 = vpop.f32.mrf.mxu0
        %v5659 = vpop.f32.mrf.mxu0
        %v5660 = vadd.f32 %v1444, %v5659
        %v5661 = vpop.f32.mrf.mxu0
        %5662 = vdwg.mxu0
        %5663 = vmax.xlane.f32.xlu0 %v5601
        %v5664 = vpop.xlane.xlu0 %5663
        %5665 = vmax.xlane.f32.xlu0 %v5604
        %v5666 = vpop.xlane.xlu0 %5665
        %5667 = vmax.xlane.f32.xlu0 %v5609
        %v5668 = vpop.xlane.xlu0 %5667
        %5669 = vmax.xlane.f32.xlu0 %v5612
        %v5670 = vpop.xlane.xlu0 %5669
        %5671 = vmax.xlane.f32.xlu0 %v5617
        %v5672 = vpop.xlane.xlu0 %5671
        %5673 = vmax.xlane.f32.xlu0 %v5620
        %v5674 = vpop.xlane.xlu0 %5673
        %5675 = vmax.xlane.f32.xlu0 %v5625
        %v5676 = vpop.xlane.xlu0 %5675
        %5677 = vmax.xlane.f32.xlu0 %v5628
        %v5678 = vpop.xlane.xlu0 %5677
        %5679 = vmax.xlane.f32.xlu0 %v5633
        %v5680 = vpop.xlane.xlu0 %5679
        %5681 = vmax.xlane.f32.xlu0 %v5636
        %v5682 = vpop.xlane.xlu0 %5681
        %5683 = vmax.xlane.f32.xlu0 %v5641
        %v5684 = vpop.xlane.xlu0 %5683
        %5685 = vmax.xlane.f32.xlu0 %v5644
        %v5686 = vpop.xlane.xlu0 %5685
        %5687 = vmax.xlane.f32.xlu0 %v5649
        %v5688 = vpop.xlane.xlu0 %5687
        %5689 = vmax.xlane.f32.xlu0 %v5652
        %v5690 = vpop.xlane.xlu0 %5689
        %5691 = vmax.xlane.f32.xlu0 %v5657
        %v5692 = vpop.xlane.xlu0 %5691
        %5693 = vmax.xlane.f32.xlu0 %v5660
        %v5694 = vpop.xlane.xlu0 %5693
        %v5695 = vsub.f32 %v5601, %v5664
        %v5696 = vsub.f32 %v5604, %v5666
        %v5697 = vsub.f32 %v5609, %v5668
        %v5698 = vsub.f32 %v5612, %v5670
        %v5699 = vsub.f32 %v5617, %v5672
        %v5700 = vsub.f32 %v5620, %v5674
        %v5701 = vsub.f32 %v5625, %v5676
        %v5702 = vsub.f32 %v5628, %v5678
        %v5703 = vsub.f32 %v5633, %v5680
        %v5704 = vsub.f32 %v5636, %v5682
        %v5705 = vsub.f32 %v5641, %v5684
        %v5706 = vsub.f32 %v5644, %v5686
        %v5707 = vsub.f32 %v5649, %v5688
        %v5708 = vsub.f32 %v5652, %v5690
        %v5709 = vsub.f32 %v5657, %v5692
        %v5710 = vsub.f32 %v5660, %v5694
        %v5711 = vmul.f32 %v5695, 1.442695
        %v5712 = vpow.pop %v5711
        %v5713 = vmul.f32 %v5696, 1.442695
        %v5714 = vpow.pop %v5713
        %v5715 = vmul.f32 %v5697, 1.442695
        %v5716 = vpow.pop %v5715
        %v5717 = vmul.f32 %v5698, 1.442695
        %v5718 = vpow.pop %v5717
        %v5719 = vmul.f32 %v5699, 1.442695
        %v5720 = vpow.pop %v5719
        %v5721 = vmul.f32 %v5700, 1.442695
        %v5722 = vpow.pop %v5721
        %v5723 = vmul.f32 %v5701, 1.442695
        %v5724 = vpow.pop %v5723
        %v5725 = vmul.f32 %v5702, 1.442695
        %v5726 = vpow.pop %v5725
        %v5727 = vmul.f32 %v5703, 1.442695
        %v5728 = vpow.pop %v5727
        %v5729 = vmul.f32 %v5704, 1.442695
        %v5730 = vpow.pop %v5729
        %v5731 = vmul.f32 %v5705, 1.442695
        %v5732 = vpow.pop %v5731
        %v5733 = vmul.f32 %v5706, 1.442695
        %v5734 = vpow.pop %v5733
        %v5735 = vmul.f32 %v5707, 1.442695
        %v5736 = vpow.pop %v5735
        %v5737 = vmul.f32 %v5708, 1.442695
        %v5738 = vpow.pop %v5737
        %v5739 = vmul.f32 %v5709, 1.442695
        %v5740 = vpow.pop %v5739
        %v5741 = vmul.f32 %v5710, 1.442695
        %v5742 = vpow.pop %v5741
        %5743 = vadd.xlane.f32.xlu0 %v5712
        %v5744 = vpop.xlane.xlu0 %5743
        %5745 = vadd.xlane.f32.xlu0 %v5714
        %v5746 = vpop.xlane.xlu0 %5745
        %5747 = vadd.xlane.f32.xlu0 %v5716
        %v5748 = vpop.xlane.xlu0 %5747
        %5749 = vadd.xlane.f32.xlu0 %v5718
        %v5750 = vpop.xlane.xlu0 %5749
        %5751 = vadd.xlane.f32.xlu0 %v5720
        %v5752 = vpop.xlane.xlu0 %5751
        %5753 = vadd.xlane.f32.xlu0 %v5722
        %v5754 = vpop.xlane.xlu0 %5753
        %5755 = vadd.xlane.f32.xlu0 %v5724
        %v5756 = vpop.xlane.xlu0 %5755
        %5757 = vadd.xlane.f32.xlu0 %v5726
        %v5758 = vpop.xlane.xlu0 %5757
        %5759 = vadd.xlane.f32.xlu0 %v5728
        %v5760 = vpop.xlane.xlu0 %5759
        %5761 = vadd.xlane.f32.xlu0 %v5730
        %v5762 = vpop.xlane.xlu0 %5761
        %5763 = vadd.xlane.f32.xlu0 %v5732
        %v5764 = vpop.xlane.xlu0 %5763
        %5765 = vadd.xlane.f32.xlu0 %v5734
        %v5766 = vpop.xlane.xlu0 %5765
        %5767 = vadd.xlane.f32.xlu0 %v5736
        %v5768 = vpop.xlane.xlu0 %5767
        %5769 = vadd.xlane.f32.xlu0 %v5738
        %v5770 = vpop.xlane.xlu0 %5769
        %5771 = vadd.xlane.f32.xlu0 %v5740
        %v5772 = vpop.xlane.xlu0 %5771
        %5773 = vadd.xlane.f32.xlu0 %v5742
        %v5774 = vpop.xlane.xlu0 %5773
        %v5775 = vrcp.pop %v5744
        %v5776 = vrcp.pop %v5746
        %v5777 = vrcp.pop %v5748
        %v5778 = vrcp.pop %v5750
        %v5779 = vrcp.pop %v5752
        %v5780 = vrcp.pop %v5754
        %v5781 = vrcp.pop %v5756
        %v5782 = vrcp.pop %v5758
        %v5783 = vrcp.pop %v5760
        %v5784 = vrcp.pop %v5762
        %v5785 = vrcp.pop %v5764
        %v5786 = vrcp.pop %v5766
        %v5787 = vrcp.pop %v5768
        %v5788 = vrcp.pop %v5770
        %v5789 = vrcp.pop %v5772
        %v5790 = vrcp.pop %v5774
        %v5791 = vpack.c.bf16 %v5714, %v5712
        %v5792 = vpack.c.bf16 %v5718, %v5716
        %v5793 = vpack.c.bf16 %v5722, %v5720
        %v5794 = vpack.c.bf16 %v5726, %v5724
        %v5795 = vpack.c.bf16 %v5730, %v5728
        %v5796 = vpack.c.bf16 %v5734, %v5732
        %v5797 = vpack.c.bf16 %v5738, %v5736
        %v5798 = vpack.c.bf16 %v5742, %v5740
        %5799 = vmatprep.subr.bf16.mxu0 0
        %5800 = vmatpush1.bf16.msra.mxu0 %v5565
        %5801 = vmatprep.subr.bf16.mxu0 0
        %5802 = vmatpush1.bf16.msra.mxu0 %v5564
        %5803 = vmatprep.subr.bf16.mxu0 0
        %5804 = vmatpush1.bf16.msra.mxu0 %v5563
        %5805 = vmatprep.subr.bf16.mxu0 0
        %5806 = vmatpush1.bf16.msra.mxu0 %v5562
        %5807 = vmatprep.subr.bf16.mxu0 0
        %5808 = vmatpush1.bf16.msra.mxu0 %v5561
        %5809 = vmatprep.subr.bf16.mxu0 0
        %5810 = vmatpush1.bf16.msra.mxu0 %v5560
        %5811 = vmatprep.subr.bf16.mxu0 0
        %5812 = vmatpush1.bf16.msra.mxu0 %v5559
        %5813 = vmatprep.subr.bf16.mxu0 0
        %5814 = vmatpush1.bf16.msra.mxu0 %v5558
        %5815 = vmatprep.subr.bf16.mxu0 0
        %5816 = vmatpush2.bf16.msra.mxu0 0
        %5817 = vmatprep.subr.bf16.mxu0 0
        %5818 = vmatpush2.bf16.msra.mxu0 0
        %5819 = vmatprep.subr.bf16.mxu0 0
        %5820 = vmatpush2.bf16.msra.mxu0 0
        %5821 = vmatprep.subr.bf16.mxu0 0
        %5822 = vmatpush2.bf16.msra.mxu0 0
        %5823 = vmatprep.subr.bf16.mxu0 0
        %5824 = vmatpush2.bf16.msra.mxu0 0
        %5825 = vmatprep.subr.bf16.mxu0 0
        %5826 = vmatpush2.bf16.msra.mxu0 0
        %5827 = vmatprep.subr.bf16.mxu0 0
        %5828 = vmatpush2.bf16.msra.mxu0 0
        %5829 = vmatprep.subr.bf16.mxu0 0
        %5830 = vmatpush2.bf16.msra.mxu0 0
        %5831 = vmatprep.mubr.bf16.mxu0 0
        %5832 = vmatmul.mubr.bf16.gmra.mxu0 %v5791
        %v5833 = vpop.f32.mrf.mxu0
        %v5834 = vadd.f32 0.0, %v5833
        %v5835 = vpop.f32.mrf.mxu0
        %v5836 = vpop.f32.mrf.mxu0
        %v5837 = vadd.f32 0.0, %v5836
        %v5838 = vpop.f32.mrf.mxu0
        %5839 = vmatprep.mubr.bf16.mxu0 0
        %5840 = vmatmul.mubr.bf16.gmra.mxu0 %v5792
        %v5841 = vpop.f32.mrf.mxu0
        %v5842 = vadd.f32 0.0, %v5841
        %v5843 = vpop.f32.mrf.mxu0
        %v5844 = vpop.f32.mrf.mxu0
        %v5845 = vadd.f32 0.0, %v5844
        %v5846 = vpop.f32.mrf.mxu0
        %5847 = vmatprep.mubr.bf16.mxu0 0
        %5848 = vmatmul.mubr.bf16.gmra.mxu0 %v5793
        %v5849 = vpop.f32.mrf.mxu0
        %v5850 = vadd.f32 0.0, %v5849
        %v5851 = vpop.f32.mrf.mxu0
        %v5852 = vpop.f32.mrf.mxu0
        %v5853 = vadd.f32 0.0, %v5852
        %v5854 = vpop.f32.mrf.mxu0
        %5855 = vmatprep.mubr.bf16.mxu0 0
        %5856 = vmatmul.mubr.bf16.gmra.mxu0 %v5794
        %v5857 = vpop.f32.mrf.mxu0
        %v5858 = vadd.f32 0.0, %v5857
        %v5859 = vpop.f32.mrf.mxu0
        %v5860 = vpop.f32.mrf.mxu0
        %v5861 = vadd.f32 0.0, %v5860
        %v5862 = vpop.f32.mrf.mxu0
        %5863 = vmatprep.mubr.bf16.mxu0 0
        %5864 = vmatmul.mubr.bf16.gmra.mxu0 %v5795
        %v5865 = vpop.f32.mrf.mxu0
        %v5866 = vadd.f32 0.0, %v5865
        %v5867 = vpop.f32.mrf.mxu0
        %v5868 = vpop.f32.mrf.mxu0
        %v5869 = vadd.f32 0.0, %v5868
        %v5870 = vpop.f32.mrf.mxu0
        %5871 = vmatprep.mubr.bf16.mxu0 0
        %5872 = vmatmul.mubr.bf16.gmra.mxu0 %v5796
        %v5873 = vpop.f32.mrf.mxu0
        %v5874 = vadd.f32 0.0, %v5873
        %v5875 = vpop.f32.mrf.mxu0
        %v5876 = vpop.f32.mrf.mxu0
        %v5877 = vadd.f32 0.0, %v5876
        %v5878 = vpop.f32.mrf.mxu0
        %5879 = vmatprep.mubr.bf16.mxu0 0
        %5880 = vmatmul.mubr.bf16.gmra.mxu0 %v5797
        %v5881 = vpop.f32.mrf.mxu0
        %v5882 = vadd.f32 0.0, %v5881
        %v5883 = vpop.f32.mrf.mxu0
        %v5884 = vpop.f32.mrf.mxu0
        %v5885 = vadd.f32 0.0, %v5884
        %v5886 = vpop.f32.mrf.mxu0
        %5887 = vmatprep.mubr.bf16.mxu0 0
        %5888 = vmatmul.mubr.bf16.gmra.mxu0 %v5798
        %v5889 = vpop.f32.mrf.mxu0
        %v5890 = vadd.f32 0.0, %v5889
        %v5891 = vpop.f32.mrf.mxu0
        %v5892 = vpop.f32.mrf.mxu0
        %v5893 = vadd.f32 0.0, %v5892
        %v5894 = vpop.f32.mrf.mxu0
        %5895 = vdwg.mxu0
        %v5896 = vmul.f32 %v5834, %v664
        %v5897 = vmul.f32 %v5837, %v665
        %v5898 = vmul.f32 %v5842, %v666
        %v5899 = vmul.f32 %v5845, %v667
        %v5900 = vmul.f32 %v5850, %v668
        %v5901 = vmul.f32 %v5853, %v669
        %v5902 = vmul.f32 %v5858, %v670
        %v5903 = vmul.f32 %v5861, %v671
        %v5904 = vmul.f32 %v5866, %v672
        %v5905 = vmul.f32 %v5869, %v673
        %v5906 = vmul.f32 %v5874, %v674
        %v5907 = vmul.f32 %v5877, %v675
        %v5908 = vmul.f32 %v5882, %v676
        %v5909 = vmul.f32 %v5885, %v677
        %v5910 = vmul.f32 %v5890, %v678
        %v5911 = vmul.f32 %v5893, %v679
        %5928 = vrot.lane.b32.xlu0 %v5896, 96
        %v5929 = vpop.permute.xlu0 %5928
        %5930 = vrot.lane.b32.xlu0 %v5897, 96
        %v5931 = vpop.permute.xlu0 %5930
        %5932 = vrot.lane.b32.xlu0 %v5898, 96
        %v5933 = vpop.permute.xlu0 %5932
        %5934 = vrot.lane.b32.xlu0 %v5899, 96
        %v5935 = vpop.permute.xlu0 %5934
        %5936 = vrot.lane.b32.xlu0 %v5900, 96
        %v5937 = vpop.permute.xlu0 %5936
        %5938 = vrot.lane.b32.xlu0 %v5901, 96
        %v5939 = vpop.permute.xlu0 %5938
        %5940 = vrot.lane.b32.xlu0 %v5902, 96
        %v5941 = vpop.permute.xlu0 %5940
        %5942 = vrot.lane.b32.xlu0 %v5903, 96
        %v5943 = vpop.permute.xlu0 %5942
        %5944 = vrot.lane.b32.xlu0 %v5904, 96
        %v5945 = vpop.permute.xlu0 %5944
        %5946 = vrot.lane.b32.xlu0 %v5905, 96
        %v5947 = vpop.permute.xlu0 %5946
        %5948 = vrot.lane.b32.xlu0 %v5906, 96
        %v5949 = vpop.permute.xlu0 %5948
        %5950 = vrot.lane.b32.xlu0 %v5907, 96
        %v5951 = vpop.permute.xlu0 %5950
        %5952 = vrot.lane.b32.xlu0 %v5908, 96
        %v5953 = vpop.permute.xlu0 %5952
        %5954 = vrot.lane.b32.xlu0 %v5909, 96
        %v5955 = vpop.permute.xlu0 %5954
        %5956 = vrot.lane.b32.xlu0 %v5910, 96
        %v5957 = vpop.permute.xlu0 %5956
        %5958 = vrot.lane.b32.xlu0 %v5911, 96
        %v5959 = vpop.permute.xlu0 %5958
        %v5976 = vadd.f32 %v5896, %v5929
        %v5977 = vadd.f32 %v5897, %v5931
        %v5978 = vadd.f32 %v5898, %v5933
        %v5979 = vadd.f32 %v5899, %v5935
        %v5980 = vadd.f32 %v5900, %v5937
        %v5981 = vadd.f32 %v5901, %v5939
        %v5982 = vadd.f32 %v5902, %v5941
        %v5983 = vadd.f32 %v5903, %v5943
        %v5984 = vadd.f32 %v5904, %v5945
        %v5985 = vadd.f32 %v5905, %v5947
        %v5986 = vadd.f32 %v5906, %v5949
        %v5987 = vadd.f32 %v5907, %v5951
        %v5988 = vadd.f32 %v5908, %v5953
        %v5989 = vadd.f32 %v5909, %v5955
        %v5990 = vadd.f32 %v5910, %v5957
        %v5991 = vadd.f32 %v5911, %v5959
        %5992 = vrot.lane.b32.xlu0 %v5896, 64
        %v5993 = vpop.permute.xlu0 %5992
        %5994 = vrot.lane.b32.xlu0 %v5897, 64
        %v5995 = vpop.permute.xlu0 %5994
        %5996 = vrot.lane.b32.xlu0 %v5898, 64
        %v5997 = vpop.permute.xlu0 %5996
        %5998 = vrot.lane.b32.xlu0 %v5899, 64
        %v5999 = vpop.permute.xlu0 %5998
        %6000 = vrot.lane.b32.xlu0 %v5900, 64
        %v6001 = vpop.permute.xlu0 %6000
        %6002 = vrot.lane.b32.xlu0 %v5901, 64
        %v6003 = vpop.permute.xlu0 %6002
        %6004 = vrot.lane.b32.xlu0 %v5902, 64
        %v6005 = vpop.permute.xlu0 %6004
        %6006 = vrot.lane.b32.xlu0 %v5903, 64
        %v6007 = vpop.permute.xlu0 %6006
        %6008 = vrot.lane.b32.xlu0 %v5904, 64
        %v6009 = vpop.permute.xlu0 %6008
        %6010 = vrot.lane.b32.xlu0 %v5905, 64
        %v6011 = vpop.permute.xlu0 %6010
        %6012 = vrot.lane.b32.xlu0 %v5906, 64
        %v6013 = vpop.permute.xlu0 %6012
        %6014 = vrot.lane.b32.xlu0 %v5907, 64
        %v6015 = vpop.permute.xlu0 %6014
        %6016 = vrot.lane.b32.xlu0 %v5908, 64
        %v6017 = vpop.permute.xlu0 %6016
        %6018 = vrot.lane.b32.xlu0 %v5909, 64
        %v6019 = vpop.permute.xlu0 %6018
        %6020 = vrot.lane.b32.xlu0 %v5910, 64
        %v6021 = vpop.permute.xlu0 %6020
        %6022 = vrot.lane.b32.xlu0 %v5911, 64
        %v6023 = vpop.permute.xlu0 %6022
        %v6040 = vadd.f32 %v5976, %v5993
        %v6041 = vadd.f32 %v5977, %v5995
        %v6042 = vadd.f32 %v5978, %v5997
        %v6043 = vadd.f32 %v5979, %v5999
        %v6044 = vadd.f32 %v5980, %v6001
        %v6045 = vadd.f32 %v5981, %v6003
        %v6046 = vadd.f32 %v5982, %v6005
        %v6047 = vadd.f32 %v5983, %v6007
        %v6048 = vadd.f32 %v5984, %v6009
        %v6049 = vadd.f32 %v5985, %v6011
        %v6050 = vadd.f32 %v5986, %v6013
        %v6051 = vadd.f32 %v5987, %v6015
        %v6052 = vadd.f32 %v5988, %v6017
        %v6053 = vadd.f32 %v5989, %v6019
        %v6054 = vadd.f32 %v5990, %v6021
        %v6055 = vadd.f32 %v5991, %v6023
        %6056 = vrot.lane.b32.xlu0 %v5896, 32
        %v6057 = vpop.permute.xlu0 %6056
        %6058 = vrot.lane.b32.xlu0 %v5897, 32
        %v6059 = vpop.permute.xlu0 %6058
        %6060 = vrot.lane.b32.xlu0 %v5898, 32
        %v6061 = vpop.permute.xlu0 %6060
        %6062 = vrot.lane.b32.xlu0 %v5899, 32
        %v6063 = vpop.permute.xlu0 %6062
        %6064 = vrot.lane.b32.xlu0 %v5900, 32
        %v6065 = vpop.permute.xlu0 %6064
        %6066 = vrot.lane.b32.xlu0 %v5901, 32
        %v6067 = vpop.permute.xlu0 %6066
        %6068 = vrot.lane.b32.xlu0 %v5902, 32
        %v6069 = vpop.permute.xlu0 %6068
        %6070 = vrot.lane.b32.xlu0 %v5903, 32
        %v6071 = vpop.permute.xlu0 %6070
        %6072 = vrot.lane.b32.xlu0 %v5904, 32
        %v6073 = vpop.permute.xlu0 %6072
        %6074 = vrot.lane.b32.xlu0 %v5905, 32
        %v6075 = vpop.permute.xlu0 %6074
        %6076 = vrot.lane.b32.xlu0 %v5906, 32
        %v6077 = vpop.permute.xlu0 %6076
        %6078 = vrot.lane.b32.xlu0 %v5907, 32
        %v6079 = vpop.permute.xlu0 %6078
        %6080 = vrot.lane.b32.xlu0 %v5908, 32
        %v6081 = vpop.permute.xlu0 %6080
        %6082 = vrot.lane.b32.xlu0 %v5909, 32
        %v6083 = vpop.permute.xlu0 %6082
        %6084 = vrot.lane.b32.xlu0 %v5910, 32
        %v6085 = vpop.permute.xlu0 %6084
        %6086 = vrot.lane.b32.xlu0 %v5911, 32
        %v6087 = vpop.permute.xlu0 %6086
        %v6104 = vadd.f32 %v6040, %v6057
        %v6105 = vadd.f32 %v6041, %v6059
        %v6106 = vadd.f32 %v6042, %v6061
        %v6107 = vadd.f32 %v6043, %v6063
        %v6108 = vadd.f32 %v6044, %v6065
        %v6109 = vadd.f32 %v6045, %v6067
        %v6110 = vadd.f32 %v6046, %v6069
        %v6111 = vadd.f32 %v6047, %v6071
        %v6112 = vadd.f32 %v6048, %v6073
        %v6113 = vadd.f32 %v6049, %v6075
        %v6114 = vadd.f32 %v6050, %v6077
        %v6115 = vadd.f32 %v6051, %v6079
        %v6116 = vadd.f32 %v6052, %v6081
        %v6117 = vadd.f32 %v6053, %v6083
        %v6118 = vadd.f32 %v6054, %v6085
        %v6119 = vadd.f32 %v6055, %v6087
        %v6120 = vmul.f32 %v6104, %v5775
        %v6121 = vmul.f32 %v6105, %v5776
        %v6122 = vmul.f32 %v6106, %v5777
        %v6123 = vmul.f32 %v6107, %v5778
        %v6124 = vmul.f32 %v6108, %v5779
        %v6125 = vmul.f32 %v6109, %v5780
        %v6126 = vmul.f32 %v6110, %v5781
        %v6127 = vmul.f32 %v6111, %v5782
        %v6128 = vmul.f32 %v6112, %v5783
        %v6129 = vmul.f32 %v6113, %v5784
        %v6130 = vmul.f32 %v6114, %v5785
        %v6131 = vmul.f32 %v6115, %v5786
        %v6132 = vmul.f32 %v6116, %v5787
        %v6133 = vmul.f32 %v6117, %v5788
        %v6134 = vmul.f32 %v6118, %v5789
        %v6135 = vmul.f32 %v6119, %v5790
        %6152 = vrot.lane.b32.xlu0 %v6120, 96
        %v6153 = vpop.permute.xlu0 %6152
        %6154 = vrot.lane.b32.xlu0 %v6121, 96
        %v6155 = vpop.permute.xlu0 %6154
        %6156 = vrot.lane.b32.xlu0 %v6122, 96
        %v6157 = vpop.permute.xlu0 %6156
        %6158 = vrot.lane.b32.xlu0 %v6123, 96
        %v6159 = vpop.permute.xlu0 %6158
        %6160 = vrot.lane.b32.xlu0 %v6124, 96
        %v6161 = vpop.permute.xlu0 %6160
        %6162 = vrot.lane.b32.xlu0 %v6125, 96
        %v6163 = vpop.permute.xlu0 %6162
        %6164 = vrot.lane.b32.xlu0 %v6126, 96
        %v6165 = vpop.permute.xlu0 %6164
        %6166 = vrot.lane.b32.xlu0 %v6127, 96
        %v6167 = vpop.permute.xlu0 %6166
        %6168 = vrot.lane.b32.xlu0 %v6128, 96
        %v6169 = vpop.permute.xlu0 %6168
        %6170 = vrot.lane.b32.xlu0 %v6129, 96
        %v6171 = vpop.permute.xlu0 %6170
        %6172 = vrot.lane.b32.xlu0 %v6130, 96
        %v6173 = vpop.permute.xlu0 %6172
        %6174 = vrot.lane.b32.xlu0 %v6131, 96
        %v6175 = vpop.permute.xlu0 %6174
        %6176 = vrot.lane.b32.xlu0 %v6132, 96
        %v6177 = vpop.permute.xlu0 %6176
        %6178 = vrot.lane.b32.xlu0 %v6133, 96
        %v6179 = vpop.permute.xlu0 %6178
        %6180 = vrot.lane.b32.xlu0 %v6134, 96
        %v6181 = vpop.permute.xlu0 %6180
        %6182 = vrot.lane.b32.xlu0 %v6135, 96
        %v6183 = vpop.permute.xlu0 %6182
        %vm6200 = vcmask 1048320
        %6201 = vst.msk [vmem:[%s323] sm:$0xff] %vm6200, %v6153
        %6202 = vst.msk [vmem:[%s323 + $0x8] sm:$0xff] %vm6200, %v6155
        %6203 = vst.msk [vmem:[%s323 + $0x10] sm:$0xff] %vm6200, %v6157
        %6204 = vst.msk [vmem:[%s323 + $0x18] sm:$0xff] %vm6200, %v6159
        %6205 = vst.msk [vmem:[%s323 + $0x20] sm:$0xff] %vm6200, %v6161
        %6206 = vst.msk [vmem:[%s323 + $0x28] sm:$0xff] %vm6200, %v6163
        %6207 = vst.msk [vmem:[%s323 + $0x30] sm:$0xff] %vm6200, %v6165
        %6208 = vst.msk [vmem:[%s323 + $0x38] sm:$0xff] %vm6200, %v6167
        %6209 = vst.msk [vmem:[%s323 + $0x40] sm:$0xff] %vm6200, %v6169
        %6210 = vst.msk [vmem:[%s323 + $0x48] sm:$0xff] %vm6200, %v6171
        %6211 = vst.msk [vmem:[%s323 + $0x50] sm:$0xff] %vm6200, %v6173
        %6212 = vst.msk [vmem:[%s323 + $0x58] sm:$0xff] %vm6200, %v6175
        %6213 = vst.msk [vmem:[%s323 + $0x60] sm:$0xff] %vm6200, %v6177
        %6214 = vst.msk [vmem:[%s323 + $0x68] sm:$0xff] %vm6200, %v6179
        %6215 = vst.msk [vmem:[%s323 + $0x70] sm:$0xff] %vm6200, %v6181
        %6216 = vst.msk [vmem:[%s323 + $0x78] sm:$0xff] %vm6200, %v6183
        %s6217 = sand.u32 %s163, 1
        %s6218 = scalar_lea.sflag [#allocation4], %s6217
        %s6219 = sand.u32 %s163, 1
        %s6220 = smul.addr %s6219, 128
        %s6221 = scalar_lea.vmem [#allocation7], %s6220
        // Predicated region
        $region49: #{tpu_custom_call.1} parent=39 // pred_check
          %p6222 = pneg %p173
        $region50: #{tpu_custom_call.1} parent=39 // pred_check_branch
          %6224 = sbr.rel (%p6222) target = $region52
        $region51: #{tpu_custom_call.1} parent=39 // pred_region
          %s6226 = ssub.s32 2048, 2048
          %6227 = vsyncadd %s6218, %s6226
          %s6228 = smul.addr %s25, 16
          %s6229 = smul.addr %s6228, 128
          %s6230 = scalar_lea.hbm %s5, %s6229
          %s6231 = sshll.u32 %s6221, 4
          %s6232 = int_to_ptr.vmem [resolvable:$true] %s6231
          %6237 = dma.vmem_to_hbm [thread:$0]  %s6232, 2048, %s6230, %s6218, 128, 128, 8
        $region52: #{tpu_custom_call.1} parent=39 // pred_fallthru
          _
      $region40: #{tpu_custom_call.1} parent=5 // pred_fallthru
        _
      %p6238 = scmp.le.s32.totalorder 2, %s20
      // Predicated region
      $region53: #{tpu_custom_call.1} parent=5 // pred_check
        %p6239 = pneg %p6238
      $region54: #{tpu_custom_call.1} parent=5 // pred_check_branch
        %6241 = sbr.rel (%p6239) target = $region56
      $region55: #{tpu_custom_call.1} parent=5 // pred_region
        %s6242 = ssub.s32 %s20, 2
        // Predicated region
        $region57: #{tpu_custom_call.1} parent=55 // pred_check
          %p6243 = pneg %p179
        $region58: #{tpu_custom_call.1} parent=55 // pred_check_branch
          %6245 = sbr.rel (%p6243) target = $region60
        $region59: #{tpu_custom_call.1} parent=55 // pred_region
          %s6246 = sand.u32 %s164, 1
          %s6247 = scalar_lea.sflag [#allocation4], %s6246
          %s6248 = sand.u32 %s164, 1
          %s6249 = smul.addr %s6248, 128
          %s6250 = scalar_lea.vmem [#allocation7], %s6249
          %6251 = dma.done %s6247, 2048
        $region60: #{tpu_custom_call.1} parent=55 // pred_fallthru
          _
      $region56: #{tpu_custom_call.1} parent=5 // pred_fallthru
        _
    $region6: #{tpu_custom_call.1} parent=1 // loop_footer
      %s24 = sadd.s32 1, %s20
    $region7: #{tpu_custom_call.1} parent=1 // loop_footer_branch
      %19 = sbr.rel target = $region3
    $region8: #{tpu_custom_call.1} parent=1 // loop_exit
      _
    %6252 = vsyncpa [#allocation3], 1
    %s6253 = scalar_lea.sflag [#allocation3], 1
    %6254 = vsyncpa %s6253, 1
    %6255 = vsyncpa [#allocation6], 1
    %s6256 = scalar_lea.sflag [#allocation6], 1
    %6257 = vsyncpa %s6256, 1
    %6258 = vsyncpa [#allocation4], 1
    %s6259 = scalar_lea.sflag [#allocation4], 1
    %6260 = vsyncpa %s6259, 1

</llo_original>
